<compile_context>
chip_gen: v5e
topology: v5e:2x2
jax: 0.10.0
libtpu: 0.0.40
codegen_flags: <defaults>
</compile_context>

<pallas_src>
import functools
import math

import jax
import jax.numpy as jnp
from jax.experimental import pallas as pl
from jax.experimental.pallas import tpu as pltpu


def _round_up(v, m):
    return ((v + m - 1) // m) * m


# ----------------------------------------------------------------------------
# Fused decoder kernel: all LSTM layers + output projection in one pallas_call.
# ----------------------------------------------------------------------------
def _decoder_lstm_kernel(*refs, T, n_pre, apply_sig, gp_pre, gp_end):
    if n_pre > 0:
        (x_ref, wih_pre_ref, whh_pre_ref, b_pre_ref,
         wih_end_ref, whh_end_ref, b_end_ref,
         w_out_ref, b_out_ref, out_ref, act_ref, xp_ref) = refs
    else:
        (x_ref, wih_end_ref, whh_end_ref, b_end_ref,
         w_out_ref, b_out_ref, out_ref, act_ref, xp_ref) = refs

    B = x_ref.shape[0]                       # padded batch (multiple of 8 sublanes)
    f32 = jnp.float32

    def sig(z):
        # sigmoid(z) == 0.5*tanh(z/2)+0.5: stays on the EUP tanh path instead of
        # exp + exact divide sitting on the serial h->h dependency chain.
        return 0.5 * jnp.tanh(0.5 * z) + 0.5

    # Guard: if a layer's padded width is smaller than the shared activation width,
    # unwritten scratch columns must be 0 (0 * stale-NaN would otherwise poison the
    # zero-weight-row matmuls).  One cheap, loop-free store.
    act_ref[...] = jnp.zeros_like(act_ref)

    def run_lstm(xproj_of_t, w_hh, gp):
        """One LSTM layer.  xproj_of_t(t) -> (B, 4*gp) == x_t @ W_ih + bias (hoisted).
        Gate lane order is [i | f | o | g], each block `gp` lanes (multiple of 128),
        so every slice below is vreg-lane aligned.  h/c carried in vregs; per-step
        hidden state stored to the activation scratch at sublane-aligned rows."""
        h = jnp.zeros((B, gp), f32)
        c = jnp.zeros((B, gp), f32)
        for t in range(T):                                   # static unroll, T small
            pre = xproj_of_t(t) + jnp.dot(h, w_hh, preferred_element_type=f32)
            s = sig(pre[:, :3 * gp])                         # i,f,o (lane-aligned slab)
            g = jnp.tanh(pre[:, 3 * gp:])                    # g gate (lane-aligned)
            i, f, o = s[:, :gp], s[:, gp:2 * gp], s[:, 2 * gp:]
            c = f * c + i * g
            h = o * jnp.tanh(c)
            act_ref[t * B:(t + 1) * B, 0:gp] = h             # aligned (8, 128k) store

    x = x_ref[...]                                           # (B, act_w), zero-padded

    if n_pre > 0:
        # Layer 0: input is x repeated over time -> time-invariant projection.
        xp0 = jnp.dot(x, wih_pre_ref[0], preferred_element_type=f32) + b_pre_ref[0]
        run_lstm(lambda t: xp0, whh_pre_ref[0], gp_pre)
        for l in range(1, n_pre):
            # Hoisted whole-sequence input projection (+ bias folded), one big matmul
            # parked in VMEM; only the (B, 4*gp) slice is loaded inside the time loop.
            xp_ref[:, 0:4 * gp_pre] = (
                jnp.dot(act_ref[...], wih_pre_ref[l], preferred_element_type=f32)
                + b_pre_ref[l])
            run_lstm(lambda t: xp_ref[t * B:(t + 1) * B, 0:4 * gp_pre],
                     whh_pre_ref[l], gp_pre)
        xp_ref[:, 0:4 * gp_end] = (
            jnp.dot(act_ref[...], wih_end_ref[...], preferred_element_type=f32)
            + b_end_ref[...])
        run_lstm(lambda t: xp_ref[t * B:(t + 1) * B, 0:4 * gp_end],
                 whh_end_ref[...], gp_end)
    else:
        xpe = jnp.dot(x, wih_end_ref[...], preferred_element_type=f32) + b_end_ref[...]
        run_lstm(lambda t: xpe, whh_end_ref[...], gp_end)

    # Output projection (+ optional sigmoid); 128-lane-dense store.
    y = jnp.dot(act_ref[...], w_out_ref[...], preferred_element_type=f32) + b_out_ref[...]
    if apply_sig:
        y = jax.nn.sigmoid(y)
    out_ref[...] = y.astype(out_ref.dtype)                   # (T*B_pad, F_pad)


# ----------------------------------------------------------------------------
# Parameter construction (deterministic synthetic params).
# ----------------------------------------------------------------------------
def _init_lstm_params(key, d_in, hidden):
    k = 1.0 / math.sqrt(hidden)
    k1, k2, k3 = jax.random.split(key, 3)
    # Per-gate layout (gate order i, f, g, o) with b = b_ih + b_hh folded.
    w_ih = jax.random.uniform(k1, (4, d_in, hidden), jnp.float32, -k, k)
    w_hh = jax.random.uniform(k2, (4, hidden, hidden), jnp.float32, -k, k)
    b = jax.random.uniform(k3, (4, 1, hidden), jnp.float32, -k, k)
    return w_ih, w_hh, b


def _fuse_pad_gates(w_ih, w_hh, b, d_in_pad, gp):
    """Fuse per-gate weights into lane-dense, lane-padded matrices.

    Kernel gate order along lanes is [i, f, o, g] (source order is i, f, g, o) so
    the three sigmoid gates are lane-contiguous.  Each gate block is zero-padded to
    `gp` lanes (multiple of 128); input/hidden row dims are zero-padded to
    d_in_pad / gp so padded activation lanes can never leak into real lanes.
    """
    order = (0, 1, 3, 2)
    h = w_ih.shape[2]

    def pad_block(m, rows_pad):
        out = jnp.zeros((rows_pad, gp), jnp.float32)
        return out.at[:m.shape[0], :h].set(m)

    wi = jnp.concatenate([pad_block(w_ih[g], d_in_pad) for g in order], axis=1)
    wh = jnp.concatenate([pad_block(w_hh[g], gp) for g in order], axis=1)
    bb = jnp.concatenate([pad_block(b[g], 1) for g in order], axis=1)
    return wi, wh, bb


class DecoderLSTMPallas:
    def __init__(self, input_dim, n_features, N, tseq_len, apply_sig,
                 to_squeeze=False, key=None):
        self.tsql = tseq_len
        self.apply_sig = apply_sig
        self.to_squeeze = to_squeeze
        self.input_dim = input_dim
        self.hidden_dim = 2 * input_dim
        self.n_features = n_features

        # Lane-padded sizes (per-gate blocks / activation / output widths are
        # multiples of 128 so every kernel slice & store is vreg-lane aligned).
        self.gp_pre = _round_up(input_dim, 128)
        self.gp_end = _round_up(self.hidden_dim, 128)
        self.act_w = max(self.gp_pre, self.gp_end)
        self.f_pad = _round_up(n_features, 128)

        key = jax.random.PRNGKey(42) if key is None else key
        keys = jax.random.split(key, N + 1)
        # Canonical per-gate params (used by the pure-JAX reference).  Note: real
        # PyTorch LSTM weights would need b_ih + b_hh summed before fusing.
        self.pre_params = [_init_lstm_params(keys[i], input_dim, input_dim)
                           for i in range(N - 1)]
        self.end_params = _init_lstm_params(keys[N - 1], input_dim, self.hidden_dim)
        kl = 1.0 / math.sqrt(self.hidden_dim)
        kw, kb = jax.random.split(keys[N], 2)
        self.w_out = jax.random.uniform(kw, (self.hidden_dim, n_features),
                                        jnp.float32, -kl, kl)
        self.b_out = jax.random.uniform(kb, (1, n_features), jnp.float32, -kl, kl)

        # Fused, lane-padded, stacked forms used by the kernel.
        fused_pre = [_fuse_pad_gates(w_ih, w_hh, b, self.act_w, self.gp_pre)
                     for (w_ih, w_hh, b) in self.pre_params]
        if fused_pre:
            self._wih_pre = jnp.stack([f[0] for f in fused_pre])   # (n_pre, A, 4*GPp)
            self._whh_pre = jnp.stack([f[1] for f in fused_pre])   # (n_pre, GPp, 4*GPp)
            self._b_pre = jnp.stack([f[2] for f in fused_pre])     # (n_pre, 1, 4*GPp)
        self._wih_end, self._whh_end, self._b_end = _fuse_pad_gates(
            *self.end_params, self.act_w, self.gp_end)
        self._w_out = jnp.zeros((self.act_w, self.f_pad), jnp.float32
                                ).at[:self.hidden_dim, :n_features].set(self.w_out)
        self._b_out = jnp.zeros((1, self.f_pad), jnp.float32
                                ).at[:, :n_features].set(self.b_out)

    def __call__(self, x):
        B, D = x.shape
        T = self.tsql
        F = self.n_features
        n_pre = len(self.pre_params)
        B_pad = _round_up(B, 8)            # sublane-aligned batch

        # Zero-pad batch rows and input lanes (padded rows are sliced off below;
        # padded lanes hit zero weight rows).
        x_pad = jnp.zeros((B_pad, self.act_w), jnp.float32).at[:B, :D].set(
            x.astype(jnp.float32))

        vmem = pl.BlockSpec(memory_space=pltpu.MemorySpace.VMEM)
        args = [x_pad]
        if n_pre > 0:
            args += [self._wih_pre, self._whh_pre, self._b_pre]
        args += [self._wih_end, self._whh_end, self._b_end, self._w_out, self._b_out]

        kernel = functools.partial(
            _decoder_lstm_kernel, T=T, n_pre=n_pre, apply_sig=self.apply_sig,
            gp_pre=self.gp_pre, gp_end=self.gp_end)

        y = pl.pallas_call(
            kernel,
            out_shape=jax.ShapeDtypeStruct((T * B_pad, self.f_pad), jnp.float32),
            in_specs=[vmem] * len(args),
            out_specs=vmem,
            scratch_shapes=[
                pltpu.VMEM((T * B_pad, self.act_w), jnp.float32),          # activations
                pltpu.VMEM((T * B_pad, 4 * max(self.gp_pre, self.gp_end)),
                           jnp.float32),                                   # hoisted x-proj
            ],
            compiler_params=pltpu.CompilerParams(
                vmem_limit_bytes=32 * 1024 * 1024),
        )(*args)

        # (T*B_pad, F_pad) time-major padded rows -> (B, T, F) batch_first; tiny
        # relayout + pad-slice, outside the kernel.
        out = y[:, :F].reshape(T, B_pad, F)[:, :B, :]
        out = jnp.transpose(out, (1, 0, 2))
        if self.to_squeeze:
            out = jnp.squeeze(out, axis=-1)
        return out


# ----------------------------------------------------------------------------
# Pure-JAX reference (per-gate weights, per-step matmuls) for correctness.
# ----------------------------------------------------------------------------
def _ref_lstm(x_tbd, w_ih, w_hh, b):
    T, B, _ = x_tbd.shape
    H = w_hh.shape[-1]
    h = jnp.zeros((B, H), jnp.float32)
    c = jnp.zeros((B, H), jnp.float32)
    outs = []
    for t in range(T):
        xt = x_tbd[t]
        gates = [xt @ w_ih[k] + h @ w_hh[k] + b[k] for k in range(4)]
        i = jax.nn.sigmoid(gates[0])
        f = jax.nn.sigmoid(gates[1])
        g = jnp.tanh(gates[2])
        o = jax.nn.sigmoid(gates[3])
        c = f * c + i * g
        h = o * jnp.tanh(c)
        outs.append(h)
    return jnp.stack(outs, 0)


def _ref_forward(model, x):
    B, D = x.shape
    # repeat_interleave(tsql, 0).view(B, tsql, D) == each row repeated tsql times.
    xs = jnp.broadcast_to(x[None, :, :], (model.tsql, B, D))   # (T, B, D) time-major
    for (w_ih, w_hh, b) in model.pre_params:
        xs = _ref_lstm(xs, w_ih, w_hh, b)
    xs = _ref_lstm(xs, *model.end_params)
    out = jnp.einsum('tbh,hf->tbf', xs, model.w_out) + model.b_out[0]
    out = jnp.transpose(out, (1, 0, 2))                        # (B, T, F)
    if model.to_squeeze:
        out = jnp.squeeze(out, axis=-1)
    if model.apply_sig:
        out = jax.nn.sigmoid(out)
    return out


if __name__ == "__main__":
    # Small shapes consistent with the module's forward.
    batch, input_dim, n_features, N, tseq_len = 2, 32, 4, 3, 8

    model = DecoderLSTMPallas(input_dim, n_features, N, tseq_len,
                              apply_sig=True, to_squeeze=False,
                              key=jax.random.PRNGKey(1))

    x = jax.random.normal(jax.random.PRNGKey(0), (batch, input_dim), jnp.float32)

    out = jax.block_until_ready(model(x))
    assert out.shape == (batch, tseq_len, n_features), out.shape

    ref = _ref_forward(model, x)
    err = float(jnp.max(jnp.abs(out - ref)))
    # tanh-form sigmoid in the recurrence vs jax.nn.sigmoid in the reference differs
    # by a few ulps/step; 1e-4 still catches any structural / gate-order bug.
    assert err < 1e-4, err

    print("KERNEL_OK")
</pallas_src>

<mosaic_0001>
module attributes {stable_mosaic.version = 11 : i64} {
  func.func @_decoder_lstm_kernel(%arg0: memref<8x128xf32, #tpu.memory_space<vmem>>, %arg1: memref<2x128x512xf32, #tpu.memory_space<vmem>>, %arg2: memref<2x128x512xf32, #tpu.memory_space<vmem>>, %arg3: memref<2x1x512xf32, #tpu.memory_space<vmem>>, %arg4: memref<128x512xf32, #tpu.memory_space<vmem>>, %arg5: memref<128x512xf32, #tpu.memory_space<vmem>>, %arg6: memref<1x512xf32, #tpu.memory_space<vmem>>, %arg7: memref<128x128xf32, #tpu.memory_space<vmem>>, %arg8: memref<1x128xf32, #tpu.memory_space<vmem>>, %arg9: memref<64x128xf32, #tpu.memory_space<vmem>>, %arg10: memref<64x128xf32, #tpu.memory_space<vmem>>, %arg11: memref<64x512xf32, #tpu.memory_space<vmem>>) attributes {dimension_semantics = [], scalar_prefetch = 0 : i64, scratch_operands = 2 : i64, tpu.core_type = #tpu.core_type<tc>} {
    %cst = arith.constant 0.000000e+00 : f32
    %0 = vector.broadcast %cst : f32 to vector<64x128xf32>
    %c0 = arith.constant 0 : index
    %c0_0 = arith.constant 0 : index
    %1 = vector.load %arg10[%c0, %c0_0] : memref<64x128xf32, #tpu.memory_space<vmem>>, vector<64x128xf32>
    tpu.vector_store %arg10[%c0, %c0_0], %0 {strides = array<i32>} : memref<64x128xf32, #tpu.memory_space<vmem>>, vector<64x128xf32>,
    %c0_1 = arith.constant 0 : index
    %c0_2 = arith.constant 0 : index
    %2 = vector.load %arg0[%c0_1, %c0_2] : memref<8x128xf32, #tpu.memory_space<vmem>>, vector<8x128xf32>
    %c0_3 = arith.constant 0 : index
    %c0_4 = arith.constant 0 : index
    %c0_5 = arith.constant 0 : index
    %3 = vector.load %arg1[%c0_3, %c0_4, %c0_5] : memref<2x128x512xf32, #tpu.memory_space<vmem>>, vector<1x128x512xf32>
    %4 = vector.shape_cast %3 : vector<1x128x512xf32> to vector<128x512xf32>
    %cst_6 = arith.constant dense<0.000000e+00> : vector<8x512xf32>
    %5 = tpu.matmul %2, %4, %cst_6 {dimension_numbers = #tpu.dot_dimension_numbers<[1], [0], [0], [1], [0, 0, 1, 1], [], []>} : vector<8x128xf32>, vector<128x512xf32>, vector<8x512xf32> -> vector<8x512xf32>
    %c0_7 = arith.constant 0 : index
    %c0_8 = arith.constant 0 : index
    %c0_9 = arith.constant 0 : index
    %6 = vector.load %arg3[%c0_7, %c0_8, %c0_9] : memref<2x1x512xf32, #tpu.memory_space<vmem>>, vector<1x1x512xf32>
    %7 = vector.shape_cast %6 : vector<1x1x512xf32> to vector<1x512xf32>
    %8 = vector.broadcast %7 : vector<1x512xf32> to vector<8x512xf32>
    %9 = arith.addf %5, %8 : vector<8x512xf32>
    %c0_10 = arith.constant 0 : index
    %c0_11 = arith.constant 0 : index
    %c0_12 = arith.constant 0 : index
    %10 = vector.load %arg2[%c0_10, %c0_11, %c0_12] : memref<2x128x512xf32, #tpu.memory_space<vmem>>, vector<1x128x512xf32>
    %11 = vector.shape_cast %10 : vector<1x128x512xf32> to vector<128x512xf32>
    %cst_13 = arith.constant 0.000000e+00 : f32
    %12 = vector.broadcast %cst_13 : f32 to vector<8x128xf32>
    %cst_14 = arith.constant 0.000000e+00 : f32
    %13 = vector.broadcast %cst_14 : f32 to vector<8x128xf32>
    %cst_15 = arith.constant dense<0.000000e+00> : vector<8x512xf32>
    %14 = tpu.matmul %12, %11, %cst_15 {dimension_numbers = #tpu.dot_dimension_numbers<[1], [0], [0], [1], [0, 0, 1, 1], [], []>} : vector<8x128xf32>, vector<128x512xf32>, vector<8x512xf32> -> vector<8x512xf32>
    %15 = arith.addf %9, %14 : vector<8x512xf32>
    %16 = vector.extract_strided_slice %15 {offsets = [0, 0], sizes = [8, 384], strides = [1, 1]} : vector<8x512xf32> to vector<8x384xf32>
    %cst_16 = arith.constant 5.000000e-01 : f32
    %17 = vector.broadcast %cst_16 : f32 to vector<8x384xf32>
    %18 = arith.mulf %17, %16 : vector<8x384xf32>
    %19 = math.tanh %18 : vector<8x384xf32>
    %cst_17 = arith.constant 5.000000e-01 : f32
    %20 = vector.broadcast %cst_17 : f32 to vector<8x384xf32>
    %21 = arith.mulf %20, %19 : vector<8x384xf32>
    %cst_18 = arith.constant 5.000000e-01 : f32
    %22 = vector.broadcast %cst_18 : f32 to vector<8x384xf32>
    %23 = arith.addf %21, %22 : vector<8x384xf32>
    %24 = vector.extract_strided_slice %15 {offsets = [0, 384], sizes = [8, 128], strides = [1, 1]} : vector<8x512xf32> to vector<8x128xf32>
    %25 = math.tanh %24 : vector<8x128xf32>
    %26 = vector.extract_strided_slice %23 {offsets = [0, 0], sizes = [8, 128], strides = [1, 1]} : vector<8x384xf32> to vector<8x128xf32>
    %27 = vector.extract_strided_slice %23 {offsets = [0, 128], sizes = [8, 128], strides = [1, 1]} : vector<8x384xf32> to vector<8x128xf32>
    %28 = vector.extract_strided_slice %23 {offsets = [0, 256], sizes = [8, 128], strides = [1, 1]} : vector<8x384xf32> to vector<8x128xf32>
    %29 = arith.mulf %27, %13 : vector<8x128xf32>
    %30 = arith.mulf %26, %25 : vector<8x128xf32>
    %31 = arith.addf %29, %30 : vector<8x128xf32>
    %32 = math.tanh %31 : vector<8x128xf32>
    %33 = arith.mulf %28, %32 : vector<8x128xf32>
    %c0_19 = arith.constant 0 : index
    %c0_20 = arith.constant 0 : index
    %34 = vector.load %arg10[%c0_19, %c0_20] : memref<64x128xf32, #tpu.memory_space<vmem>>, vector<8x128xf32>
    tpu.vector_store %arg10[%c0_19, %c0_20], %33 {strides = array<i32>} : memref<64x128xf32, #tpu.memory_space<vmem>>, vector<8x128xf32>,
    %cst_21 = arith.constant dense<0.000000e+00> : vector<8x512xf32>
    %35 = tpu.matmul %33, %11, %cst_21 {dimension_numbers = #tpu.dot_dimension_numbers<[1], [0], [0], [1], [0, 0, 1, 1], [], []>} : vector<8x128xf32>, vector<128x512xf32>, vector<8x512xf32> -> vector<8x512xf32>
    %36 = arith.addf %9, %35 : vector<8x512xf32>
    %37 = vector.extract_strided_slice %36 {offsets = [0, 0], sizes = [8, 384], strides = [1, 1]} : vector<8x512xf32> to vector<8x384xf32>
    %cst_22 = arith.constant 5.000000e-01 : f32
    %38 = vector.broadcast %cst_22 : f32 to vector<8x384xf32>
    %39 = arith.mulf %38, %37 : vector<8x384xf32>
    %40 = math.tanh %39 : vector<8x384xf32>
    %cst_23 = arith.constant 5.000000e-01 : f32
    %41 = vector.broadcast %cst_23 : f32 to vector<8x384xf32>
    %42 = arith.mulf %41, %40 : vector<8x384xf32>
    %cst_24 = arith.constant 5.000000e-01 : f32
    %43 = vector.broadcast %cst_24 : f32 to vector<8x384xf32>
    %44 = arith.addf %42, %43 : vector<8x384xf32>
    %45 = vector.extract_strided_slice %36 {offsets = [0, 384], sizes = [8, 128], strides = [1, 1]} : vector<8x512xf32> to vector<8x128xf32>
    %46 = math.tanh %45 : vector<8x128xf32>
    %47 = vector.extract_strided_slice %44 {offsets = [0, 0], sizes = [8, 128], strides = [1, 1]} : vector<8x384xf32> to vector<8x128xf32>
    %48 = vector.extract_strided_slice %44 {offsets = [0, 128], sizes = [8, 128], strides = [1, 1]} : vector<8x384xf32> to vector<8x128xf32>
    %49 = vector.extract_strided_slice %44 {offsets = [0, 256], sizes = [8, 128], strides = [1, 1]} : vector<8x384xf32> to vector<8x128xf32>
    %50 = arith.mulf %48, %31 : vector<8x128xf32>
    %51 = arith.mulf %47, %46 : vector<8x128xf32>
    %52 = arith.addf %50, %51 : vector<8x128xf32>
    %53 = math.tanh %52 : vector<8x128xf32>
    %54 = arith.mulf %49, %53 : vector<8x128xf32>
    %c8 = arith.constant 8 : index
    %c0_25 = arith.constant 0 : index
    %55 = vector.load %arg10[%c8, %c0_25] : memref<64x128xf32, #tpu.memory_space<vmem>>, vector<8x128xf32>
    tpu.vector_store %arg10[%c8, %c0_25], %54 {strides = array<i32>} : memref<64x128xf32, #tpu.memory_space<vmem>>, vector<8x128xf32>,
    %cst_26 = arith.constant dense<0.000000e+00> : vector<8x512xf32>
    %56 = tpu.matmul %54, %11, %cst_26 {dimension_numbers = #tpu.dot_dimension_numbers<[1], [0], [0], [1], [0, 0, 1, 1], [], []>} : vector<8x128xf32>, vector<128x512xf32>, vector<8x512xf32> -> vector<8x512xf32>
    %57 = arith.addf %9, %56 : vector<8x512xf32>
    %58 = vector.extract_strided_slice %57 {offsets = [0, 0], sizes = [8, 384], strides = [1, 1]} : vector<8x512xf32> to vector<8x384xf32>
    %cst_27 = arith.constant 5.000000e-01 : f32
    %59 = vector.broadcast %cst_27 : f32 to vector<8x384xf32>
    %60 = arith.mulf %59, %58 : vector<8x384xf32>
    %61 = math.tanh %60 : vector<8x384xf32>
    %cst_28 = arith.constant 5.000000e-01 : f32
    %62 = vector.broadcast %cst_28 : f32 to vector<8x384xf32>
    %63 = arith.mulf %62, %61 : vector<8x384xf32>
    %cst_29 = arith.constant 5.000000e-01 : f32
    %64 = vector.broadcast %cst_29 : f32 to vector<8x384xf32>
    %65 = arith.addf %63, %64 : vector<8x384xf32>
    %66 = vector.extract_strided_slice %57 {offsets = [0, 384], sizes = [8, 128], strides = [1, 1]} : vector<8x512xf32> to vector<8x128xf32>
    %67 = math.tanh %66 : vector<8x128xf32>
    %68 = vector.extract_strided_slice %65 {offsets = [0, 0], sizes = [8, 128], strides = [1, 1]} : vector<8x384xf32> to vector<8x128xf32>
    %69 = vector.extract_strided_slice %65 {offsets = [0, 128], sizes = [8, 128], strides = [1, 1]} : vector<8x384xf32> to vector<8x128xf32>
    %70 = vector.extract_strided_slice %65 {offsets = [0, 256], sizes = [8, 128], strides = [1, 1]} : vector<8x384xf32> to vector<8x128xf32>
    %71 = arith.mulf %69, %52 : vector<8x128xf32>
    %72 = arith.mulf %68, %67 : vector<8x128xf32>
    %73 = arith.addf %71, %72 : vector<8x128xf32>
    %74 = math.tanh %73 : vector<8x128xf32>
    %75 = arith.mulf %70, %74 : vector<8x128xf32>
    %c16 = arith.constant 16 : index
    %c0_30 = arith.constant 0 : index
    %76 = vector.load %arg10[%c16, %c0_30] : memref<64x128xf32, #tpu.memory_space<vmem>>, vector<8x128xf32>
    tpu.vector_store %arg10[%c16, %c0_30], %75 {strides = array<i32>} : memref<64x128xf32, #tpu.memory_space<vmem>>, vector<8x128xf32>,
    %cst_31 = arith.constant dense<0.000000e+00> : vector<8x512xf32>
    %77 = tpu.matmul %75, %11, %cst_31 {dimension_numbers = #tpu.dot_dimension_numbers<[1], [0], [0], [1], [0, 0, 1, 1], [], []>} : vector<8x128xf32>, vector<128x512xf32>, vector<8x512xf32> -> vector<8x512xf32>
    %78 = arith.addf %9, %77 : vector<8x512xf32>
    %79 = vector.extract_strided_slice %78 {offsets = [0, 0], sizes = [8, 384], strides = [1, 1]} : vector<8x512xf32> to vector<8x384xf32>
    %cst_32 = arith.constant 5.000000e-01 : f32
    %80 = vector.broadcast %cst_32 : f32 to vector<8x384xf32>
    %81 = arith.mulf %80, %79 : vector<8x384xf32>
    %82 = math.tanh %81 : vector<8x384xf32>
    %cst_33 = arith.constant 5.000000e-01 : f32
    %83 = vector.broadcast %cst_33 : f32 to vector<8x384xf32>
    %84 = arith.mulf %83, %82 : vector<8x384xf32>
    %cst_34 = arith.constant 5.000000e-01 : f32
    %85 = vector.broadcast %cst_34 : f32 to vector<8x384xf32>
    %86 = arith.addf %84, %85 : vector<8x384xf32>
    %87 = vector.extract_strided_slice %78 {offsets = [0, 384], sizes = [8, 128], strides = [1, 1]} : vector<8x512xf32> to vector<8x128xf32>
    %88 = math.tanh %87 : vector<8x128xf32>
    %89 = vector.extract_strided_slice %86 {offsets = [0, 0], sizes = [8, 128], strides = [1, 1]} : vector<8x384xf32> to vector<8x128xf32>
    %90 = vector.extract_strided_slice %86 {offsets = [0, 128], sizes = [8, 128], strides = [1, 1]} : vector<8x384xf32> to vector<8x128xf32>
    %91 = vector.extract_strided_slice %86 {offsets = [0, 256], sizes = [8, 128], strides = [1, 1]} : vector<8x384xf32> to vector<8x128xf32>
    %92 = arith.mulf %90, %73 : vector<8x128xf32>
    %93 = arith.mulf %89, %88 : vector<8x128xf32>
    %94 = arith.addf %92, %93 : vector<8x128xf32>
    %95 = math.tanh %94 : vector<8x128xf32>
    %96 = arith.mulf %91, %95 : vector<8x128xf32>
    %c24 = arith.constant 24 : index
    %c0_35 = arith.constant 0 : index
    %97 = vector.load %arg10[%c24, %c0_35] : memref<64x128xf32, #tpu.memory_space<vmem>>, vector<8x128xf32>
    tpu.vector_store %arg10[%c24, %c0_35], %96 {strides = array<i32>} : memref<64x128xf32, #tpu.memory_space<vmem>>, vector<8x128xf32>,
    %cst_36 = arith.constant dense<0.000000e+00> : vector<8x512xf32>
    %98 = tpu.matmul %96, %11, %cst_36 {dimension_numbers = #tpu.dot_dimension_numbers<[1], [0], [0], [1], [0, 0, 1, 1], [], []>} : vector<8x128xf32>, vector<128x512xf32>, vector<8x512xf32> -> vector<8x512xf32>
    %99 = arith.addf %9, %98 : vector<8x512xf32>
    %100 = vector.extract_strided_slice %99 {offsets = [0, 0], sizes = [8, 384], strides = [1, 1]} : vector<8x512xf32> to vector<8x384xf32>
    %cst_37 = arith.constant 5.000000e-01 : f32
    %101 = vector.broadcast %cst_37 : f32 to vector<8x384xf32>
    %102 = arith.mulf %101, %100 : vector<8x384xf32>
    %103 = math.tanh %102 : vector<8x384xf32>
    %cst_38 = arith.constant 5.000000e-01 : f32
    %104 = vector.broadcast %cst_38 : f32 to vector<8x384xf32>
    %105 = arith.mulf %104, %103 : vector<8x384xf32>
    %cst_39 = arith.constant 5.000000e-01 : f32
    %106 = vector.broadcast %cst_39 : f32 to vector<8x384xf32>
    %107 = arith.addf %105, %106 : vector<8x384xf32>
    %108 = vector.extract_strided_slice %99 {offsets = [0, 384], sizes = [8, 128], strides = [1, 1]} : vector<8x512xf32> to vector<8x128xf32>
    %109 = math.tanh %108 : vector<8x128xf32>
    %110 = vector.extract_strided_slice %107 {offsets = [0, 0], sizes = [8, 128], strides = [1, 1]} : vector<8x384xf32> to vector<8x128xf32>
    %111 = vector.extract_strided_slice %107 {offsets = [0, 128], sizes = [8, 128], strides = [1, 1]} : vector<8x384xf32> to vector<8x128xf32>
    %112 = vector.extract_strided_slice %107 {offsets = [0, 256], sizes = [8, 128], strides = [1, 1]} : vector<8x384xf32> to vector<8x128xf32>
    %113 = arith.mulf %111, %94 : vector<8x128xf32>
    %114 = arith.mulf %110, %109 : vector<8x128xf32>
    %115 = arith.addf %113, %114 : vector<8x128xf32>
    %116 = math.tanh %115 : vector<8x128xf32>
    %117 = arith.mulf %112, %116 : vector<8x128xf32>
    %c32 = arith.constant 32 : index
    %c0_40 = arith.constant 0 : index
    %118 = vector.load %arg10[%c32, %c0_40] : memref<64x128xf32, #tpu.memory_space<vmem>>, vector<8x128xf32>
    tpu.vector_store %arg10[%c32, %c0_40], %117 {strides = array<i32>} : memref<64x128xf32, #tpu.memory_space<vmem>>, vector<8x128xf32>,
    %cst_41 = arith.constant dense<0.000000e+00> : vector<8x512xf32>
    %119 = tpu.matmul %117, %11, %cst_41 {dimension_numbers = #tpu.dot_dimension_numbers<[1], [0], [0], [1], [0, 0, 1, 1], [], []>} : vector<8x128xf32>, vector<128x512xf32>, vector<8x512xf32> -> vector<8x512xf32>
    %120 = arith.addf %9, %119 : vector<8x512xf32>
    %121 = vector.extract_strided_slice %120 {offsets = [0, 0], sizes = [8, 384], strides = [1, 1]} : vector<8x512xf32> to vector<8x384xf32>
    %cst_42 = arith.constant 5.000000e-01 : f32
    %122 = vector.broadcast %cst_42 : f32 to vector<8x384xf32>
    %123 = arith.mulf %122, %121 : vector<8x384xf32>
    %124 = math.tanh %123 : vector<8x384xf32>
    %cst_43 = arith.constant 5.000000e-01 : f32
    %125 = vector.broadcast %cst_43 : f32 to vector<8x384xf32>
    %126 = arith.mulf %125, %124 : vector<8x384xf32>
    %cst_44 = arith.constant 5.000000e-01 : f32
    %127 = vector.broadcast %cst_44 : f32 to vector<8x384xf32>
    %128 = arith.addf %126, %127 : vector<8x384xf32>
    %129 = vector.extract_strided_slice %120 {offsets = [0, 384], sizes = [8, 128], strides = [1, 1]} : vector<8x512xf32> to vector<8x128xf32>
    %130 = math.tanh %129 : vector<8x128xf32>
    %131 = vector.extract_strided_slice %128 {offsets = [0, 0], sizes = [8, 128], strides = [1, 1]} : vector<8x384xf32> to vector<8x128xf32>
    %132 = vector.extract_strided_slice %128 {offsets = [0, 128], sizes = [8, 128], strides = [1, 1]} : vector<8x384xf32> to vector<8x128xf32>
    %133 = vector.extract_strided_slice %128 {offsets = [0, 256], sizes = [8, 128], strides = [1, 1]} : vector<8x384xf32> to vector<8x128xf32>
    %134 = arith.mulf %132, %115 : vector<8x128xf32>
    %135 = arith.mulf %131, %130 : vector<8x128xf32>
    %136 = arith.addf %134, %135 : vector<8x128xf32>
    %137 = math.tanh %136 : vector<8x128xf32>
    %138 = arith.mulf %133, %137 : vector<8x128xf32>
    %c40 = arith.constant 40 : index
    %c0_45 = arith.constant 0 : index
    %139 = vector.load %arg10[%c40, %c0_45] : memref<64x128xf32, #tpu.memory_space<vmem>>, vector<8x128xf32>
    tpu.vector_store %arg10[%c40, %c0_45], %138 {strides = array<i32>} : memref<64x128xf32, #tpu.memory_space<vmem>>, vector<8x128xf32>,
    %cst_46 = arith.constant dense<0.000000e+00> : vector<8x512xf32>
    %140 = tpu.matmul %138, %11, %cst_46 {dimension_numbers = #tpu.dot_dimension_numbers<[1], [0], [0], [1], [0, 0, 1, 1], [], []>} : vector<8x128xf32>, vector<128x512xf32>, vector<8x512xf32> -> vector<8x512xf32>
    %141 = arith.addf %9, %140 : vector<8x512xf32>
    %142 = vector.extract_strided_slice %141 {offsets = [0, 0], sizes = [8, 384], strides = [1, 1]} : vector<8x512xf32> to vector<8x384xf32>
    %cst_47 = arith.constant 5.000000e-01 : f32
    %143 = vector.broadcast %cst_47 : f32 to vector<8x384xf32>
    %144 = arith.mulf %143, %142 : vector<8x384xf32>
    %145 = math.tanh %144 : vector<8x384xf32>
    %cst_48 = arith.constant 5.000000e-01 : f32
    %146 = vector.broadcast %cst_48 : f32 to vector<8x384xf32>
    %147 = arith.mulf %146, %145 : vector<8x384xf32>
    %cst_49 = arith.constant 5.000000e-01 : f32
    %148 = vector.broadcast %cst_49 : f32 to vector<8x384xf32>
    %149 = arith.addf %147, %148 : vector<8x384xf32>
    %150 = vector.extract_strided_slice %141 {offsets = [0, 384], sizes = [8, 128], strides = [1, 1]} : vector<8x512xf32> to vector<8x128xf32>
    %151 = math.tanh %150 : vector<8x128xf32>
    %152 = vector.extract_strided_slice %149 {offsets = [0, 0], sizes = [8, 128], strides = [1, 1]} : vector<8x384xf32> to vector<8x128xf32>
    %153 = vector.extract_strided_slice %149 {offsets = [0, 128], sizes = [8, 128], strides = [1, 1]} : vector<8x384xf32> to vector<8x128xf32>
    %154 = vector.extract_strided_slice %149 {offsets = [0, 256], sizes = [8, 128], strides = [1, 1]} : vector<8x384xf32> to vector<8x128xf32>
    %155 = arith.mulf %153, %136 : vector<8x128xf32>
    %156 = arith.mulf %152, %151 : vector<8x128xf32>
    %157 = arith.addf %155, %156 : vector<8x128xf32>
    %158 = math.tanh %157 : vector<8x128xf32>
    %159 = arith.mulf %154, %158 : vector<8x128xf32>
    %c48 = arith.constant 48 : index
    %c0_50 = arith.constant 0 : index
    %160 = vector.load %arg10[%c48, %c0_50] : memref<64x128xf32, #tpu.memory_space<vmem>>, vector<8x128xf32>
    tpu.vector_store %arg10[%c48, %c0_50], %159 {strides = array<i32>} : memref<64x128xf32, #tpu.memory_space<vmem>>, vector<8x128xf32>,
    %cst_51 = arith.constant dense<0.000000e+00> : vector<8x512xf32>
    %161 = tpu.matmul %159, %11, %cst_51 {dimension_numbers = #tpu.dot_dimension_numbers<[1], [0], [0], [1], [0, 0, 1, 1], [], []>} : vector<8x128xf32>, vector<128x512xf32>, vector<8x512xf32> -> vector<8x512xf32>
    %162 = arith.addf %9, %161 : vector<8x512xf32>
    %163 = vector.extract_strided_slice %162 {offsets = [0, 0], sizes = [8, 384], strides = [1, 1]} : vector<8x512xf32> to vector<8x384xf32>
    %cst_52 = arith.constant 5.000000e-01 : f32
    %164 = vector.broadcast %cst_52 : f32 to vector<8x384xf32>
    %165 = arith.mulf %164, %163 : vector<8x384xf32>
    %166 = math.tanh %165 : vector<8x384xf32>
    %cst_53 = arith.constant 5.000000e-01 : f32
    %167 = vector.broadcast %cst_53 : f32 to vector<8x384xf32>
    %168 = arith.mulf %167, %166 : vector<8x384xf32>
    %cst_54 = arith.constant 5.000000e-01 : f32
    %169 = vector.broadcast %cst_54 : f32 to vector<8x384xf32>
    %170 = arith.addf %168, %169 : vector<8x384xf32>
    %171 = vector.extract_strided_slice %162 {offsets = [0, 384], sizes = [8, 128], strides = [1, 1]} : vector<8x512xf32> to vector<8x128xf32>
    %172 = math.tanh %171 : vector<8x128xf32>
    %173 = vector.extract_strided_slice %170 {offsets = [0, 0], sizes = [8, 128], strides = [1, 1]} : vector<8x384xf32> to vector<8x128xf32>
    %174 = vector.extract_strided_slice %170 {offsets = [0, 128], sizes = [8, 128], strides = [1, 1]} : vector<8x384xf32> to vector<8x128xf32>
    %175 = vector.extract_strided_slice %170 {offsets = [0, 256], sizes = [8, 128], strides = [1, 1]} : vector<8x384xf32> to vector<8x128xf32>
    %176 = arith.mulf %174, %157 : vector<8x128xf32>
    %177 = arith.mulf %173, %172 : vector<8x128xf32>
    %178 = arith.addf %176, %177 : vector<8x128xf32>
    %179 = math.tanh %178 : vector<8x128xf32>
    %180 = arith.mulf %175, %179 : vector<8x128xf32>
    %c56 = arith.constant 56 : index
    %c0_55 = arith.constant 0 : index
    %181 = vector.load %arg10[%c56, %c0_55] : memref<64x128xf32, #tpu.memory_space<vmem>>, vector<8x128xf32>
    tpu.vector_store %arg10[%c56, %c0_55], %180 {strides = array<i32>} : memref<64x128xf32, #tpu.memory_space<vmem>>, vector<8x128xf32>,
    %c0_56 = arith.constant 0 : index
    %c0_57 = arith.constant 0 : index
    %182 = vector.load %arg10[%c0_56, %c0_57] : memref<64x128xf32, #tpu.memory_space<vmem>>, vector<64x128xf32>
    %c1 = arith.constant 1 : index
    %c0_58 = arith.constant 0 : index
    %c0_59 = arith.constant 0 : index
    %183 = vector.load %arg1[%c1, %c0_58, %c0_59] : memref<2x128x512xf32, #tpu.memory_space<vmem>>, vector<1x128x512xf32>
    %184 = vector.shape_cast %183 : vector<1x128x512xf32> to vector<128x512xf32>
    %cst_60 = arith.constant dense<0.000000e+00> : vector<64x512xf32>
    %185 = tpu.matmul %182, %184, %cst_60 {dimension_numbers = #tpu.dot_dimension_numbers<[1], [0], [0], [1], [0, 0, 1, 1], [], []>} : vector<64x128xf32>, vector<128x512xf32>, vector<64x512xf32> -> vector<64x512xf32>
    %c1_61 = arith.constant 1 : index
    %c0_62 = arith.constant 0 : index
    %c0_63 = arith.constant 0 : index
    %186 = vector.load %arg3[%c1_61, %c0_62, %c0_63] : memref<2x1x512xf32, #tpu.memory_space<vmem>>, vector<1x1x512xf32>
    %187 = vector.shape_cast %186 : vector<1x1x512xf32> to vector<1x512xf32>
    %188 = vector.broadcast %187 : vector<1x512xf32> to vector<64x512xf32>
    %189 = arith.addf %185, %188 : vector<64x512xf32>
    %c0_64 = arith.constant 0 : index
    %c0_65 = arith.constant 0 : index
    %190 = vector.load %arg11[%c0_64, %c0_65] : memref<64x512xf32, #tpu.memory_space<vmem>>, vector<64x512xf32>
    tpu.vector_store %arg11[%c0_64, %c0_65], %189 {strides = array<i32>} : memref<64x512xf32, #tpu.memory_space<vmem>>, vector<64x512xf32>,
    %c1_66 = arith.constant 1 : index
    %c0_67 = arith.constant 0 : index
    %c0_68 = arith.constant 0 : index
    %191 = vector.load %arg2[%c1_66, %c0_67, %c0_68] : memref<2x128x512xf32, #tpu.memory_space<vmem>>, vector<1x128x512xf32>
    %192 = vector.shape_cast %191 : vector<1x128x512xf32> to vector<128x512xf32>
    %cst_69 = arith.constant 0.000000e+00 : f32
    %193 = vector.broadcast %cst_69 : f32 to vector<8x128xf32>
    %cst_70 = arith.constant 0.000000e+00 : f32
    %194 = vector.broadcast %cst_70 : f32 to vector<8x128xf32>
    %c0_71 = arith.constant 0 : index
    %c0_72 = arith.constant 0 : index
    %195 = vector.load %arg11[%c0_71, %c0_72] : memref<64x512xf32, #tpu.memory_space<vmem>>, vector<8x512xf32>
    %cst_73 = arith.constant dense<0.000000e+00> : vector<8x512xf32>
    %196 = tpu.matmul %193, %192, %cst_73 {dimension_numbers = #tpu.dot_dimension_numbers<[1], [0], [0], [1], [0, 0, 1, 1], [], []>} : vector<8x128xf32>, vector<128x512xf32>, vector<8x512xf32> -> vector<8x512xf32>
    %197 = arith.addf %195, %196 : vector<8x512xf32>
    %198 = vector.extract_strided_slice %197 {offsets = [0, 0], sizes = [8, 384], strides = [1, 1]} : vector<8x512xf32> to vector<8x384xf32>
    %cst_74 = arith.constant 5.000000e-01 : f32
    %199 = vector.broadcast %cst_74 : f32 to vector<8x384xf32>
    %200 = arith.mulf %199, %198 : vector<8x384xf32>
    %201 = math.tanh %200 : vector<8x384xf32>
    %cst_75 = arith.constant 5.000000e-01 : f32
    %202 = vector.broadcast %cst_75 : f32 to vector<8x384xf32>
    %203 = arith.mulf %202, %201 : vector<8x384xf32>
    %cst_76 = arith.constant 5.000000e-01 : f32
    %204 = vector.broadcast %cst_76 : f32 to vector<8x384xf32>
    %205 = arith.addf %203, %204 : vector<8x384xf32>
    %206 = vector.extract_strided_slice %197 {offsets = [0, 384], sizes = [8, 128], strides = [1, 1]} : vector<8x512xf32> to vector<8x128xf32>
    %207 = math.tanh %206 : vector<8x128xf32>
    %208 = vector.extract_strided_slice %205 {offsets = [0, 0], sizes = [8, 128], strides = [1, 1]} : vector<8x384xf32> to vector<8x128xf32>
    %209 = vector.extract_strided_slice %205 {offsets = [0, 128], sizes = [8, 128], strides = [1, 1]} : vector<8x384xf32> to vector<8x128xf32>
    %210 = vector.extract_strided_slice %205 {offsets = [0, 256], sizes = [8, 128], strides = [1, 1]} : vector<8x384xf32> to vector<8x128xf32>
    %211 = arith.mulf %209, %194 : vector<8x128xf32>
    %212 = arith.mulf %208, %207 : vector<8x128xf32>
    %213 = arith.addf %211, %212 : vector<8x128xf32>
    %214 = math.tanh %213 : vector<8x128xf32>
    %215 = arith.mulf %210, %214 : vector<8x128xf32>
    %c0_77 = arith.constant 0 : index
    %c0_78 = arith.constant 0 : index
    %216 = vector.load %arg10[%c0_77, %c0_78] : memref<64x128xf32, #tpu.memory_space<vmem>>, vector<8x128xf32>
    tpu.vector_store %arg10[%c0_77, %c0_78], %215 {strides = array<i32>} : memref<64x128xf32, #tpu.memory_space<vmem>>, vector<8x128xf32>,
    %c8_79 = arith.constant 8 : index
    %c0_80 = arith.constant 0 : index
    %217 = vector.load %arg11[%c8_79, %c0_80] : memref<64x512xf32, #tpu.memory_space<vmem>>, vector<8x512xf32>
    %cst_81 = arith.constant dense<0.000000e+00> : vector<8x512xf32>
    %218 = tpu.matmul %215, %192, %cst_81 {dimension_numbers = #tpu.dot_dimension_numbers<[1], [0], [0], [1], [0, 0, 1, 1], [], []>} : vector<8x128xf32>, vector<128x512xf32>, vector<8x512xf32> -> vector<8x512xf32>
    %219 = arith.addf %217, %218 : vector<8x512xf32>
    %220 = vector.extract_strided_slice %219 {offsets = [0, 0], sizes = [8, 384], strides = [1, 1]} : vector<8x512xf32> to vector<8x384xf32>
    %cst_82 = arith.constant 5.000000e-01 : f32
    %221 = vector.broadcast %cst_82 : f32 to vector<8x384xf32>
    %222 = arith.mulf %221, %220 : vector<8x384xf32>
    %223 = math.tanh %222 : vector<8x384xf32>
    %cst_83 = arith.constant 5.000000e-01 : f32
    %224 = vector.broadcast %cst_83 : f32 to vector<8x384xf32>
    %225 = arith.mulf %224, %223 : vector<8x384xf32>
    %cst_84 = arith.constant 5.000000e-01 : f32
    %226 = vector.broadcast %cst_84 : f32 to vector<8x384xf32>
    %227 = arith.addf %225, %226 : vector<8x384xf32>
    %228 = vector.extract_strided_slice %219 {offsets = [0, 384], sizes = [8, 128], strides = [1, 1]} : vector<8x512xf32> to vector<8x128xf32>
    %229 = math.tanh %228 : vector<8x128xf32>
    %230 = vector.extract_strided_slice %227 {offsets = [0, 0], sizes = [8, 128], strides = [1, 1]} : vector<8x384xf32> to vector<8x128xf32>
    %231 = vector.extract_strided_slice %227 {offsets = [0, 128], sizes = [8, 128], strides = [1, 1]} : vector<8x384xf32> to vector<8x128xf32>
    %232 = vector.extract_strided_slice %227 {offsets = [0, 256], sizes = [8, 128], strides = [1, 1]} : vector<8x384xf32> to vector<8x128xf32>
    %233 = arith.mulf %231, %213 : vector<8x128xf32>
    %234 = arith.mulf %230, %229 : vector<8x128xf32>
    %235 = arith.addf %233, %234 : vector<8x128xf32>
    %236 = math.tanh %235 : vector<8x128xf32>
    %237 = arith.mulf %232, %236 : vector<8x128xf32>
    %c8_85 = arith.constant 8 : index
    %c0_86 = arith.constant 0 : index
    %238 = vector.load %arg10[%c8_85, %c0_86] : memref<64x128xf32, #tpu.memory_space<vmem>>, vector<8x128xf32>
    tpu.vector_store %arg10[%c8_85, %c0_86], %237 {strides = array<i32>} : memref<64x128xf32, #tpu.memory_space<vmem>>, vector<8x128xf32>,
    %c16_87 = arith.constant 16 : index
    %c0_88 = arith.constant 0 : index
    %239 = vector.load %arg11[%c16_87, %c0_88] : memref<64x512xf32, #tpu.memory_space<vmem>>, vector<8x512xf32>
    %cst_89 = arith.constant dense<0.000000e+00> : vector<8x512xf32>
    %240 = tpu.matmul %237, %192, %cst_89 {dimension_numbers = #tpu.dot_dimension_numbers<[1], [0], [0], [1], [0, 0, 1, 1], [], []>} : vector<8x128xf32>, vector<128x512xf32>, vector<8x512xf32> -> vector<8x512xf32>
    %241 = arith.addf %239, %240 : vector<8x512xf32>
    %242 = vector.extract_strided_slice %241 {offsets = [0, 0], sizes = [8, 384], strides = [1, 1]} : vector<8x512xf32> to vector<8x384xf32>
    %cst_90 = arith.constant 5.000000e-01 : f32
    %243 = vector.broadcast %cst_90 : f32 to vector<8x384xf32>
    %244 = arith.mulf %243, %242 : vector<8x384xf32>
    %245 = math.tanh %244 : vector<8x384xf32>
    %cst_91 = arith.constant 5.000000e-01 : f32
    %246 = vector.broadcast %cst_91 : f32 to vector<8x384xf32>
    %247 = arith.mulf %246, %245 : vector<8x384xf32>
    %cst_92 = arith.constant 5.000000e-01 : f32
    %248 = vector.broadcast %cst_92 : f32 to vector<8x384xf32>
    %249 = arith.addf %247, %248 : vector<8x384xf32>
    %250 = vector.extract_strided_slice %241 {offsets = [0, 384], sizes = [8, 128], strides = [1, 1]} : vector<8x512xf32> to vector<8x128xf32>
    %251 = math.tanh %250 : vector<8x128xf32>
    %252 = vector.extract_strided_slice %249 {offsets = [0, 0], sizes = [8, 128], strides = [1, 1]} : vector<8x384xf32> to vector<8x128xf32>
    %253 = vector.extract_strided_slice %249 {offsets = [0, 128], sizes = [8, 128], strides = [1, 1]} : vector<8x384xf32> to vector<8x128xf32>
    %254 = vector.extract_strided_slice %249 {offsets = [0, 256], sizes = [8, 128], strides = [1, 1]} : vector<8x384xf32> to vector<8x128xf32>
    %255 = arith.mulf %253, %235 : vector<8x128xf32>
    %256 = arith.mulf %252, %251 : vector<8x128xf32>
    %257 = arith.addf %255, %256 : vector<8x128xf32>
    %258 = math.tanh %257 : vector<8x128xf32>
    %259 = arith.mulf %254, %258 : vector<8x128xf32>
    %c16_93 = arith.constant 16 : index
    %c0_94 = arith.constant 0 : index
    %260 = vector.load %arg10[%c16_93, %c0_94] : memref<64x128xf32, #tpu.memory_space<vmem>>, vector<8x128xf32>
    tpu.vector_store %arg10[%c16_93, %c0_94], %259 {strides = array<i32>} : memref<64x128xf32, #tpu.memory_space<vmem>>, vector<8x128xf32>,
    %c24_95 = arith.constant 24 : index
    %c0_96 = arith.constant 0 : index
    %261 = vector.load %arg11[%c24_95, %c0_96] : memref<64x512xf32, #tpu.memory_space<vmem>>, vector<8x512xf32>
    %cst_97 = arith.constant dense<0.000000e+00> : vector<8x512xf32>
    %262 = tpu.matmul %259, %192, %cst_97 {dimension_numbers = #tpu.dot_dimension_numbers<[1], [0], [0], [1], [0, 0, 1, 1], [], []>} : vector<8x128xf32>, vector<128x512xf32>, vector<8x512xf32> -> vector<8x512xf32>
    %263 = arith.addf %261, %262 : vector<8x512xf32>
    %264 = vector.extract_strided_slice %263 {offsets = [0, 0], sizes = [8, 384], strides = [1, 1]} : vector<8x512xf32> to vector<8x384xf32>
    %cst_98 = arith.constant 5.000000e-01 : f32
    %265 = vector.broadcast %cst_98 : f32 to vector<8x384xf32>
    %266 = arith.mulf %265, %264 : vector<8x384xf32>
    %267 = math.tanh %266 : vector<8x384xf32>
    %cst_99 = arith.constant 5.000000e-01 : f32
    %268 = vector.broadcast %cst_99 : f32 to vector<8x384xf32>
    %269 = arith.mulf %268, %267 : vector<8x384xf32>
    %cst_100 = arith.constant 5.000000e-01 : f32
    %270 = vector.broadcast %cst_100 : f32 to vector<8x384xf32>
    %271 = arith.addf %269, %270 : vector<8x384xf32>
    %272 = vector.extract_strided_slice %263 {offsets = [0, 384], sizes = [8, 128], strides = [1, 1]} : vector<8x512xf32> to vector<8x128xf32>
    %273 = math.tanh %272 : vector<8x128xf32>
    %274 = vector.extract_strided_slice %271 {offsets = [0, 0], sizes = [8, 128], strides = [1, 1]} : vector<8x384xf32> to vector<8x128xf32>
    %275 = vector.extract_strided_slice %271 {offsets = [0, 128], sizes = [8, 128], strides = [1, 1]} : vector<8x384xf32> to vector<8x128xf32>
    %276 = vector.extract_strided_slice %271 {offsets = [0, 256], sizes = [8, 128], strides = [1, 1]} : vector<8x384xf32> to vector<8x128xf32>
    %277 = arith.mulf %275, %257 : vector<8x128xf32>
    %278 = arith.mulf %274, %273 : vector<8x128xf32>
    %279 = arith.addf %277, %278 : vector<8x128xf32>
    %280 = math.tanh %279 : vector<8x128xf32>
    %281 = arith.mulf %276, %280 : vector<8x128xf32>
    %c24_101 = arith.constant 24 : index
    %c0_102 = arith.constant 0 : index
    %282 = vector.load %arg10[%c24_101, %c0_102] : memref<64x128xf32, #tpu.memory_space<vmem>>, vector<8x128xf32>
    tpu.vector_store %arg10[%c24_101, %c0_102], %281 {strides = array<i32>} : memref<64x128xf32, #tpu.memory_space<vmem>>, vector<8x128xf32>,
    %c32_103 = arith.constant 32 : index
    %c0_104 = arith.constant 0 : index
    %283 = vector.load %arg11[%c32_103, %c0_104] : memref<64x512xf32, #tpu.memory_space<vmem>>, vector<8x512xf32>
    %cst_105 = arith.constant dense<0.000000e+00> : vector<8x512xf32>
    %284 = tpu.matmul %281, %192, %cst_105 {dimension_numbers = #tpu.dot_dimension_numbers<[1], [0], [0], [1], [0, 0, 1, 1], [], []>} : vector<8x128xf32>, vector<128x512xf32>, vector<8x512xf32> -> vector<8x512xf32>
    %285 = arith.addf %283, %284 : vector<8x512xf32>
    %286 = vector.extract_strided_slice %285 {offsets = [0, 0], sizes = [8, 384], strides = [1, 1]} : vector<8x512xf32> to vector<8x384xf32>
    %cst_106 = arith.constant 5.000000e-01 : f32
    %287 = vector.broadcast %cst_106 : f32 to vector<8x384xf32>
    %288 = arith.mulf %287, %286 : vector<8x384xf32>
    %289 = math.tanh %288 : vector<8x384xf32>
    %cst_107 = arith.constant 5.000000e-01 : f32
    %290 = vector.broadcast %cst_107 : f32 to vector<8x384xf32>
    %291 = arith.mulf %290, %289 : vector<8x384xf32>
    %cst_108 = arith.constant 5.000000e-01 : f32
    %292 = vector.broadcast %cst_108 : f32 to vector<8x384xf32>
    %293 = arith.addf %291, %292 : vector<8x384xf32>
    %294 = vector.extract_strided_slice %285 {offsets = [0, 384], sizes = [8, 128], strides = [1, 1]} : vector<8x512xf32> to vector<8x128xf32>
    %295 = math.tanh %294 : vector<8x128xf32>
    %296 = vector.extract_strided_slice %293 {offsets = [0, 0], sizes = [8, 128], strides = [1, 1]} : vector<8x384xf32> to vector<8x128xf32>
    %297 = vector.extract_strided_slice %293 {offsets = [0, 128], sizes = [8, 128], strides = [1, 1]} : vector<8x384xf32> to vector<8x128xf32>
    %298 = vector.extract_strided_slice %293 {offsets = [0, 256], sizes = [8, 128], strides = [1, 1]} : vector<8x384xf32> to vector<8x128xf32>
    %299 = arith.mulf %297, %279 : vector<8x128xf32>
    %300 = arith.mulf %296, %295 : vector<8x128xf32>
    %301 = arith.addf %299, %300 : vector<8x128xf32>
    %302 = math.tanh %301 : vector<8x128xf32>
    %303 = arith.mulf %298, %302 : vector<8x128xf32>
    %c32_109 = arith.constant 32 : index
    %c0_110 = arith.constant 0 : index
    %304 = vector.load %arg10[%c32_109, %c0_110] : memref<64x128xf32, #tpu.memory_space<vmem>>, vector<8x128xf32>
    tpu.vector_store %arg10[%c32_109, %c0_110], %303 {strides = array<i32>} : memref<64x128xf32, #tpu.memory_space<vmem>>, vector<8x128xf32>,
    %c40_111 = arith.constant 40 : index
    %c0_112 = arith.constant 0 : index
    %305 = vector.load %arg11[%c40_111, %c0_112] : memref<64x512xf32, #tpu.memory_space<vmem>>, vector<8x512xf32>
    %cst_113 = arith.constant dense<0.000000e+00> : vector<8x512xf32>
    %306 = tpu.matmul %303, %192, %cst_113 {dimension_numbers = #tpu.dot_dimension_numbers<[1], [0], [0], [1], [0, 0, 1, 1], [], []>} : vector<8x128xf32>, vector<128x512xf32>, vector<8x512xf32> -> vector<8x512xf32>
    %307 = arith.addf %305, %306 : vector<8x512xf32>
    %308 = vector.extract_strided_slice %307 {offsets = [0, 0], sizes = [8, 384], strides = [1, 1]} : vector<8x512xf32> to vector<8x384xf32>
    %cst_114 = arith.constant 5.000000e-01 : f32
    %309 = vector.broadcast %cst_114 : f32 to vector<8x384xf32>
    %310 = arith.mulf %309, %308 : vector<8x384xf32>
    %311 = math.tanh %310 : vector<8x384xf32>
    %cst_115 = arith.constant 5.000000e-01 : f32
    %312 = vector.broadcast %cst_115 : f32 to vector<8x384xf32>
    %313 = arith.mulf %312, %311 : vector<8x384xf32>
    %cst_116 = arith.constant 5.000000e-01 : f32
    %314 = vector.broadcast %cst_116 : f32 to vector<8x384xf32>
    %315 = arith.addf %313, %314 : vector<8x384xf32>
    %316 = vector.extract_strided_slice %307 {offsets = [0, 384], sizes = [8, 128], strides = [1, 1]} : vector<8x512xf32> to vector<8x128xf32>
    %317 = math.tanh %316 : vector<8x128xf32>
    %318 = vector.extract_strided_slice %315 {offsets = [0, 0], sizes = [8, 128], strides = [1, 1]} : vector<8x384xf32> to vector<8x128xf32>
    %319 = vector.extract_strided_slice %315 {offsets = [0, 128], sizes = [8, 128], strides = [1, 1]} : vector<8x384xf32> to vector<8x128xf32>
    %320 = vector.extract_strided_slice %315 {offsets = [0, 256], sizes = [8, 128], strides = [1, 1]} : vector<8x384xf32> to vector<8x128xf32>
    %321 = arith.mulf %319, %301 : vector<8x128xf32>
    %322 = arith.mulf %318, %317 : vector<8x128xf32>
    %323 = arith.addf %321, %322 : vector<8x128xf32>
    %324 = math.tanh %323 : vector<8x128xf32>
    %325 = arith.mulf %320, %324 : vector<8x128xf32>
    %c40_117 = arith.constant 40 : index
    %c0_118 = arith.constant 0 : index
    %326 = vector.load %arg10[%c40_117, %c0_118] : memref<64x128xf32, #tpu.memory_space<vmem>>, vector<8x128xf32>
    tpu.vector_store %arg10[%c40_117, %c0_118], %325 {strides = array<i32>} : memref<64x128xf32, #tpu.memory_space<vmem>>, vector<8x128xf32>,
    %c48_119 = arith.constant 48 : index
    %c0_120 = arith.constant 0 : index
    %327 = vector.load %arg11[%c48_119, %c0_120] : memref<64x512xf32, #tpu.memory_space<vmem>>, vector<8x512xf32>
    %cst_121 = arith.constant dense<0.000000e+00> : vector<8x512xf32>
    %328 = tpu.matmul %325, %192, %cst_121 {dimension_numbers = #tpu.dot_dimension_numbers<[1], [0], [0], [1], [0, 0, 1, 1], [], []>} : vector<8x128xf32>, vector<128x512xf32>, vector<8x512xf32> -> vector<8x512xf32>
    %329 = arith.addf %327, %328 : vector<8x512xf32>
    %330 = vector.extract_strided_slice %329 {offsets = [0, 0], sizes = [8, 384], strides = [1, 1]} : vector<8x512xf32> to vector<8x384xf32>
    %cst_122 = arith.constant 5.000000e-01 : f32
    %331 = vector.broadcast %cst_122 : f32 to vector<8x384xf32>
    %332 = arith.mulf %331, %330 : vector<8x384xf32>
    %333 = math.tanh %332 : vector<8x384xf32>
    %cst_123 = arith.constant 5.000000e-01 : f32
    %334 = vector.broadcast %cst_123 : f32 to vector<8x384xf32>
    %335 = arith.mulf %334, %333 : vector<8x384xf32>
    %cst_124 = arith.constant 5.000000e-01 : f32
    %336 = vector.broadcast %cst_124 : f32 to vector<8x384xf32>
    %337 = arith.addf %335, %336 : vector<8x384xf32>
    %338 = vector.extract_strided_slice %329 {offsets = [0, 384], sizes = [8, 128], strides = [1, 1]} : vector<8x512xf32> to vector<8x128xf32>
    %339 = math.tanh %338 : vector<8x128xf32>
    %340 = vector.extract_strided_slice %337 {offsets = [0, 0], sizes = [8, 128], strides = [1, 1]} : vector<8x384xf32> to vector<8x128xf32>
    %341 = vector.extract_strided_slice %337 {offsets = [0, 128], sizes = [8, 128], strides = [1, 1]} : vector<8x384xf32> to vector<8x128xf32>
    %342 = vector.extract_strided_slice %337 {offsets = [0, 256], sizes = [8, 128], strides = [1, 1]} : vector<8x384xf32> to vector<8x128xf32>
    %343 = arith.mulf %341, %323 : vector<8x128xf32>
    %344 = arith.mulf %340, %339 : vector<8x128xf32>
    %345 = arith.addf %343, %344 : vector<8x128xf32>
    %346 = math.tanh %345 : vector<8x128xf32>
    %347 = arith.mulf %342, %346 : vector<8x128xf32>
    %c48_125 = arith.constant 48 : index
    %c0_126 = arith.constant 0 : index
    %348 = vector.load %arg10[%c48_125, %c0_126] : memref<64x128xf32, #tpu.memory_space<vmem>>, vector<8x128xf32>
    tpu.vector_store %arg10[%c48_125, %c0_126], %347 {strides = array<i32>} : memref<64x128xf32, #tpu.memory_space<vmem>>, vector<8x128xf32>,
    %c56_127 = arith.constant 56 : index
    %c0_128 = arith.constant 0 : index
    %349 = vector.load %arg11[%c56_127, %c0_128] : memref<64x512xf32, #tpu.memory_space<vmem>>, vector<8x512xf32>
    %cst_129 = arith.constant dense<0.000000e+00> : vector<8x512xf32>
    %350 = tpu.matmul %347, %192, %cst_129 {dimension_numbers = #tpu.dot_dimension_numbers<[1], [0], [0], [1], [0, 0, 1, 1], [], []>} : vector<8x128xf32>, vector<128x512xf32>, vector<8x512xf32> -> vector<8x512xf32>
    %351 = arith.addf %349, %350 : vector<8x512xf32>
    %352 = vector.extract_strided_slice %351 {offsets = [0, 0], sizes = [8, 384], strides = [1, 1]} : vector<8x512xf32> to vector<8x384xf32>
    %cst_130 = arith.constant 5.000000e-01 : f32
    %353 = vector.broadcast %cst_130 : f32 to vector<8x384xf32>
    %354 = arith.mulf %353, %352 : vector<8x384xf32>
    %355 = math.tanh %354 : vector<8x384xf32>
    %cst_131 = arith.constant 5.000000e-01 : f32
    %356 = vector.broadcast %cst_131 : f32 to vector<8x384xf32>
    %357 = arith.mulf %356, %355 : vector<8x384xf32>
    %cst_132 = arith.constant 5.000000e-01 : f32
    %358 = vector.broadcast %cst_132 : f32 to vector<8x384xf32>
    %359 = arith.addf %357, %358 : vector<8x384xf32>
    %360 = vector.extract_strided_slice %351 {offsets = [0, 384], sizes = [8, 128], strides = [1, 1]} : vector<8x512xf32> to vector<8x128xf32>
    %361 = math.tanh %360 : vector<8x128xf32>
    %362 = vector.extract_strided_slice %359 {offsets = [0, 0], sizes = [8, 128], strides = [1, 1]} : vector<8x384xf32> to vector<8x128xf32>
    %363 = vector.extract_strided_slice %359 {offsets = [0, 128], sizes = [8, 128], strides = [1, 1]} : vector<8x384xf32> to vector<8x128xf32>
    %364 = vector.extract_strided_slice %359 {offsets = [0, 256], sizes = [8, 128], strides = [1, 1]} : vector<8x384xf32> to vector<8x128xf32>
    %365 = arith.mulf %363, %345 : vector<8x128xf32>
    %366 = arith.mulf %362, %361 : vector<8x128xf32>
    %367 = arith.addf %365, %366 : vector<8x128xf32>
    %368 = math.tanh %367 : vector<8x128xf32>
    %369 = arith.mulf %364, %368 : vector<8x128xf32>
    %c56_133 = arith.constant 56 : index
    %c0_134 = arith.constant 0 : index
    %370 = vector.load %arg10[%c56_133, %c0_134] : memref<64x128xf32, #tpu.memory_space<vmem>>, vector<8x128xf32>
    tpu.vector_store %arg10[%c56_133, %c0_134], %369 {strides = array<i32>} : memref<64x128xf32, #tpu.memory_space<vmem>>, vector<8x128xf32>,
    %c0_135 = arith.constant 0 : index
    %c0_136 = arith.constant 0 : index
    %371 = vector.load %arg10[%c0_135, %c0_136] : memref<64x128xf32, #tpu.memory_space<vmem>>, vector<64x128xf32>
    %c0_137 = arith.constant 0 : index
    %c0_138 = arith.constant 0 : index
    %372 = vector.load %arg4[%c0_137, %c0_138] : memref<128x512xf32, #tpu.memory_space<vmem>>, vector<128x512xf32>
    %cst_139 = arith.constant dense<0.000000e+00> : vector<64x512xf32>
    %373 = tpu.matmul %371, %372, %cst_139 {dimension_numbers = #tpu.dot_dimension_numbers<[1], [0], [0], [1], [0, 0, 1, 1], [], []>} : vector<64x128xf32>, vector<128x512xf32>, vector<64x512xf32> -> vector<64x512xf32>
    %c0_140 = arith.constant 0 : index
    %c0_141 = arith.constant 0 : index
    %374 = vector.load %arg6[%c0_140, %c0_141] : memref<1x512xf32, #tpu.memory_space<vmem>>, vector<1x512xf32>
    %375 = vector.broadcast %374 : vector<1x512xf32> to vector<64x512xf32>
    %376 = arith.addf %373, %375 : vector<64x512xf32>
    %c0_142 = arith.constant 0 : index
    %c0_143 = arith.constant 0 : index
    %377 = vector.load %arg11[%c0_142, %c0_143] : memref<64x512xf32, #tpu.memory_space<vmem>>, vector<64x512xf32>
    tpu.vector_store %arg11[%c0_142, %c0_143], %376 {strides = array<i32>} : memref<64x512xf32, #tpu.memory_space<vmem>>, vector<64x512xf32>,
    %c0_144 = arith.constant 0 : index
    %c0_145 = arith.constant 0 : index
    %378 = vector.load %arg5[%c0_144, %c0_145] : memref<128x512xf32, #tpu.memory_space<vmem>>, vector<128x512xf32>
    %cst_146 = arith.constant 0.000000e+00 : f32
    %379 = vector.broadcast %cst_146 : f32 to vector<8x128xf32>
    %cst_147 = arith.constant 0.000000e+00 : f32
    %380 = vector.broadcast %cst_147 : f32 to vector<8x128xf32>
    %c0_148 = arith.constant 0 : index
    %c0_149 = arith.constant 0 : index
    %381 = vector.load %arg11[%c0_148, %c0_149] : memref<64x512xf32, #tpu.memory_space<vmem>>, vector<8x512xf32>
    %cst_150 = arith.constant dense<0.000000e+00> : vector<8x512xf32>
    %382 = tpu.matmul %379, %378, %cst_150 {dimension_numbers = #tpu.dot_dimension_numbers<[1], [0], [0], [1], [0, 0, 1, 1], [], []>} : vector<8x128xf32>, vector<128x512xf32>, vector<8x512xf32> -> vector<8x512xf32>
    %383 = arith.addf %381, %382 : vector<8x512xf32>
    %384 = vector.extract_strided_slice %383 {offsets = [0, 0], sizes = [8, 384], strides = [1, 1]} : vector<8x512xf32> to vector<8x384xf32>
    %cst_151 = arith.constant 5.000000e-01 : f32
    %385 = vector.broadcast %cst_151 : f32 to vector<8x384xf32>
    %386 = arith.mulf %385, %384 : vector<8x384xf32>
    %387 = math.tanh %386 : vector<8x384xf32>
    %cst_152 = arith.constant 5.000000e-01 : f32
    %388 = vector.broadcast %cst_152 : f32 to vector<8x384xf32>
    %389 = arith.mulf %388, %387 : vector<8x384xf32>
    %cst_153 = arith.constant 5.000000e-01 : f32
    %390 = vector.broadcast %cst_153 : f32 to vector<8x384xf32>
    %391 = arith.addf %389, %390 : vector<8x384xf32>
    %392 = vector.extract_strided_slice %383 {offsets = [0, 384], sizes = [8, 128], strides = [1, 1]} : vector<8x512xf32> to vector<8x128xf32>
    %393 = math.tanh %392 : vector<8x128xf32>
    %394 = vector.extract_strided_slice %391 {offsets = [0, 0], sizes = [8, 128], strides = [1, 1]} : vector<8x384xf32> to vector<8x128xf32>
    %395 = vector.extract_strided_slice %391 {offsets = [0, 128], sizes = [8, 128], strides = [1, 1]} : vector<8x384xf32> to vector<8x128xf32>
    %396 = vector.extract_strided_slice %391 {offsets = [0, 256], sizes = [8, 128], strides = [1, 1]} : vector<8x384xf32> to vector<8x128xf32>
    %397 = arith.mulf %395, %380 : vector<8x128xf32>
    %398 = arith.mulf %394, %393 : vector<8x128xf32>
    %399 = arith.addf %397, %398 : vector<8x128xf32>
    %400 = math.tanh %399 : vector<8x128xf32>
    %401 = arith.mulf %396, %400 : vector<8x128xf32>
    %c0_154 = arith.constant 0 : index
    %c0_155 = arith.constant 0 : index
    %402 = vector.load %arg10[%c0_154, %c0_155] : memref<64x128xf32, #tpu.memory_space<vmem>>, vector<8x128xf32>
    tpu.vector_store %arg10[%c0_154, %c0_155], %401 {strides = array<i32>} : memref<64x128xf32, #tpu.memory_space<vmem>>, vector<8x128xf32>,
    %c8_156 = arith.constant 8 : index
    %c0_157 = arith.constant 0 : index
    %403 = vector.load %arg11[%c8_156, %c0_157] : memref<64x512xf32, #tpu.memory_space<vmem>>, vector<8x512xf32>
    %cst_158 = arith.constant dense<0.000000e+00> : vector<8x512xf32>
    %404 = tpu.matmul %401, %378, %cst_158 {dimension_numbers = #tpu.dot_dimension_numbers<[1], [0], [0], [1], [0, 0, 1, 1], [], []>} : vector<8x128xf32>, vector<128x512xf32>, vector<8x512xf32> -> vector<8x512xf32>
    %405 = arith.addf %403, %404 : vector<8x512xf32>
    %406 = vector.extract_strided_slice %405 {offsets = [0, 0], sizes = [8, 384], strides = [1, 1]} : vector<8x512xf32> to vector<8x384xf32>
    %cst_159 = arith.constant 5.000000e-01 : f32
    %407 = vector.broadcast %cst_159 : f32 to vector<8x384xf32>
    %408 = arith.mulf %407, %406 : vector<8x384xf32>
    %409 = math.tanh %408 : vector<8x384xf32>
    %cst_160 = arith.constant 5.000000e-01 : f32
    %410 = vector.broadcast %cst_160 : f32 to vector<8x384xf32>
    %411 = arith.mulf %410, %409 : vector<8x384xf32>
    %cst_161 = arith.constant 5.000000e-01 : f32
    %412 = vector.broadcast %cst_161 : f32 to vector<8x384xf32>
    %413 = arith.addf %411, %412 : vector<8x384xf32>
    %414 = vector.extract_strided_slice %405 {offsets = [0, 384], sizes = [8, 128], strides = [1, 1]} : vector<8x512xf32> to vector<8x128xf32>
    %415 = math.tanh %414 : vector<8x128xf32>
    %416 = vector.extract_strided_slice %413 {offsets = [0, 0], sizes = [8, 128], strides = [1, 1]} : vector<8x384xf32> to vector<8x128xf32>
    %417 = vector.extract_strided_slice %413 {offsets = [0, 128], sizes = [8, 128], strides = [1, 1]} : vector<8x384xf32> to vector<8x128xf32>
    %418 = vector.extract_strided_slice %413 {offsets = [0, 256], sizes = [8, 128], strides = [1, 1]} : vector<8x384xf32> to vector<8x128xf32>
    %419 = arith.mulf %417, %399 : vector<8x128xf32>
    %420 = arith.mulf %416, %415 : vector<8x128xf32>
    %421 = arith.addf %419, %420 : vector<8x128xf32>
    %422 = math.tanh %421 : vector<8x128xf32>
    %423 = arith.mulf %418, %422 : vector<8x128xf32>
    %c8_162 = arith.constant 8 : index
    %c0_163 = arith.constant 0 : index
    %424 = vector.load %arg10[%c8_162, %c0_163] : memref<64x128xf32, #tpu.memory_space<vmem>>, vector<8x128xf32>
    tpu.vector_store %arg10[%c8_162, %c0_163], %423 {strides = array<i32>} : memref<64x128xf32, #tpu.memory_space<vmem>>, vector<8x128xf32>,
    %c16_164 = arith.constant 16 : index
    %c0_165 = arith.constant 0 : index
    %425 = vector.load %arg11[%c16_164, %c0_165] : memref<64x512xf32, #tpu.memory_space<vmem>>, vector<8x512xf32>
    %cst_166 = arith.constant dense<0.000000e+00> : vector<8x512xf32>
    %426 = tpu.matmul %423, %378, %cst_166 {dimension_numbers = #tpu.dot_dimension_numbers<[1], [0], [0], [1], [0, 0, 1, 1], [], []>} : vector<8x128xf32>, vector<128x512xf32>, vector<8x512xf32> -> vector<8x512xf32>
    %427 = arith.addf %425, %426 : vector<8x512xf32>
    %428 = vector.extract_strided_slice %427 {offsets = [0, 0], sizes = [8, 384], strides = [1, 1]} : vector<8x512xf32> to vector<8x384xf32>
    %cst_167 = arith.constant 5.000000e-01 : f32
    %429 = vector.broadcast %cst_167 : f32 to vector<8x384xf32>
    %430 = arith.mulf %429, %428 : vector<8x384xf32>
    %431 = math.tanh %430 : vector<8x384xf32>
    %cst_168 = arith.constant 5.000000e-01 : f32
    %432 = vector.broadcast %cst_168 : f32 to vector<8x384xf32>
    %433 = arith.mulf %432, %431 : vector<8x384xf32>
    %cst_169 = arith.constant 5.000000e-01 : f32
    %434 = vector.broadcast %cst_169 : f32 to vector<8x384xf32>
    %435 = arith.addf %433, %434 : vector<8x384xf32>
    %436 = vector.extract_strided_slice %427 {offsets = [0, 384], sizes = [8, 128], strides = [1, 1]} : vector<8x512xf32> to vector<8x128xf32>
    %437 = math.tanh %436 : vector<8x128xf32>
    %438 = vector.extract_strided_slice %435 {offsets = [0, 0], sizes = [8, 128], strides = [1, 1]} : vector<8x384xf32> to vector<8x128xf32>
    %439 = vector.extract_strided_slice %435 {offsets = [0, 128], sizes = [8, 128], strides = [1, 1]} : vector<8x384xf32> to vector<8x128xf32>
    %440 = vector.extract_strided_slice %435 {offsets = [0, 256], sizes = [8, 128], strides = [1, 1]} : vector<8x384xf32> to vector<8x128xf32>
    %441 = arith.mulf %439, %421 : vector<8x128xf32>
    %442 = arith.mulf %438, %437 : vector<8x128xf32>
    %443 = arith.addf %441, %442 : vector<8x128xf32>
    %444 = math.tanh %443 : vector<8x128xf32>
    %445 = arith.mulf %440, %444 : vector<8x128xf32>
    %c16_170 = arith.constant 16 : index
    %c0_171 = arith.constant 0 : index
    %446 = vector.load %arg10[%c16_170, %c0_171] : memref<64x128xf32, #tpu.memory_space<vmem>>, vector<8x128xf32>
    tpu.vector_store %arg10[%c16_170, %c0_171], %445 {strides = array<i32>} : memref<64x128xf32, #tpu.memory_space<vmem>>, vector<8x128xf32>,
    %c24_172 = arith.constant 24 : index
    %c0_173 = arith.constant 0 : index
    %447 = vector.load %arg11[%c24_172, %c0_173] : memref<64x512xf32, #tpu.memory_space<vmem>>, vector<8x512xf32>
    %cst_174 = arith.constant dense<0.000000e+00> : vector<8x512xf32>
    %448 = tpu.matmul %445, %378, %cst_174 {dimension_numbers = #tpu.dot_dimension_numbers<[1], [0], [0], [1], [0, 0, 1, 1], [], []>} : vector<8x128xf32>, vector<128x512xf32>, vector<8x512xf32> -> vector<8x512xf32>
    %449 = arith.addf %447, %448 : vector<8x512xf32>
    %450 = vector.extract_strided_slice %449 {offsets = [0, 0], sizes = [8, 384], strides = [1, 1]} : vector<8x512xf32> to vector<8x384xf32>
    %cst_175 = arith.constant 5.000000e-01 : f32
    %451 = vector.broadcast %cst_175 : f32 to vector<8x384xf32>
    %452 = arith.mulf %451, %450 : vector<8x384xf32>
    %453 = math.tanh %452 : vector<8x384xf32>
    %cst_176 = arith.constant 5.000000e-01 : f32
    %454 = vector.broadcast %cst_176 : f32 to vector<8x384xf32>
    %455 = arith.mulf %454, %453 : vector<8x384xf32>
    %cst_177 = arith.constant 5.000000e-01 : f32
    %456 = vector.broadcast %cst_177 : f32 to vector<8x384xf32>
    %457 = arith.addf %455, %456 : vector<8x384xf32>
    %458 = vector.extract_strided_slice %449 {offsets = [0, 384], sizes = [8, 128], strides = [1, 1]} : vector<8x512xf32> to vector<8x128xf32>
    %459 = math.tanh %458 : vector<8x128xf32>
    %460 = vector.extract_strided_slice %457 {offsets = [0, 0], sizes = [8, 128], strides = [1, 1]} : vector<8x384xf32> to vector<8x128xf32>
    %461 = vector.extract_strided_slice %457 {offsets = [0, 128], sizes = [8, 128], strides = [1, 1]} : vector<8x384xf32> to vector<8x128xf32>
    %462 = vector.extract_strided_slice %457 {offsets = [0, 256], sizes = [8, 128], strides = [1, 1]} : vector<8x384xf32> to vector<8x128xf32>
    %463 = arith.mulf %461, %443 : vector<8x128xf32>
    %464 = arith.mulf %460, %459 : vector<8x128xf32>
    %465 = arith.addf %463, %464 : vector<8x128xf32>
    %466 = math.tanh %465 : vector<8x128xf32>
    %467 = arith.mulf %462, %466 : vector<8x128xf32>
    %c24_178 = arith.constant 24 : index
    %c0_179 = arith.constant 0 : index
    %468 = vector.load %arg10[%c24_178, %c0_179] : memref<64x128xf32, #tpu.memory_space<vmem>>, vector<8x128xf32>
    tpu.vector_store %arg10[%c24_178, %c0_179], %467 {strides = array<i32>} : memref<64x128xf32, #tpu.memory_space<vmem>>, vector<8x128xf32>,
    %c32_180 = arith.constant 32 : index
    %c0_181 = arith.constant 0 : index
    %469 = vector.load %arg11[%c32_180, %c0_181] : memref<64x512xf32, #tpu.memory_space<vmem>>, vector<8x512xf32>
    %cst_182 = arith.constant dense<0.000000e+00> : vector<8x512xf32>
    %470 = tpu.matmul %467, %378, %cst_182 {dimension_numbers = #tpu.dot_dimension_numbers<[1], [0], [0], [1], [0, 0, 1, 1], [], []>} : vector<8x128xf32>, vector<128x512xf32>, vector<8x512xf32> -> vector<8x512xf32>
    %471 = arith.addf %469, %470 : vector<8x512xf32>
    %472 = vector.extract_strided_slice %471 {offsets = [0, 0], sizes = [8, 384], strides = [1, 1]} : vector<8x512xf32> to vector<8x384xf32>
    %cst_183 = arith.constant 5.000000e-01 : f32
    %473 = vector.broadcast %cst_183 : f32 to vector<8x384xf32>
    %474 = arith.mulf %473, %472 : vector<8x384xf32>
    %475 = math.tanh %474 : vector<8x384xf32>
    %cst_184 = arith.constant 5.000000e-01 : f32
    %476 = vector.broadcast %cst_184 : f32 to vector<8x384xf32>
    %477 = arith.mulf %476, %475 : vector<8x384xf32>
    %cst_185 = arith.constant 5.000000e-01 : f32
    %478 = vector.broadcast %cst_185 : f32 to vector<8x384xf32>
    %479 = arith.addf %477, %478 : vector<8x384xf32>
    %480 = vector.extract_strided_slice %471 {offsets = [0, 384], sizes = [8, 128], strides = [1, 1]} : vector<8x512xf32> to vector<8x128xf32>
    %481 = math.tanh %480 : vector<8x128xf32>
    %482 = vector.extract_strided_slice %479 {offsets = [0, 0], sizes = [8, 128], strides = [1, 1]} : vector<8x384xf32> to vector<8x128xf32>
    %483 = vector.extract_strided_slice %479 {offsets = [0, 128], sizes = [8, 128], strides = [1, 1]} : vector<8x384xf32> to vector<8x128xf32>
    %484 = vector.extract_strided_slice %479 {offsets = [0, 256], sizes = [8, 128], strides = [1, 1]} : vector<8x384xf32> to vector<8x128xf32>
    %485 = arith.mulf %483, %465 : vector<8x128xf32>
    %486 = arith.mulf %482, %481 : vector<8x128xf32>
    %487 = arith.addf %485, %486 : vector<8x128xf32>
    %488 = math.tanh %487 : vector<8x128xf32>
    %489 = arith.mulf %484, %488 : vector<8x128xf32>
    %c32_186 = arith.constant 32 : index
    %c0_187 = arith.constant 0 : index
    %490 = vector.load %arg10[%c32_186, %c0_187] : memref<64x128xf32, #tpu.memory_space<vmem>>, vector<8x128xf32>
    tpu.vector_store %arg10[%c32_186, %c0_187], %489 {strides = array<i32>} : memref<64x128xf32, #tpu.memory_space<vmem>>, vector<8x128xf32>,
    %c40_188 = arith.constant 40 : index
    %c0_189 = arith.constant 0 : index
    %491 = vector.load %arg11[%c40_188, %c0_189] : memref<64x512xf32, #tpu.memory_space<vmem>>, vector<8x512xf32>
    %cst_190 = arith.constant dense<0.000000e+00> : vector<8x512xf32>
    %492 = tpu.matmul %489, %378, %cst_190 {dimension_numbers = #tpu.dot_dimension_numbers<[1], [0], [0], [1], [0, 0, 1, 1], [], []>} : vector<8x128xf32>, vector<128x512xf32>, vector<8x512xf32> -> vector<8x512xf32>
    %493 = arith.addf %491, %492 : vector<8x512xf32>
    %494 = vector.extract_strided_slice %493 {offsets = [0, 0], sizes = [8, 384], strides = [1, 1]} : vector<8x512xf32> to vector<8x384xf32>
    %cst_191 = arith.constant 5.000000e-01 : f32
    %495 = vector.broadcast %cst_191 : f32 to vector<8x384xf32>
    %496 = arith.mulf %495, %494 : vector<8x384xf32>
    %497 = math.tanh %496 : vector<8x384xf32>
    %cst_192 = arith.constant 5.000000e-01 : f32
    %498 = vector.broadcast %cst_192 : f32 to vector<8x384xf32>
    %499 = arith.mulf %498, %497 : vector<8x384xf32>
    %cst_193 = arith.constant 5.000000e-01 : f32
    %500 = vector.broadcast %cst_193 : f32 to vector<8x384xf32>
    %501 = arith.addf %499, %500 : vector<8x384xf32>
    %502 = vector.extract_strided_slice %493 {offsets = [0, 384], sizes = [8, 128], strides = [1, 1]} : vector<8x512xf32> to vector<8x128xf32>
    %503 = math.tanh %502 : vector<8x128xf32>
    %504 = vector.extract_strided_slice %501 {offsets = [0, 0], sizes = [8, 128], strides = [1, 1]} : vector<8x384xf32> to vector<8x128xf32>
    %505 = vector.extract_strided_slice %501 {offsets = [0, 128], sizes = [8, 128], strides = [1, 1]} : vector<8x384xf32> to vector<8x128xf32>
    %506 = vector.extract_strided_slice %501 {offsets = [0, 256], sizes = [8, 128], strides = [1, 1]} : vector<8x384xf32> to vector<8x128xf32>
    %507 = arith.mulf %505, %487 : vector<8x128xf32>
    %508 = arith.mulf %504, %503 : vector<8x128xf32>
    %509 = arith.addf %507, %508 : vector<8x128xf32>
    %510 = math.tanh %509 : vector<8x128xf32>
    %511 = arith.mulf %506, %510 : vector<8x128xf32>
    %c40_194 = arith.constant 40 : index
    %c0_195 = arith.constant 0 : index
    %512 = vector.load %arg10[%c40_194, %c0_195] : memref<64x128xf32, #tpu.memory_space<vmem>>, vector<8x128xf32>
    tpu.vector_store %arg10[%c40_194, %c0_195], %511 {strides = array<i32>} : memref<64x128xf32, #tpu.memory_space<vmem>>, vector<8x128xf32>,
    %c48_196 = arith.constant 48 : index
    %c0_197 = arith.constant 0 : index
    %513 = vector.load %arg11[%c48_196, %c0_197] : memref<64x512xf32, #tpu.memory_space<vmem>>, vector<8x512xf32>
    %cst_198 = arith.constant dense<0.000000e+00> : vector<8x512xf32>
    %514 = tpu.matmul %511, %378, %cst_198 {dimension_numbers = #tpu.dot_dimension_numbers<[1], [0], [0], [1], [0, 0, 1, 1], [], []>} : vector<8x128xf32>, vector<128x512xf32>, vector<8x512xf32> -> vector<8x512xf32>
    %515 = arith.addf %513, %514 : vector<8x512xf32>
    %516 = vector.extract_strided_slice %515 {offsets = [0, 0], sizes = [8, 384], strides = [1, 1]} : vector<8x512xf32> to vector<8x384xf32>
    %cst_199 = arith.constant 5.000000e-01 : f32
    %517 = vector.broadcast %cst_199 : f32 to vector<8x384xf32>
    %518 = arith.mulf %517, %516 : vector<8x384xf32>
    %519 = math.tanh %518 : vector<8x384xf32>
    %cst_200 = arith.constant 5.000000e-01 : f32
    %520 = vector.broadcast %cst_200 : f32 to vector<8x384xf32>
    %521 = arith.mulf %520, %519 : vector<8x384xf32>
    %cst_201 = arith.constant 5.000000e-01 : f32
    %522 = vector.broadcast %cst_201 : f32 to vector<8x384xf32>
    %523 = arith.addf %521, %522 : vector<8x384xf32>
    %524 = vector.extract_strided_slice %515 {offsets = [0, 384], sizes = [8, 128], strides = [1, 1]} : vector<8x512xf32> to vector<8x128xf32>
    %525 = math.tanh %524 : vector<8x128xf32>
    %526 = vector.extract_strided_slice %523 {offsets = [0, 0], sizes = [8, 128], strides = [1, 1]} : vector<8x384xf32> to vector<8x128xf32>
    %527 = vector.extract_strided_slice %523 {offsets = [0, 128], sizes = [8, 128], strides = [1, 1]} : vector<8x384xf32> to vector<8x128xf32>
    %528 = vector.extract_strided_slice %523 {offsets = [0, 256], sizes = [8, 128], strides = [1, 1]} : vector<8x384xf32> to vector<8x128xf32>
    %529 = arith.mulf %527, %509 : vector<8x128xf32>
    %530 = arith.mulf %526, %525 : vector<8x128xf32>
    %531 = arith.addf %529, %530 : vector<8x128xf32>
    %532 = math.tanh %531 : vector<8x128xf32>
    %533 = arith.mulf %528, %532 : vector<8x128xf32>
    %c48_202 = arith.constant 48 : index
    %c0_203 = arith.constant 0 : index
    %534 = vector.load %arg10[%c48_202, %c0_203] : memref<64x128xf32, #tpu.memory_space<vmem>>, vector<8x128xf32>
    tpu.vector_store %arg10[%c48_202, %c0_203], %533 {strides = array<i32>} : memref<64x128xf32, #tpu.memory_space<vmem>>, vector<8x128xf32>,
    %c56_204 = arith.constant 56 : index
    %c0_205 = arith.constant 0 : index
    %535 = vector.load %arg11[%c56_204, %c0_205] : memref<64x512xf32, #tpu.memory_space<vmem>>, vector<8x512xf32>
    %cst_206 = arith.constant dense<0.000000e+00> : vector<8x512xf32>
    %536 = tpu.matmul %533, %378, %cst_206 {dimension_numbers = #tpu.dot_dimension_numbers<[1], [0], [0], [1], [0, 0, 1, 1], [], []>} : vector<8x128xf32>, vector<128x512xf32>, vector<8x512xf32> -> vector<8x512xf32>
    %537 = arith.addf %535, %536 : vector<8x512xf32>
    %538 = vector.extract_strided_slice %537 {offsets = [0, 0], sizes = [8, 384], strides = [1, 1]} : vector<8x512xf32> to vector<8x384xf32>
    %cst_207 = arith.constant 5.000000e-01 : f32
    %539 = vector.broadcast %cst_207 : f32 to vector<8x384xf32>
    %540 = arith.mulf %539, %538 : vector<8x384xf32>
    %541 = math.tanh %540 : vector<8x384xf32>
    %cst_208 = arith.constant 5.000000e-01 : f32
    %542 = vector.broadcast %cst_208 : f32 to vector<8x384xf32>
    %543 = arith.mulf %542, %541 : vector<8x384xf32>
    %cst_209 = arith.constant 5.000000e-01 : f32
    %544 = vector.broadcast %cst_209 : f32 to vector<8x384xf32>
    %545 = arith.addf %543, %544 : vector<8x384xf32>
    %546 = vector.extract_strided_slice %537 {offsets = [0, 384], sizes = [8, 128], strides = [1, 1]} : vector<8x512xf32> to vector<8x128xf32>
    %547 = math.tanh %546 : vector<8x128xf32>
    %548 = vector.extract_strided_slice %545 {offsets = [0, 0], sizes = [8, 128], strides = [1, 1]} : vector<8x384xf32> to vector<8x128xf32>
    %549 = vector.extract_strided_slice %545 {offsets = [0, 128], sizes = [8, 128], strides = [1, 1]} : vector<8x384xf32> to vector<8x128xf32>
    %550 = vector.extract_strided_slice %545 {offsets = [0, 256], sizes = [8, 128], strides = [1, 1]} : vector<8x384xf32> to vector<8x128xf32>
    %551 = arith.mulf %549, %531 : vector<8x128xf32>
    %552 = arith.mulf %548, %547 : vector<8x128xf32>
    %553 = arith.addf %551, %552 : vector<8x128xf32>
    %554 = math.tanh %553 : vector<8x128xf32>
    %555 = arith.mulf %550, %554 : vector<8x128xf32>
    %c56_210 = arith.constant 56 : index
    %c0_211 = arith.constant 0 : index
    %556 = vector.load %arg10[%c56_210, %c0_211] : memref<64x128xf32, #tpu.memory_space<vmem>>, vector<8x128xf32>
    tpu.vector_store %arg10[%c56_210, %c0_211], %555 {strides = array<i32>} : memref<64x128xf32, #tpu.memory_space<vmem>>, vector<8x128xf32>,
    %c0_212 = arith.constant 0 : index
    %c0_213 = arith.constant 0 : index
    %557 = vector.load %arg10[%c0_212, %c0_213] : memref<64x128xf32, #tpu.memory_space<vmem>>, vector<64x128xf32>
    %c0_214 = arith.constant 0 : index
    %c0_215 = arith.constant 0 : index
    %558 = vector.load %arg7[%c0_214, %c0_215] : memref<128x128xf32, #tpu.memory_space<vmem>>, vector<128x128xf32>
    %cst_216 = arith.constant dense<0.000000e+00> : vector<64x128xf32>
    %559 = tpu.matmul %557, %558, %cst_216 {dimension_numbers = #tpu.dot_dimension_numbers<[1], [0], [0], [1], [0, 0, 1, 1], [], []>} : vector<64x128xf32>, vector<128x128xf32>, vector<64x128xf32> -> vector<64x128xf32>
    %c0_217 = arith.constant 0 : index
    %c0_218 = arith.constant 0 : index
    %560 = vector.load %arg8[%c0_217, %c0_218] : memref<1x128xf32, #tpu.memory_space<vmem>>, vector<1x128xf32>
    %561 = vector.broadcast %560 : vector<1x128xf32> to vector<64x128xf32>
    %562 = arith.addf %559, %561 : vector<64x128xf32>
    %563 = arith.negf %562 : vector<64x128xf32>
    %564 = math.exp %563 : vector<64x128xf32>
    %cst_219 = arith.constant 1.000000e+00 : f32
    %565 = vector.broadcast %cst_219 : f32 to vector<64x128xf32>
    %566 = arith.addf %565, %564 : vector<64x128xf32>
    %567 = arith.divf %565, %566 : vector<64x128xf32>
    %c0_220 = arith.constant 0 : index
    %c0_221 = arith.constant 0 : index
    %568 = vector.load %arg9[%c0_220, %c0_221] : memref<64x128xf32, #tpu.memory_space<vmem>>, vector<64x128xf32>
    tpu.vector_store %arg9[%c0_220, %c0_221], %567 {strides = array<i32>} : memref<64x128xf32, #tpu.memory_space<vmem>>, vector<64x128xf32>,
    return
  }
}

</mosaic_0001>

<llo_original>
// kernel: tpu_custom_call.1
$region0: #{tpu_custom_call.1}
  #allocation0 [shape = 'u32[]', space=smem, size = 0x4, offset = 0x4, fixed_abs, tag = 'smem constant byte address 0x4 - core index']
  #allocation1 [shape = 'u32[72,128]{1,0:T(1,128)}', space=vmem, size = 0x9000, scoped, tag = 'internal scratch']
  #allocation2 [shape = 'f32[64,128]{1,0:T(8,128)}', space=vmem, size = 0x8000, scoped, tag = 'scratch operand']
  #allocation3 [shape = 'f32[64,512]{1,0:T(8,128)}', space=vmem, size = 0x20000, scoped, tag = 'scratch operand']
  %s0 = inlined_call_operand.hbm [shape: f32[8,128], index: 0, kind: input, shape index: {}]
  %s1 = inlined_call_operand.hbm [shape: f32[2,128,512], index: 1, kind: input, shape index: {}]
  %s2 = inlined_call_operand.hbm [shape: f32[2,128,512], index: 2, kind: input, shape index: {}]
  %s3 = inlined_call_operand.hbm [shape: f32[2,1,512], index: 3, kind: input, shape index: {}]
  %s4 = inlined_call_operand.hbm [shape: f32[128,512], index: 4, kind: input, shape index: {}]
  %s5 = inlined_call_operand.hbm [shape: f32[128,512], index: 5, kind: input, shape index: {}]
  %s6 = inlined_call_operand.vmem [shape: f32[1,512], index: 6, kind: input, shape index: {}]
  %s7 = inlined_call_operand.hbm [shape: f32[128,128], index: 7, kind: input, shape index: {}]
  %s8 = inlined_call_operand.vmem [shape: f32[1,128], index: 8, kind: input, shape index: {}]
  %s9 = inlined_call_operand.hbm [shape: f32[64,128], index: 9, kind: output, shape index: {}]
  %s10 = sld [smem:[#allocation0]]
  $region74: #{tpu_custom_call.1} parent=0
    _
  %s12 = ssub.s32 1, %s10
  %s13 = scalar_select 0, %s12, %s10
  $region1: #{tpu_custom_call.1} parent=0
    #allocation4 [shape = 'u8[4096]{0}', space=vmem, size = 0x1000, scoped, tag = 'input window, operand 0, single buffered']
    #allocation5 [shape = 's32[1]{0}', space=sflag, size = 0x4, scoped, tag = 'scoped memory for tpu_custom_call.1']
    #allocation6 [shape = 's32[1]{0}', space=sflag, size = 0x4, scoped, tag = 'scoped memory for tpu_custom_call.1']
    #allocation7 [shape = 'u8[524288]{0}', space=vmem, size = 0x80000, scoped, tag = 'input window, operand 1, single buffered']
    #allocation8 [shape = 's32[1]{0}', space=sflag, size = 0x4, scoped, tag = 'scoped memory for tpu_custom_call.1']
    #allocation9 [shape = 'u8[524288]{0}', space=vmem, size = 0x80000, scoped, tag = 'input window, operand 2, single buffered']
    #allocation10 [shape = 'u8[4096]{0}', space=vmem, size = 0x1000, scoped, tag = 'input window, operand 3, single buffered']
    #allocation11 [shape = 's32[1]{0}', space=sflag, size = 0x4, scoped, tag = 'scoped memory for tpu_custom_call.1']
    #allocation12 [shape = 'u8[262144]{0}', space=vmem, size = 0x40000, scoped, tag = 'input window, operand 4, single buffered']
    #allocation13 [shape = 'u8[262144]{0}', space=vmem, size = 0x40000, scoped, tag = 'input window, operand 5, single buffered']
    #allocation14 [shape = 's32[1]{0}', space=sflag, size = 0x4, scoped, tag = 'scoped memory for tpu_custom_call.1']
    #allocation15 [shape = 'u8[65536]{0}', space=vmem, size = 0x10000, scoped, tag = 'input window, operand 7, single buffered']
    #allocation16 [shape = 'u8[32768]{0}', space=vmem, size = 0x8000, scoped, tag = 'output window, operand 0, single buffered']
    %14 = vsyncpa [#allocation5], 0
    %15 = vsyncpa [#allocation8], 0
    %16 = vsyncpa [#allocation11], 0
    %17 = vsyncpa [#allocation14], 0
    %18 = vsyncpa [#allocation6], 0
    // Predicated region
    $region2: #{tpu_custom_call.1} parent=1 // pred_check
      _
    $region3: #{tpu_custom_call.1} parent=1 // pred_check_branch
      %20 = sbr.rel (0) target = $region5
    $region4: #{tpu_custom_call.1} parent=1 // pred_region
      %22 = vsyncadd [#allocation5], 0
      %s24 = sshll.u32 %s0, 4
      %s25 = int_to_ptr.hbm [resolvable:$true] %s24
      %s26 = sshll.u32 [#allocation4], 4
      %s27 = int_to_ptr.vmem [resolvable:$true] %s26
      %29 = dma.hbm_to_vmem [thread:$0]  %s25, 128, %s27, [#allocation5]
    $region5: #{tpu_custom_call.1} parent=1 // pred_fallthru
      _
    // Predicated region
    $region6: #{tpu_custom_call.1} parent=1 // pred_check
      _
    $region7: #{tpu_custom_call.1} parent=1 // pred_check_branch
      %31 = sbr.rel (0) target = $region9
    $region8: #{tpu_custom_call.1} parent=1 // pred_region
      %33 = vsyncadd [#allocation8], 0
      %s34 = sshll.u32 %s1, 4
      %s35 = int_to_ptr.hbm [resolvable:$true] %s34
      %s36 = sshll.u32 [#allocation7], 4
      %s37 = int_to_ptr.vmem [resolvable:$true] %s36
      %42 = dma.hbm_to_vmem [thread:$0]  %s35, 16384, %s37, [#allocation8], 512, 512, 32
    $region9: #{tpu_custom_call.1} parent=1 // pred_fallthru
      _
    // Predicated region
    $region10: #{tpu_custom_call.1} parent=1 // pred_check
      _
    $region11: #{tpu_custom_call.1} parent=1 // pred_check_branch
      %44 = sbr.rel (0) target = $region13
    $region12: #{tpu_custom_call.1} parent=1 // pred_region
      %46 = vsyncadd [#allocation8], 0
      %s47 = sshll.u32 %s2, 4
      %s48 = int_to_ptr.hbm [resolvable:$true] %s47
      %s49 = sshll.u32 [#allocation9], 4
      %s50 = int_to_ptr.vmem [resolvable:$true] %s49
      %55 = dma.hbm_to_vmem [thread:$0]  %s48, 16384, %s50, [#allocation8], 512, 512, 32
    $region13: #{tpu_custom_call.1} parent=1 // pred_fallthru
      _
    // Predicated region
    $region14: #{tpu_custom_call.1} parent=1 // pred_check
      _
    $region15: #{tpu_custom_call.1} parent=1 // pred_check_branch
      %57 = sbr.rel (0) target = $region17
    $region16: #{tpu_custom_call.1} parent=1 // pred_region
      %59 = vsyncadd [#allocation11], 0
      %s60 = sshll.u32 %s3, 4
      %s61 = int_to_ptr.hbm [resolvable:$true] %s60
      %s62 = sshll.u32 [#allocation10], 4
      %s63 = int_to_ptr.vmem [resolvable:$true] %s62
      %68 = dma.hbm_to_vmem [thread:$0]  %s61, 128, %s63, [#allocation11], 64, 64, 4
    $region17: #{tpu_custom_call.1} parent=1 // pred_fallthru
      _
    // Predicated region
    $region18: #{tpu_custom_call.1} parent=1 // pred_check
      _
    $region19: #{tpu_custom_call.1} parent=1 // pred_check_branch
      %70 = sbr.rel (0) target = $region21
    $region20: #{tpu_custom_call.1} parent=1 // pred_region
      %72 = vsyncadd [#allocation11], 0
      %s73 = sshll.u32 %s4, 4
      %s74 = int_to_ptr.hbm [resolvable:$true] %s73
      %s75 = sshll.u32 [#allocation12], 4
      %s76 = int_to_ptr.vmem [resolvable:$true] %s75
      %81 = dma.hbm_to_vmem [thread:$0]  %s74, 8192, %s76, [#allocation11], 512, 512, 32
    $region21: #{tpu_custom_call.1} parent=1 // pred_fallthru
      _
    // Predicated region
    $region22: #{tpu_custom_call.1} parent=1 // pred_check
      _
    $region23: #{tpu_custom_call.1} parent=1 // pred_check_branch
      %83 = sbr.rel (0) target = $region25
    $region24: #{tpu_custom_call.1} parent=1 // pred_region
      %85 = vsyncadd [#allocation14], 0
      %s86 = sshll.u32 %s5, 4
      %s87 = int_to_ptr.hbm [resolvable:$true] %s86
      %s88 = sshll.u32 [#allocation13], 4
      %s89 = int_to_ptr.vmem [resolvable:$true] %s88
      %94 = dma.hbm_to_vmem [thread:$0]  %s87, 8192, %s89, [#allocation14], 512, 512, 32
    $region25: #{tpu_custom_call.1} parent=1 // pred_fallthru
      _
    // Predicated region
    $region26: #{tpu_custom_call.1} parent=1 // pred_check
      _
    $region27: #{tpu_custom_call.1} parent=1 // pred_check_branch
      %96 = sbr.rel (0) target = $region29
    $region28: #{tpu_custom_call.1} parent=1 // pred_region
      _
    $region29: #{tpu_custom_call.1} parent=1 // pred_fallthru
      _
    // Predicated region
    $region30: #{tpu_custom_call.1} parent=1 // pred_check
      _
    $region31: #{tpu_custom_call.1} parent=1 // pred_check_branch
      %98 = sbr.rel (0) target = $region33
    $region32: #{tpu_custom_call.1} parent=1 // pred_region
      %100 = vsyncadd [#allocation14], 0
      %s101 = sshll.u32 %s7, 4
      %s102 = int_to_ptr.hbm [resolvable:$true] %s101
      %s103 = sshll.u32 [#allocation15], 4
      %s104 = int_to_ptr.vmem [resolvable:$true] %s103
      %109 = dma.hbm_to_vmem [thread:$0]  %s102, 2048, %s104, [#allocation14], 128, 128, 8
    $region33: #{tpu_custom_call.1} parent=1 // pred_fallthru
      _
    // Predicated region
    $region34: #{tpu_custom_call.1} parent=1 // pred_check
      _
    $region35: #{tpu_custom_call.1} parent=1 // pred_check_branch
      %111 = sbr.rel (0) target = $region37
    $region36: #{tpu_custom_call.1} parent=1 // pred_region
      _
    $region37: #{tpu_custom_call.1} parent=1 // pred_fallthru
      _
    // Predicated region
    $region38: #{tpu_custom_call.1} parent=1 // pred_check
      _
    $region39: #{tpu_custom_call.1} parent=1 // pred_check_branch
      %113 = sbr.rel (0) target = $region41
    $region40: #{tpu_custom_call.1} parent=1 // pred_region
      %115 = dma.done [#allocation5], 128
    $region41: #{tpu_custom_call.1} parent=1 // pred_fallthru
      _
    // Predicated region
    $region42: #{tpu_custom_call.1} parent=1 // pred_check
      _
    $region43: #{tpu_custom_call.1} parent=1 // pred_check_branch
      %117 = sbr.rel (0) target = $region45
    $region44: #{tpu_custom_call.1} parent=1 // pred_region
      %119 = dma.done [#allocation8], 16384
    $region45: #{tpu_custom_call.1} parent=1 // pred_fallthru
      _
    // Predicated region
    $region46: #{tpu_custom_call.1} parent=1 // pred_check
      _
    $region47: #{tpu_custom_call.1} parent=1 // pred_check_branch
      %121 = sbr.rel (0) target = $region49
    $region48: #{tpu_custom_call.1} parent=1 // pred_region
      %123 = dma.done [#allocation8], 16384
    $region49: #{tpu_custom_call.1} parent=1 // pred_fallthru
      _
    // Predicated region
    $region50: #{tpu_custom_call.1} parent=1 // pred_check
      _
    $region51: #{tpu_custom_call.1} parent=1 // pred_check_branch
      %125 = sbr.rel (0) target = $region53
    $region52: #{tpu_custom_call.1} parent=1 // pred_region
      %127 = dma.done [#allocation11], 128
    $region53: #{tpu_custom_call.1} parent=1 // pred_fallthru
      _
    // Predicated region
    $region54: #{tpu_custom_call.1} parent=1 // pred_check
      _
    $region55: #{tpu_custom_call.1} parent=1 // pred_check_branch
      %129 = sbr.rel (0) target = $region57
    $region56: #{tpu_custom_call.1} parent=1 // pred_region
      %131 = dma.done [#allocation11], 8192
    $region57: #{tpu_custom_call.1} parent=1 // pred_fallthru
      _
    // Predicated region
    $region58: #{tpu_custom_call.1} parent=1 // pred_check
      _
    $region59: #{tpu_custom_call.1} parent=1 // pred_check_branch
      %133 = sbr.rel (0) target = $region61
    $region60: #{tpu_custom_call.1} parent=1 // pred_region
      %135 = dma.done [#allocation14], 8192
    $region61: #{tpu_custom_call.1} parent=1 // pred_fallthru
      _
    // Predicated region
    $region62: #{tpu_custom_call.1} parent=1 // pred_check
      _
    $region63: #{tpu_custom_call.1} parent=1 // pred_check_branch
      %137 = sbr.rel (0) target = $region65
    $region64: #{tpu_custom_call.1} parent=1 // pred_region
      %139 = dma.done [#allocation14], 2048
    $region65: #{tpu_custom_call.1} parent=1 // pred_fallthru
      _
    %140 = vst [vmem:[#allocation2] sm:$0xff] 0.0
    %141 = vst [vmem:[#allocation2 + $0x8] sm:$0xff] 0.0
    %142 = vst [vmem:[#allocation2 + $0x10] sm:$0xff] 0.0
    %143 = vst [vmem:[#allocation2 + $0x18] sm:$0xff] 0.0
    %144 = vst [vmem:[#allocation2 + $0x20] sm:$0xff] 0.0
    %145 = vst [vmem:[#allocation2 + $0x28] sm:$0xff] 0.0
    %146 = vst [vmem:[#allocation2 + $0x30] sm:$0xff] 0.0
    %147 = vst [vmem:[#allocation2 + $0x38] sm:$0xff] 0.0
    %v148 = vld [vmem:[#allocation4] sm:$0xff]
    %v149 = vld [vmem:[#allocation7] sm:$0xff]
    %v150 = vld [vmem:[#allocation7 + $0x8] sm:$0xff]
    %v151 = vld [vmem:[#allocation7 + $0x10] sm:$0xff]
    %v152 = vld [vmem:[#allocation7 + $0x18] sm:$0xff]
    %v153 = vld [vmem:[#allocation7 + $0x20] sm:$0xff]
    %v154 = vld [vmem:[#allocation7 + $0x28] sm:$0xff]
    %v155 = vld [vmem:[#allocation7 + $0x30] sm:$0xff]
    %v156 = vld [vmem:[#allocation7 + $0x38] sm:$0xff]
    %v157 = vld [vmem:[#allocation7 + $0x40] sm:$0xff]
    %v158 = vld [vmem:[#allocation7 + $0x48] sm:$0xff]
    %v159 = vld [vmem:[#allocation7 + $0x50] sm:$0xff]
    %v160 = vld [vmem:[#allocation7 + $0x58] sm:$0xff]
    %v161 = vld [vmem:[#allocation7 + $0x60] sm:$0xff]
    %v162 = vld [vmem:[#allocation7 + $0x68] sm:$0xff]
    %v163 = vld [vmem:[#allocation7 + $0x70] sm:$0xff]
    %v164 = vld [vmem:[#allocation7 + $0x78] sm:$0xff]
    %v165 = vld [vmem:[#allocation7 + $0x80] sm:$0xff]
    %v166 = vld [vmem:[#allocation7 + $0x88] sm:$0xff]
    %v167 = vld [vmem:[#allocation7 + $0x90] sm:$0xff]
    %v168 = vld [vmem:[#allocation7 + $0x98] sm:$0xff]
    %v169 = vld [vmem:[#allocation7 + $0xa0] sm:$0xff]
    %v170 = vld [vmem:[#allocation7 + $0xa8] sm:$0xff]
    %v171 = vld [vmem:[#allocation7 + $0xb0] sm:$0xff]
    %v172 = vld [vmem:[#allocation7 + $0xb8] sm:$0xff]
    %v173 = vld [vmem:[#allocation7 + $0xc0] sm:$0xff]
    %v174 = vld [vmem:[#allocation7 + $0xc8] sm:$0xff]
    %v175 = vld [vmem:[#allocation7 + $0xd0] sm:$0xff]
    %v176 = vld [vmem:[#allocation7 + $0xd8] sm:$0xff]
    %v177 = vld [vmem:[#allocation7 + $0xe0] sm:$0xff]
    %v178 = vld [vmem:[#allocation7 + $0xe8] sm:$0xff]
    %v179 = vld [vmem:[#allocation7 + $0xf0] sm:$0xff]
    %v180 = vld [vmem:[#allocation7 + $0xf8] sm:$0xff]
    %v181 = vld [vmem:[#allocation7 + $0x100] sm:$0xff]
    %v182 = vld [vmem:[#allocation7 + $0x108] sm:$0xff]
    %v183 = vld [vmem:[#allocation7 + $0x110] sm:$0xff]
    %v184 = vld [vmem:[#allocation7 + $0x118] sm:$0xff]
    %v185 = vld [vmem:[#allocation7 + $0x120] sm:$0xff]
    %v186 = vld [vmem:[#allocation7 + $0x128] sm:$0xff]
    %v187 = vld [vmem:[#allocation7 + $0x130] sm:$0xff]
    %v188 = vld [vmem:[#allocation7 + $0x138] sm:$0xff]
    %v189 = vld [vmem:[#allocation7 + $0x140] sm:$0xff]
    %v190 = vld [vmem:[#allocation7 + $0x148] sm:$0xff]
    %v191 = vld [vmem:[#allocation7 + $0x150] sm:$0xff]
    %v192 = vld [vmem:[#allocation7 + $0x158] sm:$0xff]
    %v193 = vld [vmem:[#allocation7 + $0x160] sm:$0xff]
    %v194 = vld [vmem:[#allocation7 + $0x168] sm:$0xff]
    %v195 = vld [vmem:[#allocation7 + $0x170] sm:$0xff]
    %v196 = vld [vmem:[#allocation7 + $0x178] sm:$0xff]
    %v197 = vld [vmem:[#allocation7 + $0x180] sm:$0xff]
    %v198 = vld [vmem:[#allocation7 + $0x188] sm:$0xff]
    %v199 = vld [vmem:[#allocation7 + $0x190] sm:$0xff]
    %v200 = vld [vmem:[#allocation7 + $0x198] sm:$0xff]
    %v201 = vld [vmem:[#allocation7 + $0x1a0] sm:$0xff]
    %v202 = vld [vmem:[#allocation7 + $0x1a8] sm:$0xff]
    %v203 = vld [vmem:[#allocation7 + $0x1b0] sm:$0xff]
    %v204 = vld [vmem:[#allocation7 + $0x1b8] sm:$0xff]
    %v205 = vld [vmem:[#allocation7 + $0x1c0] sm:$0xff]
    %v206 = vld [vmem:[#allocation7 + $0x1c8] sm:$0xff]
    %v207 = vld [vmem:[#allocation7 + $0x1d0] sm:$0xff]
    %v208 = vld [vmem:[#allocation7 + $0x1d8] sm:$0xff]
    %v209 = vld [vmem:[#allocation7 + $0x1e0] sm:$0xff]
    %v210 = vld [vmem:[#allocation7 + $0x1e8] sm:$0xff]
    %v211 = vld [vmem:[#allocation7 + $0x1f0] sm:$0xff]
    %v212 = vld [vmem:[#allocation7 + $0x1f8] sm:$0xff]
    %v213 = vld [vmem:[#allocation10] sm:$0xf]
    %v215 = vperm.slane %v213, 0
    %v216 = vperm.slane %v213, 1
    %v217 = vperm.slane %v213, 2
    %v218 = vperm.slane %v213, 3
    %223 = vmatpush.msra.mxu0 %v209
    %224 = vmatpush.msra.mxu0 %v205
    %225 = vmatpush.msra.mxu0 %v201
    %226 = vmatpush.msra.mxu0 %v197
    %227 = vmatpush.msra.mxu0 %v193
    %228 = vmatpush.msra.mxu0 %v189
    %229 = vmatpush.msra.mxu0 %v185
    %230 = vmatpush.msra.mxu0 %v181
    %231 = vmatpush.msra.mxu0 %v177
    %232 = vmatpush.msra.mxu0 %v173
    %233 = vmatpush.msra.mxu0 %v169
    %234 = vmatpush.msra.mxu0 %v165
    %235 = vmatpush.msra.mxu0 %v161
    %236 = vmatpush.msra.mxu0 %v157
    %237 = vmatpush.msra.mxu0 %v153
    %238 = vmatpush.msra.mxu0 %v149
    %239 = vmatmul.f32.gmra.mxu0 %v148
    %v240 = vpop.f32.mrf.mxu0
    %v241 = vadd.f32 %v215, %v240
    %242 = vdwg.mxu0
    %243 = vmatpush.msra.mxu0 %v210
    %244 = vmatpush.msra.mxu0 %v206
    %245 = vmatpush.msra.mxu0 %v202
    %246 = vmatpush.msra.mxu0 %v198
    %247 = vmatpush.msra.mxu0 %v194
    %248 = vmatpush.msra.mxu0 %v190
    %249 = vmatpush.msra.mxu0 %v186
    %250 = vmatpush.msra.mxu0 %v182
    %251 = vmatpush.msra.mxu0 %v178
    %252 = vmatpush.msra.mxu0 %v174
    %253 = vmatpush.msra.mxu0 %v170
    %254 = vmatpush.msra.mxu0 %v166
    %255 = vmatpush.msra.mxu0 %v162
    %256 = vmatpush.msra.mxu0 %v158
    %257 = vmatpush.msra.mxu0 %v154
    %258 = vmatpush.msra.mxu0 %v150
    %259 = vmatmul.f32.gmra.mxu0 %v148
    %v260 = vpop.f32.mrf.mxu0
    %v261 = vadd.f32 %v216, %v260
    %262 = vdwg.mxu0
    %263 = vmatpush.msra.mxu0 %v211
    %264 = vmatpush.msra.mxu0 %v207
    %265 = vmatpush.msra.mxu0 %v203
    %266 = vmatpush.msra.mxu0 %v199
    %267 = vmatpush.msra.mxu0 %v195
    %268 = vmatpush.msra.mxu0 %v191
    %269 = vmatpush.msra.mxu0 %v187
    %270 = vmatpush.msra.mxu0 %v183
    %271 = vmatpush.msra.mxu0 %v179
    %272 = vmatpush.msra.mxu0 %v175
    %273 = vmatpush.msra.mxu0 %v171
    %274 = vmatpush.msra.mxu0 %v167
    %275 = vmatpush.msra.mxu0 %v163
    %276 = vmatpush.msra.mxu0 %v159
    %277 = vmatpush.msra.mxu0 %v155
    %278 = vmatpush.msra.mxu0 %v151
    %279 = vmatmul.f32.gmra.mxu0 %v148
    %v280 = vpop.f32.mrf.mxu0
    %v281 = vadd.f32 %v217, %v280
    %282 = vdwg.mxu0
    %283 = vmatpush.msra.mxu0 %v212
    %284 = vmatpush.msra.mxu0 %v208
    %285 = vmatpush.msra.mxu0 %v204
    %286 = vmatpush.msra.mxu0 %v200
    %287 = vmatpush.msra.mxu0 %v196
    %288 = vmatpush.msra.mxu0 %v192
    %289 = vmatpush.msra.mxu0 %v188
    %290 = vmatpush.msra.mxu0 %v184
    %291 = vmatpush.msra.mxu0 %v180
    %292 = vmatpush.msra.mxu0 %v176
    %293 = vmatpush.msra.mxu0 %v172
    %294 = vmatpush.msra.mxu0 %v168
    %295 = vmatpush.msra.mxu0 %v164
    %296 = vmatpush.msra.mxu0 %v160
    %297 = vmatpush.msra.mxu0 %v156
    %298 = vmatpush.msra.mxu0 %v152
    %299 = vmatmul.f32.gmra.mxu0 %v148
    %v300 = vpop.f32.mrf.mxu0
    %v301 = vadd.f32 %v218, %v300
    %302 = vdwg.mxu0
    %v303 = vld [vmem:[#allocation9] sm:$0xff]
    %v304 = vld [vmem:[#allocation9 + $0x8] sm:$0xff]
    %v305 = vld [vmem:[#allocation9 + $0x10] sm:$0xff]
    %v306 = vld [vmem:[#allocation9 + $0x18] sm:$0xff]
    %v307 = vld [vmem:[#allocation9 + $0x20] sm:$0xff]
    %v308 = vld [vmem:[#allocation9 + $0x28] sm:$0xff]
    %v309 = vld [vmem:[#allocation9 + $0x30] sm:$0xff]
    %v310 = vld [vmem:[#allocation9 + $0x38] sm:$0xff]
    %v311 = vld [vmem:[#allocation9 + $0x40] sm:$0xff]
    %v312 = vld [vmem:[#allocation9 + $0x48] sm:$0xff]
    %v313 = vld [vmem:[#allocation9 + $0x50] sm:$0xff]
    %v314 = vld [vmem:[#allocation9 + $0x58] sm:$0xff]
    %v315 = vld [vmem:[#allocation9 + $0x60] sm:$0xff]
    %v316 = vld [vmem:[#allocation9 + $0x68] sm:$0xff]
    %v317 = vld [vmem:[#allocation9 + $0x70] sm:$0xff]
    %v318 = vld [vmem:[#allocation9 + $0x78] sm:$0xff]
    %v319 = vld [vmem:[#allocation9 + $0x80] sm:$0xff]
    %v320 = vld [vmem:[#allocation9 + $0x88] sm:$0xff]
    %v321 = vld [vmem:[#allocation9 + $0x90] sm:$0xff]
    %v322 = vld [vmem:[#allocation9 + $0x98] sm:$0xff]
    %v323 = vld [vmem:[#allocation9 + $0xa0] sm:$0xff]
    %v324 = vld [vmem:[#allocation9 + $0xa8] sm:$0xff]
    %v325 = vld [vmem:[#allocation9 + $0xb0] sm:$0xff]
    %v326 = vld [vmem:[#allocation9 + $0xb8] sm:$0xff]
    %v327 = vld [vmem:[#allocation9 + $0xc0] sm:$0xff]
    %v328 = vld [vmem:[#allocation9 + $0xc8] sm:$0xff]
    %v329 = vld [vmem:[#allocation9 + $0xd0] sm:$0xff]
    %v330 = vld [vmem:[#allocation9 + $0xd8] sm:$0xff]
    %v331 = vld [vmem:[#allocation9 + $0xe0] sm:$0xff]
    %v332 = vld [vmem:[#allocation9 + $0xe8] sm:$0xff]
    %v333 = vld [vmem:[#allocation9 + $0xf0] sm:$0xff]
    %v334 = vld [vmem:[#allocation9 + $0xf8] sm:$0xff]
    %v335 = vld [vmem:[#allocation9 + $0x100] sm:$0xff]
    %v336 = vld [vmem:[#allocation9 + $0x108] sm:$0xff]
    %v337 = vld [vmem:[#allocation9 + $0x110] sm:$0xff]
    %v338 = vld [vmem:[#allocation9 + $0x118] sm:$0xff]
    %v339 = vld [vmem:[#allocation9 + $0x120] sm:$0xff]
    %v340 = vld [vmem:[#allocation9 + $0x128] sm:$0xff]
    %v341 = vld [vmem:[#allocation9 + $0x130] sm:$0xff]
    %v342 = vld [vmem:[#allocation9 + $0x138] sm:$0xff]
    %v343 = vld [vmem:[#allocation9 + $0x140] sm:$0xff]
    %v344 = vld [vmem:[#allocation9 + $0x148] sm:$0xff]
    %v345 = vld [vmem:[#allocation9 + $0x150] sm:$0xff]
    %v346 = vld [vmem:[#allocation9 + $0x158] sm:$0xff]
    %v347 = vld [vmem:[#allocation9 + $0x160] sm:$0xff]
    %v348 = vld [vmem:[#allocation9 + $0x168] sm:$0xff]
    %v349 = vld [vmem:[#allocation9 + $0x170] sm:$0xff]
    %v350 = vld [vmem:[#allocation9 + $0x178] sm:$0xff]
    %v351 = vld [vmem:[#allocation9 + $0x180] sm:$0xff]
    %v352 = vld [vmem:[#allocation9 + $0x188] sm:$0xff]
    %v353 = vld [vmem:[#allocation9 + $0x190] sm:$0xff]
    %v354 = vld [vmem:[#allocation9 + $0x198] sm:$0xff]
    %v355 = vld [vmem:[#allocation9 + $0x1a0] sm:$0xff]
    %v356 = vld [vmem:[#allocation9 + $0x1a8] sm:$0xff]
    %v357 = vld [vmem:[#allocation9 + $0x1b0] sm:$0xff]
    %v358 = vld [vmem:[#allocation9 + $0x1b8] sm:$0xff]
    %v359 = vld [vmem:[#allocation9 + $0x1c0] sm:$0xff]
    %v360 = vld [vmem:[#allocation9 + $0x1c8] sm:$0xff]
    %v361 = vld [vmem:[#allocation9 + $0x1d0] sm:$0xff]
    %v362 = vld [vmem:[#allocation9 + $0x1d8] sm:$0xff]
    %v363 = vld [vmem:[#allocation9 + $0x1e0] sm:$0xff]
    %v364 = vld [vmem:[#allocation9 + $0x1e8] sm:$0xff]
    %v365 = vld [vmem:[#allocation9 + $0x1f0] sm:$0xff]
    %v366 = vld [vmem:[#allocation9 + $0x1f8] sm:$0xff]
    %367 = vmatpush.msra.mxu0 %v363
    %368 = vmatpush.msra.mxu0 %v359
    %369 = vmatpush.msra.mxu0 %v355
    %370 = vmatpush.msra.mxu0 %v351
    %371 = vmatpush.msra.mxu0 %v347
    %372 = vmatpush.msra.mxu0 %v343
    %373 = vmatpush.msra.mxu0 %v339
    %374 = vmatpush.msra.mxu0 %v335
    %375 = vmatpush.msra.mxu0 %v331
    %376 = vmatpush.msra.mxu0 %v327
    %377 = vmatpush.msra.mxu0 %v323
    %378 = vmatpush.msra.mxu0 %v319
    %379 = vmatpush.msra.mxu0 %v315
    %380 = vmatpush.msra.mxu0 %v311
    %381 = vmatpush.msra.mxu0 %v307
    %382 = vmatpush.msra.mxu0 %v303
    %383 = vmatmul.f32.gmra.mxu0 0.0
    %v384 = vpop.f32.mrf.mxu0
    %v385 = vadd.f32 0.0, %v384
    %386 = vdwg.mxu0
    %387 = vmatpush.msra.mxu0 %v364
    %388 = vmatpush.msra.mxu0 %v360
    %389 = vmatpush.msra.mxu0 %v356
    %390 = vmatpush.msra.mxu0 %v352
    %391 = vmatpush.msra.mxu0 %v348
    %392 = vmatpush.msra.mxu0 %v344
    %393 = vmatpush.msra.mxu0 %v340
    %394 = vmatpush.msra.mxu0 %v336
    %395 = vmatpush.msra.mxu0 %v332
    %396 = vmatpush.msra.mxu0 %v328
    %397 = vmatpush.msra.mxu0 %v324
    %398 = vmatpush.msra.mxu0 %v320
    %399 = vmatpush.msra.mxu0 %v316
    %400 = vmatpush.msra.mxu0 %v312
    %401 = vmatpush.msra.mxu0 %v308
    %402 = vmatpush.msra.mxu0 %v304
    %403 = vmatmul.f32.gmra.mxu0 0.0
    %v404 = vpop.f32.mrf.mxu0
    %v405 = vadd.f32 0.0, %v404
    %406 = vdwg.mxu0
    %407 = vmatpush.msra.mxu0 %v365
    %408 = vmatpush.msra.mxu0 %v361
    %409 = vmatpush.msra.mxu0 %v357
    %410 = vmatpush.msra.mxu0 %v353
    %411 = vmatpush.msra.mxu0 %v349
    %412 = vmatpush.msra.mxu0 %v345
    %413 = vmatpush.msra.mxu0 %v341
    %414 = vmatpush.msra.mxu0 %v337
    %415 = vmatpush.msra.mxu0 %v333
    %416 = vmatpush.msra.mxu0 %v329
    %417 = vmatpush.msra.mxu0 %v325
    %418 = vmatpush.msra.mxu0 %v321
    %419 = vmatpush.msra.mxu0 %v317
    %420 = vmatpush.msra.mxu0 %v313
    %421 = vmatpush.msra.mxu0 %v309
    %422 = vmatpush.msra.mxu0 %v305
    %423 = vmatmul.f32.gmra.mxu0 0.0
    %v424 = vpop.f32.mrf.mxu0
    %v425 = vadd.f32 0.0, %v424
    %426 = vdwg.mxu0
    %427 = vmatpush.msra.mxu0 %v366
    %428 = vmatpush.msra.mxu0 %v362
    %429 = vmatpush.msra.mxu0 %v358
    %430 = vmatpush.msra.mxu0 %v354
    %431 = vmatpush.msra.mxu0 %v350
    %432 = vmatpush.msra.mxu0 %v346
    %433 = vmatpush.msra.mxu0 %v342
    %434 = vmatpush.msra.mxu0 %v338
    %435 = vmatpush.msra.mxu0 %v334
    %436 = vmatpush.msra.mxu0 %v330
    %437 = vmatpush.msra.mxu0 %v326
    %438 = vmatpush.msra.mxu0 %v322
    %439 = vmatpush.msra.mxu0 %v318
    %440 = vmatpush.msra.mxu0 %v314
    %441 = vmatpush.msra.mxu0 %v310
    %442 = vmatpush.msra.mxu0 %v306
    %443 = vmatmul.f32.gmra.mxu0 0.0
    %v444 = vpop.f32.mrf.mxu0
    %v445 = vadd.f32 0.0, %v444
    %446 = vdwg.mxu0
    %v447 = vadd.f32 %v241, %v385
    %v448 = vadd.f32 %v261, %v405
    %v449 = vadd.f32 %v281, %v425
    %v450 = vadd.f32 %v301, %v445
    %v451 = vmul.f32 %v447, 0.5
    %v452 = vmul.f32 %v448, 0.5
    %v453 = vmul.f32 %v449, 0.5
    %v454 = vtanh.pop %v451
    %v455 = vtanh.pop %v452
    %v456 = vtanh.pop %v453
    %v457 = vmul.f32 %v454, 0.5
    %v458 = vmul.f32 %v455, 0.5
    %v459 = vmul.f32 %v456, 0.5
    %v460 = vadd.f32 %v457, 0.5
    %v461 = vadd.f32 %v458, 0.5
    %v462 = vadd.f32 %v459, 0.5
    %v463 = vtanh.pop %v450
    %v464 = vmul.f32 %v461, 0.0
    %v465 = vmul.f32 %v460, %v463
    %v466 = vadd.f32 %v464, %v465
    %v467 = vtanh.pop %v466
    %v468 = vmul.f32 %v462, %v467
    %469 = vst [vmem:[#allocation2] sm:$0xff] %v468
    %470 = vmatpush.msra.mxu0 %v363
    %471 = vmatpush.msra.mxu0 %v359
    %472 = vmatpush.msra.mxu0 %v355
    %473 = vmatpush.msra.mxu0 %v351
    %474 = vmatpush.msra.mxu0 %v347
    %475 = vmatpush.msra.mxu0 %v343
    %476 = vmatpush.msra.mxu0 %v339
    %477 = vmatpush.msra.mxu0 %v335
    %478 = vmatpush.msra.mxu0 %v331
    %479 = vmatpush.msra.mxu0 %v327
    %480 = vmatpush.msra.mxu0 %v323
    %481 = vmatpush.msra.mxu0 %v319
    %482 = vmatpush.msra.mxu0 %v315
    %483 = vmatpush.msra.mxu0 %v311
    %484 = vmatpush.msra.mxu0 %v307
    %485 = vmatpush.msra.mxu0 %v303
    %486 = vmatmul.f32.gmra.mxu0 %v468
    %v487 = vpop.f32.mrf.mxu0
    %v488 = vadd.f32 0.0, %v487
    %489 = vdwg.mxu0
    %490 = vmatpush.msra.mxu0 %v364
    %491 = vmatpush.msra.mxu0 %v360
    %492 = vmatpush.msra.mxu0 %v356
    %493 = vmatpush.msra.mxu0 %v352
    %494 = vmatpush.msra.mxu0 %v348
    %495 = vmatpush.msra.mxu0 %v344
    %496 = vmatpush.msra.mxu0 %v340
    %497 = vmatpush.msra.mxu0 %v336
    %498 = vmatpush.msra.mxu0 %v332
    %499 = vmatpush.msra.mxu0 %v328
    %500 = vmatpush.msra.mxu0 %v324
    %501 = vmatpush.msra.mxu0 %v320
    %502 = vmatpush.msra.mxu0 %v316
    %503 = vmatpush.msra.mxu0 %v312
    %504 = vmatpush.msra.mxu0 %v308
    %505 = vmatpush.msra.mxu0 %v304
    %506 = vmatmul.f32.gmra.mxu0 %v468
    %v507 = vpop.f32.mrf.mxu0
    %v508 = vadd.f32 0.0, %v507
    %509 = vdwg.mxu0
    %510 = vmatpush.msra.mxu0 %v365
    %511 = vmatpush.msra.mxu0 %v361
    %512 = vmatpush.msra.mxu0 %v357
    %513 = vmatpush.msra.mxu0 %v353
    %514 = vmatpush.msra.mxu0 %v349
    %515 = vmatpush.msra.mxu0 %v345
    %516 = vmatpush.msra.mxu0 %v341
    %517 = vmatpush.msra.mxu0 %v337
    %518 = vmatpush.msra.mxu0 %v333
    %519 = vmatpush.msra.mxu0 %v329
    %520 = vmatpush.msra.mxu0 %v325
    %521 = vmatpush.msra.mxu0 %v321
    %522 = vmatpush.msra.mxu0 %v317
    %523 = vmatpush.msra.mxu0 %v313
    %524 = vmatpush.msra.mxu0 %v309
    %525 = vmatpush.msra.mxu0 %v305
    %526 = vmatmul.f32.gmra.mxu0 %v468
    %v527 = vpop.f32.mrf.mxu0
    %v528 = vadd.f32 0.0, %v527
    %529 = vdwg.mxu0
    %530 = vmatpush.msra.mxu0 %v366
    %531 = vmatpush.msra.mxu0 %v362
    %532 = vmatpush.msra.mxu0 %v358
    %533 = vmatpush.msra.mxu0 %v354
    %534 = vmatpush.msra.mxu0 %v350
    %535 = vmatpush.msra.mxu0 %v346
    %536 = vmatpush.msra.mxu0 %v342
    %537 = vmatpush.msra.mxu0 %v338
    %538 = vmatpush.msra.mxu0 %v334
    %539 = vmatpush.msra.mxu0 %v330
    %540 = vmatpush.msra.mxu0 %v326
    %541 = vmatpush.msra.mxu0 %v322
    %542 = vmatpush.msra.mxu0 %v318
    %543 = vmatpush.msra.mxu0 %v314
    %544 = vmatpush.msra.mxu0 %v310
    %545 = vmatpush.msra.mxu0 %v306
    %546 = vmatmul.f32.gmra.mxu0 %v468
    %v547 = vpop.f32.mrf.mxu0
    %v548 = vadd.f32 0.0, %v547
    %549 = vdwg.mxu0
    %v550 = vadd.f32 %v241, %v488
    %v551 = vadd.f32 %v261, %v508
    %v552 = vadd.f32 %v281, %v528
    %v553 = vadd.f32 %v301, %v548
    %v554 = vmul.f32 %v550, 0.5
    %v555 = vmul.f32 %v551, 0.5
    %v556 = vmul.f32 %v552, 0.5
    %v557 = vtanh.pop %v554
    %v558 = vtanh.pop %v555
    %v559 = vtanh.pop %v556
    %v560 = vmul.f32 %v557, 0.5
    %v561 = vmul.f32 %v558, 0.5
    %v562 = vmul.f32 %v559, 0.5
    %v563 = vadd.f32 %v560, 0.5
    %v564 = vadd.f32 %v561, 0.5
    %v565 = vadd.f32 %v562, 0.5
    %v566 = vtanh.pop %v553
    %v567 = vmul.f32 %v564, %v466
    %v568 = vmul.f32 %v563, %v566
    %v569 = vadd.f32 %v567, %v568
    %v570 = vtanh.pop %v569
    %v571 = vmul.f32 %v565, %v570
    %572 = vst [vmem:[#allocation2 + $0x8] sm:$0xff] %v571
    %573 = vmatpush.msra.mxu0 %v363
    %574 = vmatpush.msra.mxu0 %v359
    %575 = vmatpush.msra.mxu0 %v355
    %576 = vmatpush.msra.mxu0 %v351
    %577 = vmatpush.msra.mxu0 %v347
    %578 = vmatpush.msra.mxu0 %v343
    %579 = vmatpush.msra.mxu0 %v339
    %580 = vmatpush.msra.mxu0 %v335
    %581 = vmatpush.msra.mxu0 %v331
    %582 = vmatpush.msra.mxu0 %v327
    %583 = vmatpush.msra.mxu0 %v323
    %584 = vmatpush.msra.mxu0 %v319
    %585 = vmatpush.msra.mxu0 %v315
    %586 = vmatpush.msra.mxu0 %v311
    %587 = vmatpush.msra.mxu0 %v307
    %588 = vmatpush.msra.mxu0 %v303
    %589 = vmatmul.f32.gmra.mxu0 %v571
    %v590 = vpop.f32.mrf.mxu0
    %v591 = vadd.f32 0.0, %v590
    %592 = vdwg.mxu0
    %593 = vmatpush.msra.mxu0 %v364
    %594 = vmatpush.msra.mxu0 %v360
    %595 = vmatpush.msra.mxu0 %v356
    %596 = vmatpush.msra.mxu0 %v352
    %597 = vmatpush.msra.mxu0 %v348
    %598 = vmatpush.msra.mxu0 %v344
    %599 = vmatpush.msra.mxu0 %v340
    %600 = vmatpush.msra.mxu0 %v336
    %601 = vmatpush.msra.mxu0 %v332
    %602 = vmatpush.msra.mxu0 %v328
    %603 = vmatpush.msra.mxu0 %v324
    %604 = vmatpush.msra.mxu0 %v320
    %605 = vmatpush.msra.mxu0 %v316
    %606 = vmatpush.msra.mxu0 %v312
    %607 = vmatpush.msra.mxu0 %v308
    %608 = vmatpush.msra.mxu0 %v304
    %609 = vmatmul.f32.gmra.mxu0 %v571
    %v610 = vpop.f32.mrf.mxu0
    %v611 = vadd.f32 0.0, %v610
    %612 = vdwg.mxu0
    %613 = vmatpush.msra.mxu0 %v365
    %614 = vmatpush.msra.mxu0 %v361
    %615 = vmatpush.msra.mxu0 %v357
    %616 = vmatpush.msra.mxu0 %v353
    %617 = vmatpush.msra.mxu0 %v349
    %618 = vmatpush.msra.mxu0 %v345
    %619 = vmatpush.msra.mxu0 %v341
    %620 = vmatpush.msra.mxu0 %v337
    %621 = vmatpush.msra.mxu0 %v333
    %622 = vmatpush.msra.mxu0 %v329
    %623 = vmatpush.msra.mxu0 %v325
    %624 = vmatpush.msra.mxu0 %v321
    %625 = vmatpush.msra.mxu0 %v317
    %626 = vmatpush.msra.mxu0 %v313
    %627 = vmatpush.msra.mxu0 %v309
    %628 = vmatpush.msra.mxu0 %v305
    %629 = vmatmul.f32.gmra.mxu0 %v571
    %v630 = vpop.f32.mrf.mxu0
    %v631 = vadd.f32 0.0, %v630
    %632 = vdwg.mxu0
    %633 = vmatpush.msra.mxu0 %v366
    %634 = vmatpush.msra.mxu0 %v362
    %635 = vmatpush.msra.mxu0 %v358
    %636 = vmatpush.msra.mxu0 %v354
    %637 = vmatpush.msra.mxu0 %v350
    %638 = vmatpush.msra.mxu0 %v346
    %639 = vmatpush.msra.mxu0 %v342
    %640 = vmatpush.msra.mxu0 %v338
    %641 = vmatpush.msra.mxu0 %v334
    %642 = vmatpush.msra.mxu0 %v330
    %643 = vmatpush.msra.mxu0 %v326
    %644 = vmatpush.msra.mxu0 %v322
    %645 = vmatpush.msra.mxu0 %v318
    %646 = vmatpush.msra.mxu0 %v314
    %647 = vmatpush.msra.mxu0 %v310
    %648 = vmatpush.msra.mxu0 %v306
    %649 = vmatmul.f32.gmra.mxu0 %v571
    %v650 = vpop.f32.mrf.mxu0
    %v651 = vadd.f32 0.0, %v650
    %652 = vdwg.mxu0
    %v653 = vadd.f32 %v241, %v591
    %v654 = vadd.f32 %v261, %v611
    %v655 = vadd.f32 %v281, %v631
    %v656 = vadd.f32 %v301, %v651
    %v657 = vmul.f32 %v653, 0.5
    %v658 = vmul.f32 %v654, 0.5
    %v659 = vmul.f32 %v655, 0.5
    %v660 = vtanh.pop %v657
    %v661 = vtanh.pop %v658
    %v662 = vtanh.pop %v659
    %v663 = vmul.f32 %v660, 0.5
    %v664 = vmul.f32 %v661, 0.5
    %v665 = vmul.f32 %v662, 0.5
    %v666 = vadd.f32 %v663, 0.5
    %v667 = vadd.f32 %v664, 0.5
    %v668 = vadd.f32 %v665, 0.5
    %v669 = vtanh.pop %v656
    %v670 = vmul.f32 %v667, %v569
    %v671 = vmul.f32 %v666, %v669
    %v672 = vadd.f32 %v670, %v671
    %v673 = vtanh.pop %v672
    %v674 = vmul.f32 %v668, %v673
    %675 = vst [vmem:[#allocation2 + $0x10] sm:$0xff] %v674
    %676 = vmatpush.msra.mxu0 %v363
    %677 = vmatpush.msra.mxu0 %v359
    %678 = vmatpush.msra.mxu0 %v355
    %679 = vmatpush.msra.mxu0 %v351
    %680 = vmatpush.msra.mxu0 %v347
    %681 = vmatpush.msra.mxu0 %v343
    %682 = vmatpush.msra.mxu0 %v339
    %683 = vmatpush.msra.mxu0 %v335
    %684 = vmatpush.msra.mxu0 %v331
    %685 = vmatpush.msra.mxu0 %v327
    %686 = vmatpush.msra.mxu0 %v323
    %687 = vmatpush.msra.mxu0 %v319
    %688 = vmatpush.msra.mxu0 %v315
    %689 = vmatpush.msra.mxu0 %v311
    %690 = vmatpush.msra.mxu0 %v307
    %691 = vmatpush.msra.mxu0 %v303
    %692 = vmatmul.f32.gmra.mxu0 %v674
    %v693 = vpop.f32.mrf.mxu0
    %v694 = vadd.f32 0.0, %v693
    %695 = vdwg.mxu0
    %696 = vmatpush.msra.mxu0 %v364
    %697 = vmatpush.msra.mxu0 %v360
    %698 = vmatpush.msra.mxu0 %v356
    %699 = vmatpush.msra.mxu0 %v352
    %700 = vmatpush.msra.mxu0 %v348
    %701 = vmatpush.msra.mxu0 %v344
    %702 = vmatpush.msra.mxu0 %v340
    %703 = vmatpush.msra.mxu0 %v336
    %704 = vmatpush.msra.mxu0 %v332
    %705 = vmatpush.msra.mxu0 %v328
    %706 = vmatpush.msra.mxu0 %v324
    %707 = vmatpush.msra.mxu0 %v320
    %708 = vmatpush.msra.mxu0 %v316
    %709 = vmatpush.msra.mxu0 %v312
    %710 = vmatpush.msra.mxu0 %v308
    %711 = vmatpush.msra.mxu0 %v304
    %712 = vmatmul.f32.gmra.mxu0 %v674
    %v713 = vpop.f32.mrf.mxu0
    %v714 = vadd.f32 0.0, %v713
    %715 = vdwg.mxu0
    %716 = vmatpush.msra.mxu0 %v365
    %717 = vmatpush.msra.mxu0 %v361
    %718 = vmatpush.msra.mxu0 %v357
    %719 = vmatpush.msra.mxu0 %v353
    %720 = vmatpush.msra.mxu0 %v349
    %721 = vmatpush.msra.mxu0 %v345
    %722 = vmatpush.msra.mxu0 %v341
    %723 = vmatpush.msra.mxu0 %v337
    %724 = vmatpush.msra.mxu0 %v333
    %725 = vmatpush.msra.mxu0 %v329
    %726 = vmatpush.msra.mxu0 %v325
    %727 = vmatpush.msra.mxu0 %v321
    %728 = vmatpush.msra.mxu0 %v317
    %729 = vmatpush.msra.mxu0 %v313
    %730 = vmatpush.msra.mxu0 %v309
    %731 = vmatpush.msra.mxu0 %v305
    %732 = vmatmul.f32.gmra.mxu0 %v674
    %v733 = vpop.f32.mrf.mxu0
    %v734 = vadd.f32 0.0, %v733
    %735 = vdwg.mxu0
    %736 = vmatpush.msra.mxu0 %v366
    %737 = vmatpush.msra.mxu0 %v362
    %738 = vmatpush.msra.mxu0 %v358
    %739 = vmatpush.msra.mxu0 %v354
    %740 = vmatpush.msra.mxu0 %v350
    %741 = vmatpush.msra.mxu0 %v346
    %742 = vmatpush.msra.mxu0 %v342
    %743 = vmatpush.msra.mxu0 %v338
    %744 = vmatpush.msra.mxu0 %v334
    %745 = vmatpush.msra.mxu0 %v330
    %746 = vmatpush.msra.mxu0 %v326
    %747 = vmatpush.msra.mxu0 %v322
    %748 = vmatpush.msra.mxu0 %v318
    %749 = vmatpush.msra.mxu0 %v314
    %750 = vmatpush.msra.mxu0 %v310
    %751 = vmatpush.msra.mxu0 %v306
    %752 = vmatmul.f32.gmra.mxu0 %v674
    %v753 = vpop.f32.mrf.mxu0
    %v754 = vadd.f32 0.0, %v753
    %755 = vdwg.mxu0
    %v756 = vadd.f32 %v241, %v694
    %v757 = vadd.f32 %v261, %v714
    %v758 = vadd.f32 %v281, %v734
    %v759 = vadd.f32 %v301, %v754
    %v760 = vmul.f32 %v756, 0.5
    %v761 = vmul.f32 %v757, 0.5
    %v762 = vmul.f32 %v758, 0.5
    %v763 = vtanh.pop %v760
    %v764 = vtanh.pop %v761
    %v765 = vtanh.pop %v762
    %v766 = vmul.f32 %v763, 0.5
    %v767 = vmul.f32 %v764, 0.5
    %v768 = vmul.f32 %v765, 0.5
    %v769 = vadd.f32 %v766, 0.5
    %v770 = vadd.f32 %v767, 0.5
    %v771 = vadd.f32 %v768, 0.5
    %v772 = vtanh.pop %v759
    %v773 = vmul.f32 %v770, %v672
    %v774 = vmul.f32 %v769, %v772
    %v775 = vadd.f32 %v773, %v774
    %v776 = vtanh.pop %v775
    %v777 = vmul.f32 %v771, %v776
    %778 = vst [vmem:[#allocation2 + $0x18] sm:$0xff] %v777
    %779 = vmatpush.msra.mxu0 %v363
    %780 = vmatpush.msra.mxu0 %v359
    %781 = vmatpush.msra.mxu0 %v355
    %782 = vmatpush.msra.mxu0 %v351
    %783 = vmatpush.msra.mxu0 %v347
    %784 = vmatpush.msra.mxu0 %v343
    %785 = vmatpush.msra.mxu0 %v339
    %786 = vmatpush.msra.mxu0 %v335
    %787 = vmatpush.msra.mxu0 %v331
    %788 = vmatpush.msra.mxu0 %v327
    %789 = vmatpush.msra.mxu0 %v323
    %790 = vmatpush.msra.mxu0 %v319
    %791 = vmatpush.msra.mxu0 %v315
    %792 = vmatpush.msra.mxu0 %v311
    %793 = vmatpush.msra.mxu0 %v307
    %794 = vmatpush.msra.mxu0 %v303
    %795 = vmatmul.f32.gmra.mxu0 %v777
    %v796 = vpop.f32.mrf.mxu0
    %v797 = vadd.f32 0.0, %v796
    %798 = vdwg.mxu0
    %799 = vmatpush.msra.mxu0 %v364
    %800 = vmatpush.msra.mxu0 %v360
    %801 = vmatpush.msra.mxu0 %v356
    %802 = vmatpush.msra.mxu0 %v352
    %803 = vmatpush.msra.mxu0 %v348
    %804 = vmatpush.msra.mxu0 %v344
    %805 = vmatpush.msra.mxu0 %v340
    %806 = vmatpush.msra.mxu0 %v336
    %807 = vmatpush.msra.mxu0 %v332
    %808 = vmatpush.msra.mxu0 %v328
    %809 = vmatpush.msra.mxu0 %v324
    %810 = vmatpush.msra.mxu0 %v320
    %811 = vmatpush.msra.mxu0 %v316
    %812 = vmatpush.msra.mxu0 %v312
    %813 = vmatpush.msra.mxu0 %v308
    %814 = vmatpush.msra.mxu0 %v304
    %815 = vmatmul.f32.gmra.mxu0 %v777
    %v816 = vpop.f32.mrf.mxu0
    %v817 = vadd.f32 0.0, %v816
    %818 = vdwg.mxu0
    %819 = vmatpush.msra.mxu0 %v365
    %820 = vmatpush.msra.mxu0 %v361
    %821 = vmatpush.msra.mxu0 %v357
    %822 = vmatpush.msra.mxu0 %v353
    %823 = vmatpush.msra.mxu0 %v349
    %824 = vmatpush.msra.mxu0 %v345
    %825 = vmatpush.msra.mxu0 %v341
    %826 = vmatpush.msra.mxu0 %v337
    %827 = vmatpush.msra.mxu0 %v333
    %828 = vmatpush.msra.mxu0 %v329
    %829 = vmatpush.msra.mxu0 %v325
    %830 = vmatpush.msra.mxu0 %v321
    %831 = vmatpush.msra.mxu0 %v317
    %832 = vmatpush.msra.mxu0 %v313
    %833 = vmatpush.msra.mxu0 %v309
    %834 = vmatpush.msra.mxu0 %v305
    %835 = vmatmul.f32.gmra.mxu0 %v777
    %v836 = vpop.f32.mrf.mxu0
    %v837 = vadd.f32 0.0, %v836
    %838 = vdwg.mxu0
    %839 = vmatpush.msra.mxu0 %v366
    %840 = vmatpush.msra.mxu0 %v362
    %841 = vmatpush.msra.mxu0 %v358
    %842 = vmatpush.msra.mxu0 %v354
    %843 = vmatpush.msra.mxu0 %v350
    %844 = vmatpush.msra.mxu0 %v346
    %845 = vmatpush.msra.mxu0 %v342
    %846 = vmatpush.msra.mxu0 %v338
    %847 = vmatpush.msra.mxu0 %v334
    %848 = vmatpush.msra.mxu0 %v330
    %849 = vmatpush.msra.mxu0 %v326
    %850 = vmatpush.msra.mxu0 %v322
    %851 = vmatpush.msra.mxu0 %v318
    %852 = vmatpush.msra.mxu0 %v314
    %853 = vmatpush.msra.mxu0 %v310
    %854 = vmatpush.msra.mxu0 %v306
    %855 = vmatmul.f32.gmra.mxu0 %v777
    %v856 = vpop.f32.mrf.mxu0
    %v857 = vadd.f32 0.0, %v856
    %858 = vdwg.mxu0
    %v859 = vadd.f32 %v241, %v797
    %v860 = vadd.f32 %v261, %v817
    %v861 = vadd.f32 %v281, %v837
    %v862 = vadd.f32 %v301, %v857
    %v863 = vmul.f32 %v859, 0.5
    %v864 = vmul.f32 %v860, 0.5
    %v865 = vmul.f32 %v861, 0.5
    %v866 = vtanh.pop %v863
    %v867 = vtanh.pop %v864
    %v868 = vtanh.pop %v865
    %v869 = vmul.f32 %v866, 0.5
    %v870 = vmul.f32 %v867, 0.5
    %v871 = vmul.f32 %v868, 0.5
    %v872 = vadd.f32 %v869, 0.5
    %v873 = vadd.f32 %v870, 0.5
    %v874 = vadd.f32 %v871, 0.5
    %v875 = vtanh.pop %v862
    %v876 = vmul.f32 %v873, %v775
    %v877 = vmul.f32 %v872, %v875
    %v878 = vadd.f32 %v876, %v877
    %v879 = vtanh.pop %v878
    %v880 = vmul.f32 %v874, %v879
    %881 = vst [vmem:[#allocation2 + $0x20] sm:$0xff] %v880
    %882 = vmatpush.msra.mxu0 %v363
    %883 = vmatpush.msra.mxu0 %v359
    %884 = vmatpush.msra.mxu0 %v355
    %885 = vmatpush.msra.mxu0 %v351
    %886 = vmatpush.msra.mxu0 %v347
    %887 = vmatpush.msra.mxu0 %v343
    %888 = vmatpush.msra.mxu0 %v339
    %889 = vmatpush.msra.mxu0 %v335
    %890 = vmatpush.msra.mxu0 %v331
    %891 = vmatpush.msra.mxu0 %v327
    %892 = vmatpush.msra.mxu0 %v323
    %893 = vmatpush.msra.mxu0 %v319
    %894 = vmatpush.msra.mxu0 %v315
    %895 = vmatpush.msra.mxu0 %v311
    %896 = vmatpush.msra.mxu0 %v307
    %897 = vmatpush.msra.mxu0 %v303
    %898 = vmatmul.f32.gmra.mxu0 %v880
    %v899 = vpop.f32.mrf.mxu0
    %v900 = vadd.f32 0.0, %v899
    %901 = vdwg.mxu0
    %902 = vmatpush.msra.mxu0 %v364
    %903 = vmatpush.msra.mxu0 %v360
    %904 = vmatpush.msra.mxu0 %v356
    %905 = vmatpush.msra.mxu0 %v352
    %906 = vmatpush.msra.mxu0 %v348
    %907 = vmatpush.msra.mxu0 %v344
    %908 = vmatpush.msra.mxu0 %v340
    %909 = vmatpush.msra.mxu0 %v336
    %910 = vmatpush.msra.mxu0 %v332
    %911 = vmatpush.msra.mxu0 %v328
    %912 = vmatpush.msra.mxu0 %v324
    %913 = vmatpush.msra.mxu0 %v320
    %914 = vmatpush.msra.mxu0 %v316
    %915 = vmatpush.msra.mxu0 %v312
    %916 = vmatpush.msra.mxu0 %v308
    %917 = vmatpush.msra.mxu0 %v304
    %918 = vmatmul.f32.gmra.mxu0 %v880
    %v919 = vpop.f32.mrf.mxu0
    %v920 = vadd.f32 0.0, %v919
    %921 = vdwg.mxu0
    %922 = vmatpush.msra.mxu0 %v365
    %923 = vmatpush.msra.mxu0 %v361
    %924 = vmatpush.msra.mxu0 %v357
    %925 = vmatpush.msra.mxu0 %v353
    %926 = vmatpush.msra.mxu0 %v349
    %927 = vmatpush.msra.mxu0 %v345
    %928 = vmatpush.msra.mxu0 %v341
    %929 = vmatpush.msra.mxu0 %v337
    %930 = vmatpush.msra.mxu0 %v333
    %931 = vmatpush.msra.mxu0 %v329
    %932 = vmatpush.msra.mxu0 %v325
    %933 = vmatpush.msra.mxu0 %v321
    %934 = vmatpush.msra.mxu0 %v317
    %935 = vmatpush.msra.mxu0 %v313
    %936 = vmatpush.msra.mxu0 %v309
    %937 = vmatpush.msra.mxu0 %v305
    %938 = vmatmul.f32.gmra.mxu0 %v880
    %v939 = vpop.f32.mrf.mxu0
    %v940 = vadd.f32 0.0, %v939
    %941 = vdwg.mxu0
    %942 = vmatpush.msra.mxu0 %v366
    %943 = vmatpush.msra.mxu0 %v362
    %944 = vmatpush.msra.mxu0 %v358
    %945 = vmatpush.msra.mxu0 %v354
    %946 = vmatpush.msra.mxu0 %v350
    %947 = vmatpush.msra.mxu0 %v346
    %948 = vmatpush.msra.mxu0 %v342
    %949 = vmatpush.msra.mxu0 %v338
    %950 = vmatpush.msra.mxu0 %v334
    %951 = vmatpush.msra.mxu0 %v330
    %952 = vmatpush.msra.mxu0 %v326
    %953 = vmatpush.msra.mxu0 %v322
    %954 = vmatpush.msra.mxu0 %v318
    %955 = vmatpush.msra.mxu0 %v314
    %956 = vmatpush.msra.mxu0 %v310
    %957 = vmatpush.msra.mxu0 %v306
    %958 = vmatmul.f32.gmra.mxu0 %v880
    %v959 = vpop.f32.mrf.mxu0
    %v960 = vadd.f32 0.0, %v959
    %961 = vdwg.mxu0
    %v962 = vadd.f32 %v241, %v900
    %v963 = vadd.f32 %v261, %v920
    %v964 = vadd.f32 %v281, %v940
    %v965 = vadd.f32 %v301, %v960
    %v966 = vmul.f32 %v962, 0.5
    %v967 = vmul.f32 %v963, 0.5
    %v968 = vmul.f32 %v964, 0.5
    %v969 = vtanh.pop %v966
    %v970 = vtanh.pop %v967
    %v971 = vtanh.pop %v968
    %v972 = vmul.f32 %v969, 0.5
    %v973 = vmul.f32 %v970, 0.5
    %v974 = vmul.f32 %v971, 0.5
    %v975 = vadd.f32 %v972, 0.5
    %v976 = vadd.f32 %v973, 0.5
    %v977 = vadd.f32 %v974, 0.5
    %v978 = vtanh.pop %v965
    %v979 = vmul.f32 %v976, %v878
    %v980 = vmul.f32 %v975, %v978
    %v981 = vadd.f32 %v979, %v980
    %v982 = vtanh.pop %v981
    %v983 = vmul.f32 %v977, %v982
    %984 = vst [vmem:[#allocation2 + $0x28] sm:$0xff] %v983
    %985 = vmatpush.msra.mxu0 %v363
    %986 = vmatpush.msra.mxu0 %v359
    %987 = vmatpush.msra.mxu0 %v355
    %988 = vmatpush.msra.mxu0 %v351
    %989 = vmatpush.msra.mxu0 %v347
    %990 = vmatpush.msra.mxu0 %v343
    %991 = vmatpush.msra.mxu0 %v339
    %992 = vmatpush.msra.mxu0 %v335
    %993 = vmatpush.msra.mxu0 %v331
    %994 = vmatpush.msra.mxu0 %v327
    %995 = vmatpush.msra.mxu0 %v323
    %996 = vmatpush.msra.mxu0 %v319
    %997 = vmatpush.msra.mxu0 %v315
    %998 = vmatpush.msra.mxu0 %v311
    %999 = vmatpush.msra.mxu0 %v307
    %1000 = vmatpush.msra.mxu0 %v303
    %1001 = vmatmul.f32.gmra.mxu0 %v983
    %v1002 = vpop.f32.mrf.mxu0
    %v1003 = vadd.f32 0.0, %v1002
    %1004 = vdwg.mxu0
    %1005 = vmatpush.msra.mxu0 %v364
    %1006 = vmatpush.msra.mxu0 %v360
    %1007 = vmatpush.msra.mxu0 %v356
    %1008 = vmatpush.msra.mxu0 %v352
    %1009 = vmatpush.msra.mxu0 %v348
    %1010 = vmatpush.msra.mxu0 %v344
    %1011 = vmatpush.msra.mxu0 %v340
    %1012 = vmatpush.msra.mxu0 %v336
    %1013 = vmatpush.msra.mxu0 %v332
    %1014 = vmatpush.msra.mxu0 %v328
    %1015 = vmatpush.msra.mxu0 %v324
    %1016 = vmatpush.msra.mxu0 %v320
    %1017 = vmatpush.msra.mxu0 %v316
    %1018 = vmatpush.msra.mxu0 %v312
    %1019 = vmatpush.msra.mxu0 %v308
    %1020 = vmatpush.msra.mxu0 %v304
    %1021 = vmatmul.f32.gmra.mxu0 %v983
    %v1022 = vpop.f32.mrf.mxu0
    %v1023 = vadd.f32 0.0, %v1022
    %1024 = vdwg.mxu0
    %1025 = vmatpush.msra.mxu0 %v365
    %1026 = vmatpush.msra.mxu0 %v361
    %1027 = vmatpush.msra.mxu0 %v357
    %1028 = vmatpush.msra.mxu0 %v353
    %1029 = vmatpush.msra.mxu0 %v349
    %1030 = vmatpush.msra.mxu0 %v345
    %1031 = vmatpush.msra.mxu0 %v341
    %1032 = vmatpush.msra.mxu0 %v337
    %1033 = vmatpush.msra.mxu0 %v333
    %1034 = vmatpush.msra.mxu0 %v329
    %1035 = vmatpush.msra.mxu0 %v325
    %1036 = vmatpush.msra.mxu0 %v321
    %1037 = vmatpush.msra.mxu0 %v317
    %1038 = vmatpush.msra.mxu0 %v313
    %1039 = vmatpush.msra.mxu0 %v309
    %1040 = vmatpush.msra.mxu0 %v305
    %1041 = vmatmul.f32.gmra.mxu0 %v983
    %v1042 = vpop.f32.mrf.mxu0
    %v1043 = vadd.f32 0.0, %v1042
    %1044 = vdwg.mxu0
    %1045 = vmatpush.msra.mxu0 %v366
    %1046 = vmatpush.msra.mxu0 %v362
    %1047 = vmatpush.msra.mxu0 %v358
    %1048 = vmatpush.msra.mxu0 %v354
    %1049 = vmatpush.msra.mxu0 %v350
    %1050 = vmatpush.msra.mxu0 %v346
    %1051 = vmatpush.msra.mxu0 %v342
    %1052 = vmatpush.msra.mxu0 %v338
    %1053 = vmatpush.msra.mxu0 %v334
    %1054 = vmatpush.msra.mxu0 %v330
    %1055 = vmatpush.msra.mxu0 %v326
    %1056 = vmatpush.msra.mxu0 %v322
    %1057 = vmatpush.msra.mxu0 %v318
    %1058 = vmatpush.msra.mxu0 %v314
    %1059 = vmatpush.msra.mxu0 %v310
    %1060 = vmatpush.msra.mxu0 %v306
    %1061 = vmatmul.f32.gmra.mxu0 %v983
    %v1062 = vpop.f32.mrf.mxu0
    %v1063 = vadd.f32 0.0, %v1062
    %1064 = vdwg.mxu0
    %v1065 = vadd.f32 %v241, %v1003
    %v1066 = vadd.f32 %v261, %v1023
    %v1067 = vadd.f32 %v281, %v1043
    %v1068 = vadd.f32 %v301, %v1063
    %v1069 = vmul.f32 %v1065, 0.5
    %v1070 = vmul.f32 %v1066, 0.5
    %v1071 = vmul.f32 %v1067, 0.5
    %v1072 = vtanh.pop %v1069
    %v1073 = vtanh.pop %v1070
    %v1074 = vtanh.pop %v1071
    %v1075 = vmul.f32 %v1072, 0.5
    %v1076 = vmul.f32 %v1073, 0.5
    %v1077 = vmul.f32 %v1074, 0.5
    %v1078 = vadd.f32 %v1075, 0.5
    %v1079 = vadd.f32 %v1076, 0.5
    %v1080 = vadd.f32 %v1077, 0.5
    %v1081 = vtanh.pop %v1068
    %v1082 = vmul.f32 %v1079, %v981
    %v1083 = vmul.f32 %v1078, %v1081
    %v1084 = vadd.f32 %v1082, %v1083
    %v1085 = vtanh.pop %v1084
    %v1086 = vmul.f32 %v1080, %v1085
    %1087 = vst [vmem:[#allocation2 + $0x30] sm:$0xff] %v1086
    %1088 = vmatpush.msra.mxu0 %v363
    %1089 = vmatpush.msra.mxu0 %v359
    %1090 = vmatpush.msra.mxu0 %v355
    %1091 = vmatpush.msra.mxu0 %v351
    %1092 = vmatpush.msra.mxu0 %v347
    %1093 = vmatpush.msra.mxu0 %v343
    %1094 = vmatpush.msra.mxu0 %v339
    %1095 = vmatpush.msra.mxu0 %v335
    %1096 = vmatpush.msra.mxu0 %v331
    %1097 = vmatpush.msra.mxu0 %v327
    %1098 = vmatpush.msra.mxu0 %v323
    %1099 = vmatpush.msra.mxu0 %v319
    %1100 = vmatpush.msra.mxu0 %v315
    %1101 = vmatpush.msra.mxu0 %v311
    %1102 = vmatpush.msra.mxu0 %v307
    %1103 = vmatpush.msra.mxu0 %v303
    %1104 = vmatmul.f32.gmra.mxu0 %v1086
    %v1105 = vpop.f32.mrf.mxu0
    %v1106 = vadd.f32 0.0, %v1105
    %1107 = vdwg.mxu0
    %1108 = vmatpush.msra.mxu0 %v364
    %1109 = vmatpush.msra.mxu0 %v360
    %1110 = vmatpush.msra.mxu0 %v356
    %1111 = vmatpush.msra.mxu0 %v352
    %1112 = vmatpush.msra.mxu0 %v348
    %1113 = vmatpush.msra.mxu0 %v344
    %1114 = vmatpush.msra.mxu0 %v340
    %1115 = vmatpush.msra.mxu0 %v336
    %1116 = vmatpush.msra.mxu0 %v332
    %1117 = vmatpush.msra.mxu0 %v328
    %1118 = vmatpush.msra.mxu0 %v324
    %1119 = vmatpush.msra.mxu0 %v320
    %1120 = vmatpush.msra.mxu0 %v316
    %1121 = vmatpush.msra.mxu0 %v312
    %1122 = vmatpush.msra.mxu0 %v308
    %1123 = vmatpush.msra.mxu0 %v304
    %1124 = vmatmul.f32.gmra.mxu0 %v1086
    %v1125 = vpop.f32.mrf.mxu0
    %v1126 = vadd.f32 0.0, %v1125
    %1127 = vdwg.mxu0
    %1128 = vmatpush.msra.mxu0 %v365
    %1129 = vmatpush.msra.mxu0 %v361
    %1130 = vmatpush.msra.mxu0 %v357
    %1131 = vmatpush.msra.mxu0 %v353
    %1132 = vmatpush.msra.mxu0 %v349
    %1133 = vmatpush.msra.mxu0 %v345
    %1134 = vmatpush.msra.mxu0 %v341
    %1135 = vmatpush.msra.mxu0 %v337
    %1136 = vmatpush.msra.mxu0 %v333
    %1137 = vmatpush.msra.mxu0 %v329
    %1138 = vmatpush.msra.mxu0 %v325
    %1139 = vmatpush.msra.mxu0 %v321
    %1140 = vmatpush.msra.mxu0 %v317
    %1141 = vmatpush.msra.mxu0 %v313
    %1142 = vmatpush.msra.mxu0 %v309
    %1143 = vmatpush.msra.mxu0 %v305
    %1144 = vmatmul.f32.gmra.mxu0 %v1086
    %v1145 = vpop.f32.mrf.mxu0
    %v1146 = vadd.f32 0.0, %v1145
    %1147 = vdwg.mxu0
    %1148 = vmatpush.msra.mxu0 %v366
    %1149 = vmatpush.msra.mxu0 %v362
    %1150 = vmatpush.msra.mxu0 %v358
    %1151 = vmatpush.msra.mxu0 %v354
    %1152 = vmatpush.msra.mxu0 %v350
    %1153 = vmatpush.msra.mxu0 %v346
    %1154 = vmatpush.msra.mxu0 %v342
    %1155 = vmatpush.msra.mxu0 %v338
    %1156 = vmatpush.msra.mxu0 %v334
    %1157 = vmatpush.msra.mxu0 %v330
    %1158 = vmatpush.msra.mxu0 %v326
    %1159 = vmatpush.msra.mxu0 %v322
    %1160 = vmatpush.msra.mxu0 %v318
    %1161 = vmatpush.msra.mxu0 %v314
    %1162 = vmatpush.msra.mxu0 %v310
    %1163 = vmatpush.msra.mxu0 %v306
    %1164 = vmatmul.f32.gmra.mxu0 %v1086
    %v1165 = vpop.f32.mrf.mxu0
    %v1166 = vadd.f32 0.0, %v1165
    %1167 = vdwg.mxu0
    %v1168 = vadd.f32 %v241, %v1106
    %v1169 = vadd.f32 %v261, %v1126
    %v1170 = vadd.f32 %v281, %v1146
    %v1171 = vadd.f32 %v301, %v1166
    %v1172 = vmul.f32 %v1168, 0.5
    %v1173 = vmul.f32 %v1169, 0.5
    %v1174 = vmul.f32 %v1170, 0.5
    %v1175 = vtanh.pop %v1172
    %v1176 = vtanh.pop %v1173
    %v1177 = vtanh.pop %v1174
    %v1178 = vmul.f32 %v1175, 0.5
    %v1179 = vmul.f32 %v1176, 0.5
    %v1180 = vmul.f32 %v1177, 0.5
    %v1181 = vadd.f32 %v1178, 0.5
    %v1182 = vadd.f32 %v1179, 0.5
    %v1183 = vadd.f32 %v1180, 0.5
    %v1184 = vtanh.pop %v1171
    %v1185 = vmul.f32 %v1182, %v1084
    %v1186 = vmul.f32 %v1181, %v1184
    %v1187 = vadd.f32 %v1185, %v1186
    %v1188 = vtanh.pop %v1187
    %v1189 = vmul.f32 %v1183, %v1188
    %1190 = vst [vmem:[#allocation2 + $0x38] sm:$0xff] %v1189
    %v1191 = vld [vmem:[#allocation2] sm:$0xff]
    %v1192 = vld [vmem:[#allocation2 + $0x8] sm:$0xff]
    %v1193 = vld [vmem:[#allocation2 + $0x10] sm:$0xff]
    %v1194 = vld [vmem:[#allocation2 + $0x18] sm:$0xff]
    %v1195 = vld [vmem:[#allocation2 + $0x20] sm:$0xff]
    %v1196 = vld [vmem:[#allocation2 + $0x28] sm:$0xff]
    %v1197 = vld [vmem:[#allocation2 + $0x30] sm:$0xff]
    %v1198 = vld [vmem:[#allocation2 + $0x38] sm:$0xff]
    %s1199 = scalar_lea.vmem [#allocation7], 512
    %v1200 = vld [vmem:[%s1199] sm:$0xff]
    %v1201 = vld [vmem:[%s1199 + $0x8] sm:$0xff]
    %v1202 = vld [vmem:[%s1199 + $0x10] sm:$0xff]
    %v1203 = vld [vmem:[%s1199 + $0x18] sm:$0xff]
    %v1204 = vld [vmem:[%s1199 + $0x20] sm:$0xff]
    %v1205 = vld [vmem:[%s1199 + $0x28] sm:$0xff]
    %v1206 = vld [vmem:[%s1199 + $0x30] sm:$0xff]
    %v1207 = vld [vmem:[%s1199 + $0x38] sm:$0xff]
    %v1208 = vld [vmem:[%s1199 + $0x40] sm:$0xff]
    %v1209 = vld [vmem:[%s1199 + $0x48] sm:$0xff]
    %v1210 = vld [vmem:[%s1199 + $0x50] sm:$0xff]
    %v1211 = vld [vmem:[%s1199 + $0x58] sm:$0xff]
    %v1212 = vld [vmem:[%s1199 + $0x60] sm:$0xff]
    %v1213 = vld [vmem:[%s1199 + $0x68] sm:$0xff]
    %v1214 = vld [vmem:[%s1199 + $0x70] sm:$0xff]
    %v1215 = vld [vmem:[%s1199 + $0x78] sm:$0xff]
    %v1216 = vld [vmem:[%s1199 + $0x80] sm:$0xff]
    %v1217 = vld [vmem:[%s1199 + $0x88] sm:$0xff]
    %v1218 = vld [vmem:[%s1199 + $0x90] sm:$0xff]
    %v1219 = vld [vmem:[%s1199 + $0x98] sm:$0xff]
    %v1220 = vld [vmem:[%s1199 + $0xa0] sm:$0xff]
    %v1221 = vld [vmem:[%s1199 + $0xa8] sm:$0xff]
    %v1222 = vld [vmem:[%s1199 + $0xb0] sm:$0xff]
    %v1223 = vld [vmem:[%s1199 + $0xb8] sm:$0xff]
    %v1224 = vld [vmem:[%s1199 + $0xc0] sm:$0xff]
    %v1225 = vld [vmem:[%s1199 + $0xc8] sm:$0xff]
    %v1226 = vld [vmem:[%s1199 + $0xd0] sm:$0xff]
    %v1227 = vld [vmem:[%s1199 + $0xd8] sm:$0xff]
    %v1228 = vld [vmem:[%s1199 + $0xe0] sm:$0xff]
    %v1229 = vld [vmem:[%s1199 + $0xe8] sm:$0xff]
    %v1230 = vld [vmem:[%s1199 + $0xf0] sm:$0xff]
    %v1231 = vld [vmem:[%s1199 + $0xf8] sm:$0xff]
    %v1232 = vld [vmem:[%s1199 + $0x100] sm:$0xff]
    %v1233 = vld [vmem:[%s1199 + $0x108] sm:$0xff]
    %v1234 = vld [vmem:[%s1199 + $0x110] sm:$0xff]
    %v1235 = vld [vmem:[%s1199 + $0x118] sm:$0xff]
    %v1236 = vld [vmem:[%s1199 + $0x120] sm:$0xff]
    %v1237 = vld [vmem:[%s1199 + $0x128] sm:$0xff]
    %v1238 = vld [vmem:[%s1199 + $0x130] sm:$0xff]
    %v1239 = vld [vmem:[%s1199 + $0x138] sm:$0xff]
    %v1240 = vld [vmem:[%s1199 + $0x140] sm:$0xff]
    %v1241 = vld [vmem:[%s1199 + $0x148] sm:$0xff]
    %v1242 = vld [vmem:[%s1199 + $0x150] sm:$0xff]
    %v1243 = vld [vmem:[%s1199 + $0x158] sm:$0xff]
    %v1244 = vld [vmem:[%s1199 + $0x160] sm:$0xff]
    %v1245 = vld [vmem:[%s1199 + $0x168] sm:$0xff]
    %v1246 = vld [vmem:[%s1199 + $0x170] sm:$0xff]
    %v1247 = vld [vmem:[%s1199 + $0x178] sm:$0xff]
    %v1248 = vld [vmem:[%s1199 + $0x180] sm:$0xff]
    %v1249 = vld [vmem:[%s1199 + $0x188] sm:$0xff]
    %v1250 = vld [vmem:[%s1199 + $0x190] sm:$0xff]
    %v1251 = vld [vmem:[%s1199 + $0x198] sm:$0xff]
    %v1252 = vld [vmem:[%s1199 + $0x1a0] sm:$0xff]
    %v1253 = vld [vmem:[%s1199 + $0x1a8] sm:$0xff]
    %v1254 = vld [vmem:[%s1199 + $0x1b0] sm:$0xff]
    %v1255 = vld [vmem:[%s1199 + $0x1b8] sm:$0xff]
    %v1256 = vld [vmem:[%s1199 + $0x1c0] sm:$0xff]
    %v1257 = vld [vmem:[%s1199 + $0x1c8] sm:$0xff]
    %v1258 = vld [vmem:[%s1199 + $0x1d0] sm:$0xff]
    %v1259 = vld [vmem:[%s1199 + $0x1d8] sm:$0xff]
    %v1260 = vld [vmem:[%s1199 + $0x1e0] sm:$0xff]
    %v1261 = vld [vmem:[%s1199 + $0x1e8] sm:$0xff]
    %v1262 = vld [vmem:[%s1199 + $0x1f0] sm:$0xff]
    %v1263 = vld [vmem:[%s1199 + $0x1f8] sm:$0xff]
    %s1264 = scalar_lea.vmem [#allocation10], 4
    %v1265 = vld [vmem:[%s1264] sm:$0xf]
    %v1267 = vperm.slane %v1265, 0
    %v1268 = vperm.slane %v1265, 1
    %v1269 = vperm.slane %v1265, 2
    %v1270 = vperm.slane %v1265, 3
    %1275 = vmatpush.msra.mxu0 %v1260
    %1276 = vmatpush.msra.mxu0 %v1256
    %1277 = vmatpush.msra.mxu0 %v1252
    %1278 = vmatpush.msra.mxu0 %v1248
    %1279 = vmatpush.msra.mxu0 %v1244
    %1280 = vmatpush.msra.mxu0 %v1240
    %1281 = vmatpush.msra.mxu0 %v1236
    %1282 = vmatpush.msra.mxu0 %v1232
    %1283 = vmatpush.msra.mxu0 %v1228
    %1284 = vmatpush.msra.mxu0 %v1224
    %1285 = vmatpush.msra.mxu0 %v1220
    %1286 = vmatpush.msra.mxu0 %v1216
    %1287 = vmatpush.msra.mxu0 %v1212
    %1288 = vmatpush.msra.mxu0 %v1208
    %1289 = vmatpush.msra.mxu0 %v1204
    %1290 = vmatpush.msra.mxu0 %v1200
    %1291 = vmatmul.f32.gmra.mxu0 %v1191
    %v1292 = vpop.f32.mrf.mxu0
    %v1293 = vadd.f32 %v1267, %v1292
    %1294 = vmatmul.f32.gmra.mxu0 %v1192
    %v1295 = vpop.f32.mrf.mxu0
    %v1296 = vadd.f32 %v1267, %v1295
    %1297 = vmatmul.f32.gmra.mxu0 %v1193
    %v1298 = vpop.f32.mrf.mxu0
    %v1299 = vadd.f32 %v1267, %v1298
    %1300 = vmatmul.f32.gmra.mxu0 %v1194
    %v1301 = vpop.f32.mrf.mxu0
    %v1302 = vadd.f32 %v1267, %v1301
    %1303 = vmatmul.f32.gmra.mxu0 %v1195
    %v1304 = vpop.f32.mrf.mxu0
    %v1305 = vadd.f32 %v1267, %v1304
    %1306 = vmatmul.f32.gmra.mxu0 %v1196
    %v1307 = vpop.f32.mrf.mxu0
    %v1308 = vadd.f32 %v1267, %v1307
    %1309 = vmatmul.f32.gmra.mxu0 %v1197
    %v1310 = vpop.f32.mrf.mxu0
    %v1311 = vadd.f32 %v1267, %v1310
    %1312 = vmatmul.f32.gmra.mxu0 %v1198
    %v1313 = vpop.f32.mrf.mxu0
    %v1314 = vadd.f32 %v1267, %v1313
    %1315 = vdwg.mxu0
    %1316 = vmatpush.msra.mxu0 %v1261
    %1317 = vmatpush.msra.mxu0 %v1257
    %1318 = vmatpush.msra.mxu0 %v1253
    %1319 = vmatpush.msra.mxu0 %v1249
    %1320 = vmatpush.msra.mxu0 %v1245
    %1321 = vmatpush.msra.mxu0 %v1241
    %1322 = vmatpush.msra.mxu0 %v1237
    %1323 = vmatpush.msra.mxu0 %v1233
    %1324 = vmatpush.msra.mxu0 %v1229
    %1325 = vmatpush.msra.mxu0 %v1225
    %1326 = vmatpush.msra.mxu0 %v1221
    %1327 = vmatpush.msra.mxu0 %v1217
    %1328 = vmatpush.msra.mxu0 %v1213
    %1329 = vmatpush.msra.mxu0 %v1209
    %1330 = vmatpush.msra.mxu0 %v1205
    %1331 = vmatpush.msra.mxu0 %v1201
    %1332 = vmatmul.f32.gmra.mxu0 %v1191
    %v1333 = vpop.f32.mrf.mxu0
    %v1334 = vadd.f32 %v1268, %v1333
    %1335 = vmatmul.f32.gmra.mxu0 %v1192
    %v1336 = vpop.f32.mrf.mxu0
    %v1337 = vadd.f32 %v1268, %v1336
    %1338 = vmatmul.f32.gmra.mxu0 %v1193
    %v1339 = vpop.f32.mrf.mxu0
    %v1340 = vadd.f32 %v1268, %v1339
    %1341 = vmatmul.f32.gmra.mxu0 %v1194
    %v1342 = vpop.f32.mrf.mxu0
    %v1343 = vadd.f32 %v1268, %v1342
    %1344 = vmatmul.f32.gmra.mxu0 %v1195
    %v1345 = vpop.f32.mrf.mxu0
    %v1346 = vadd.f32 %v1268, %v1345
    %1347 = vmatmul.f32.gmra.mxu0 %v1196
    %v1348 = vpop.f32.mrf.mxu0
    %v1349 = vadd.f32 %v1268, %v1348
    %1350 = vmatmul.f32.gmra.mxu0 %v1197
    %v1351 = vpop.f32.mrf.mxu0
    %v1352 = vadd.f32 %v1268, %v1351
    %1353 = vmatmul.f32.gmra.mxu0 %v1198
    %v1354 = vpop.f32.mrf.mxu0
    %v1355 = vadd.f32 %v1268, %v1354
    %1356 = vdwg.mxu0
    %1357 = vmatpush.msra.mxu0 %v1262
    %1358 = vmatpush.msra.mxu0 %v1258
    %1359 = vmatpush.msra.mxu0 %v1254
    %1360 = vmatpush.msra.mxu0 %v1250
    %1361 = vmatpush.msra.mxu0 %v1246
    %1362 = vmatpush.msra.mxu0 %v1242
    %1363 = vmatpush.msra.mxu0 %v1238
    %1364 = vmatpush.msra.mxu0 %v1234
    %1365 = vmatpush.msra.mxu0 %v1230
    %1366 = vmatpush.msra.mxu0 %v1226
    %1367 = vmatpush.msra.mxu0 %v1222
    %1368 = vmatpush.msra.mxu0 %v1218
    %1369 = vmatpush.msra.mxu0 %v1214
    %1370 = vmatpush.msra.mxu0 %v1210
    %1371 = vmatpush.msra.mxu0 %v1206
    %1372 = vmatpush.msra.mxu0 %v1202
    %1373 = vmatmul.f32.gmra.mxu0 %v1191
    %v1374 = vpop.f32.mrf.mxu0
    %v1375 = vadd.f32 %v1269, %v1374
    %1376 = vmatmul.f32.gmra.mxu0 %v1192
    %v1377 = vpop.f32.mrf.mxu0
    %v1378 = vadd.f32 %v1269, %v1377
    %1379 = vmatmul.f32.gmra.mxu0 %v1193
    %v1380 = vpop.f32.mrf.mxu0
    %v1381 = vadd.f32 %v1269, %v1380
    %1382 = vmatmul.f32.gmra.mxu0 %v1194
    %v1383 = vpop.f32.mrf.mxu0
    %v1384 = vadd.f32 %v1269, %v1383
    %1385 = vmatmul.f32.gmra.mxu0 %v1195
    %v1386 = vpop.f32.mrf.mxu0
    %v1387 = vadd.f32 %v1269, %v1386
    %1388 = vmatmul.f32.gmra.mxu0 %v1196
    %v1389 = vpop.f32.mrf.mxu0
    %v1390 = vadd.f32 %v1269, %v1389
    %1391 = vmatmul.f32.gmra.mxu0 %v1197
    %v1392 = vpop.f32.mrf.mxu0
    %v1393 = vadd.f32 %v1269, %v1392
    %1394 = vmatmul.f32.gmra.mxu0 %v1198
    %v1395 = vpop.f32.mrf.mxu0
    %v1396 = vadd.f32 %v1269, %v1395
    %1397 = vdwg.mxu0
    %1398 = vmatpush.msra.mxu0 %v1263
    %1399 = vmatpush.msra.mxu0 %v1259
    %1400 = vmatpush.msra.mxu0 %v1255
    %1401 = vmatpush.msra.mxu0 %v1251
    %1402 = vmatpush.msra.mxu0 %v1247
    %1403 = vmatpush.msra.mxu0 %v1243
    %1404 = vmatpush.msra.mxu0 %v1239
    %1405 = vmatpush.msra.mxu0 %v1235
    %1406 = vmatpush.msra.mxu0 %v1231
    %1407 = vmatpush.msra.mxu0 %v1227
    %1408 = vmatpush.msra.mxu0 %v1223
    %1409 = vmatpush.msra.mxu0 %v1219
    %1410 = vmatpush.msra.mxu0 %v1215
    %1411 = vmatpush.msra.mxu0 %v1211
    %1412 = vmatpush.msra.mxu0 %v1207
    %1413 = vmatpush.msra.mxu0 %v1203
    %1414 = vmatmul.f32.gmra.mxu0 %v1191
    %v1415 = vpop.f32.mrf.mxu0
    %v1416 = vadd.f32 %v1270, %v1415
    %1417 = vmatmul.f32.gmra.mxu0 %v1192
    %v1418 = vpop.f32.mrf.mxu0
    %v1419 = vadd.f32 %v1270, %v1418
    %1420 = vmatmul.f32.gmra.mxu0 %v1193
    %v1421 = vpop.f32.mrf.mxu0
    %v1422 = vadd.f32 %v1270, %v1421
    %1423 = vmatmul.f32.gmra.mxu0 %v1194
    %v1424 = vpop.f32.mrf.mxu0
    %v1425 = vadd.f32 %v1270, %v1424
    %1426 = vmatmul.f32.gmra.mxu0 %v1195
    %v1427 = vpop.f32.mrf.mxu0
    %v1428 = vadd.f32 %v1270, %v1427
    %1429 = vmatmul.f32.gmra.mxu0 %v1196
    %v1430 = vpop.f32.mrf.mxu0
    %v1431 = vadd.f32 %v1270, %v1430
    %1432 = vmatmul.f32.gmra.mxu0 %v1197
    %v1433 = vpop.f32.mrf.mxu0
    %v1434 = vadd.f32 %v1270, %v1433
    %1435 = vmatmul.f32.gmra.mxu0 %v1198
    %v1436 = vpop.f32.mrf.mxu0
    %v1437 = vadd.f32 %v1270, %v1436
    %1438 = vdwg.mxu0
    %1439 = vst [vmem:[#allocation3] sm:$0xff] %v1293
    %1440 = vst [vmem:[#allocation3 + $0x8] sm:$0xff] %v1334
    %1441 = vst [vmem:[#allocation3 + $0x10] sm:$0xff] %v1375
    %1442 = vst [vmem:[#allocation3 + $0x18] sm:$0xff] %v1416
    %1443 = vst [vmem:[#allocation3 + $0x20] sm:$0xff] %v1296
    %1444 = vst [vmem:[#allocation3 + $0x28] sm:$0xff] %v1337
    %1445 = vst [vmem:[#allocation3 + $0x30] sm:$0xff] %v1378
    %1446 = vst [vmem:[#allocation3 + $0x38] sm:$0xff] %v1419
    %1447 = vst [vmem:[#allocation3 + $0x40] sm:$0xff] %v1299
    %1448 = vst [vmem:[#allocation3 + $0x48] sm:$0xff] %v1340
    %1449 = vst [vmem:[#allocation3 + $0x50] sm:$0xff] %v1381
    %1450 = vst [vmem:[#allocation3 + $0x58] sm:$0xff] %v1422
    %1451 = vst [vmem:[#allocation3 + $0x60] sm:$0xff] %v1302
    %1452 = vst [vmem:[#allocation3 + $0x68] sm:$0xff] %v1343
    %1453 = vst [vmem:[#allocation3 + $0x70] sm:$0xff] %v1384
    %1454 = vst [vmem:[#allocation3 + $0x78] sm:$0xff] %v1425
    %1455 = vst [vmem:[#allocation3 + $0x80] sm:$0xff] %v1305
    %1456 = vst [vmem:[#allocation3 + $0x88] sm:$0xff] %v1346
    %1457 = vst [vmem:[#allocation3 + $0x90] sm:$0xff] %v1387
    %1458 = vst [vmem:[#allocation3 + $0x98] sm:$0xff] %v1428
    %1459 = vst [vmem:[#allocation3 + $0xa0] sm:$0xff] %v1308
    %1460 = vst [vmem:[#allocation3 + $0xa8] sm:$0xff] %v1349
    %1461 = vst [vmem:[#allocation3 + $0xb0] sm:$0xff] %v1390
    %1462 = vst [vmem:[#allocation3 + $0xb8] sm:$0xff] %v1431
    %1463 = vst [vmem:[#allocation3 + $0xc0] sm:$0xff] %v1311
    %1464 = vst [vmem:[#allocation3 + $0xc8] sm:$0xff] %v1352
    %1465 = vst [vmem:[#allocation3 + $0xd0] sm:$0xff] %v1393
    %1466 = vst [vmem:[#allocation3 + $0xd8] sm:$0xff] %v1434
    %1467 = vst [vmem:[#allocation3 + $0xe0] sm:$0xff] %v1314
    %1468 = vst [vmem:[#allocation3 + $0xe8] sm:$0xff] %v1355
    %1469 = vst [vmem:[#allocation3 + $0xf0] sm:$0xff] %v1396
    %1470 = vst [vmem:[#allocation3 + $0xf8] sm:$0xff] %v1437
    %s1471 = scalar_lea.vmem [#allocation9], 512
    %v1472 = vld [vmem:[%s1471] sm:$0xff]
    %v1473 = vld [vmem:[%s1471 + $0x8] sm:$0xff]
    %v1474 = vld [vmem:[%s1471 + $0x10] sm:$0xff]
    %v1475 = vld [vmem:[%s1471 + $0x18] sm:$0xff]
    %v1476 = vld [vmem:[%s1471 + $0x20] sm:$0xff]
    %v1477 = vld [vmem:[%s1471 + $0x28] sm:$0xff]
    %v1478 = vld [vmem:[%s1471 + $0x30] sm:$0xff]
    %v1479 = vld [vmem:[%s1471 + $0x38] sm:$0xff]
    %v1480 = vld [vmem:[%s1471 + $0x40] sm:$0xff]
    %v1481 = vld [vmem:[%s1471 + $0x48] sm:$0xff]
    %v1482 = vld [vmem:[%s1471 + $0x50] sm:$0xff]
    %v1483 = vld [vmem:[%s1471 + $0x58] sm:$0xff]
    %v1484 = vld [vmem:[%s1471 + $0x60] sm:$0xff]
    %v1485 = vld [vmem:[%s1471 + $0x68] sm:$0xff]
    %v1486 = vld [vmem:[%s1471 + $0x70] sm:$0xff]
    %v1487 = vld [vmem:[%s1471 + $0x78] sm:$0xff]
    %v1488 = vld [vmem:[%s1471 + $0x80] sm:$0xff]
    %v1489 = vld [vmem:[%s1471 + $0x88] sm:$0xff]
    %v1490 = vld [vmem:[%s1471 + $0x90] sm:$0xff]
    %v1491 = vld [vmem:[%s1471 + $0x98] sm:$0xff]
    %v1492 = vld [vmem:[%s1471 + $0xa0] sm:$0xff]
    %v1493 = vld [vmem:[%s1471 + $0xa8] sm:$0xff]
    %v1494 = vld [vmem:[%s1471 + $0xb0] sm:$0xff]
    %v1495 = vld [vmem:[%s1471 + $0xb8] sm:$0xff]
    %v1496 = vld [vmem:[%s1471 + $0xc0] sm:$0xff]
    %v1497 = vld [vmem:[%s1471 + $0xc8] sm:$0xff]
    %v1498 = vld [vmem:[%s1471 + $0xd0] sm:$0xff]
    %v1499 = vld [vmem:[%s1471 + $0xd8] sm:$0xff]
    %v1500 = vld [vmem:[%s1471 + $0xe0] sm:$0xff]
    %v1501 = vld [vmem:[%s1471 + $0xe8] sm:$0xff]
    %v1502 = vld [vmem:[%s1471 + $0xf0] sm:$0xff]
    %v1503 = vld [vmem:[%s1471 + $0xf8] sm:$0xff]
    %v1504 = vld [vmem:[%s1471 + $0x100] sm:$0xff]
    %v1505 = vld [vmem:[%s1471 + $0x108] sm:$0xff]
    %v1506 = vld [vmem:[%s1471 + $0x110] sm:$0xff]
    %v1507 = vld [vmem:[%s1471 + $0x118] sm:$0xff]
    %v1508 = vld [vmem:[%s1471 + $0x120] sm:$0xff]
    %v1509 = vld [vmem:[%s1471 + $0x128] sm:$0xff]
    %v1510 = vld [vmem:[%s1471 + $0x130] sm:$0xff]
    %v1511 = vld [vmem:[%s1471 + $0x138] sm:$0xff]
    %v1512 = vld [vmem:[%s1471 + $0x140] sm:$0xff]
    %v1513 = vld [vmem:[%s1471 + $0x148] sm:$0xff]
    %v1514 = vld [vmem:[%s1471 + $0x150] sm:$0xff]
    %v1515 = vld [vmem:[%s1471 + $0x158] sm:$0xff]
    %v1516 = vld [vmem:[%s1471 + $0x160] sm:$0xff]
    %v1517 = vld [vmem:[%s1471 + $0x168] sm:$0xff]
    %v1518 = vld [vmem:[%s1471 + $0x170] sm:$0xff]
    %v1519 = vld [vmem:[%s1471 + $0x178] sm:$0xff]
    %v1520 = vld [vmem:[%s1471 + $0x180] sm:$0xff]
    %v1521 = vld [vmem:[%s1471 + $0x188] sm:$0xff]
    %v1522 = vld [vmem:[%s1471 + $0x190] sm:$0xff]
    %v1523 = vld [vmem:[%s1471 + $0x198] sm:$0xff]
    %v1524 = vld [vmem:[%s1471 + $0x1a0] sm:$0xff]
    %v1525 = vld [vmem:[%s1471 + $0x1a8] sm:$0xff]
    %v1526 = vld [vmem:[%s1471 + $0x1b0] sm:$0xff]
    %v1527 = vld [vmem:[%s1471 + $0x1b8] sm:$0xff]
    %v1528 = vld [vmem:[%s1471 + $0x1c0] sm:$0xff]
    %v1529 = vld [vmem:[%s1471 + $0x1c8] sm:$0xff]
    %v1530 = vld [vmem:[%s1471 + $0x1d0] sm:$0xff]
    %v1531 = vld [vmem:[%s1471 + $0x1d8] sm:$0xff]
    %v1532 = vld [vmem:[%s1471 + $0x1e0] sm:$0xff]
    %v1533 = vld [vmem:[%s1471 + $0x1e8] sm:$0xff]
    %v1534 = vld [vmem:[%s1471 + $0x1f0] sm:$0xff]
    %v1535 = vld [vmem:[%s1471 + $0x1f8] sm:$0xff]
    %v1536 = vld [vmem:[#allocation3] sm:$0xff]
    %v1537 = vld [vmem:[#allocation3 + $0x8] sm:$0xff]
    %v1538 = vld [vmem:[#allocation3 + $0x10] sm:$0xff]
    %v1539 = vld [vmem:[#allocation3 + $0x18] sm:$0xff]
    %1540 = vmatpush.msra.mxu0 %v1532
    %1541 = vmatpush.msra.mxu0 %v1528
    %1542 = vmatpush.msra.mxu0 %v1524
    %1543 = vmatpush.msra.mxu0 %v1520
    %1544 = vmatpush.msra.mxu0 %v1516
    %1545 = vmatpush.msra.mxu0 %v1512
    %1546 = vmatpush.msra.mxu0 %v1508
    %1547 = vmatpush.msra.mxu0 %v1504
    %1548 = vmatpush.msra.mxu0 %v1500
    %1549 = vmatpush.msra.mxu0 %v1496
    %1550 = vmatpush.msra.mxu0 %v1492
    %1551 = vmatpush.msra.mxu0 %v1488
    %1552 = vmatpush.msra.mxu0 %v1484
    %1553 = vmatpush.msra.mxu0 %v1480
    %1554 = vmatpush.msra.mxu0 %v1476
    %1555 = vmatpush.msra.mxu0 %v1472
    %1556 = vmatmul.f32.gmra.mxu0 0.0
    %v1557 = vpop.f32.mrf.mxu0
    %v1558 = vadd.f32 0.0, %v1557
    %1559 = vdwg.mxu0
    %1560 = vmatpush.msra.mxu0 %v1533
    %1561 = vmatpush.msra.mxu0 %v1529
    %1562 = vmatpush.msra.mxu0 %v1525
    %1563 = vmatpush.msra.mxu0 %v1521
    %1564 = vmatpush.msra.mxu0 %v1517
    %1565 = vmatpush.msra.mxu0 %v1513
    %1566 = vmatpush.msra.mxu0 %v1509
    %1567 = vmatpush.msra.mxu0 %v1505
    %1568 = vmatpush.msra.mxu0 %v1501
    %1569 = vmatpush.msra.mxu0 %v1497
    %1570 = vmatpush.msra.mxu0 %v1493
    %1571 = vmatpush.msra.mxu0 %v1489
    %1572 = vmatpush.msra.mxu0 %v1485
    %1573 = vmatpush.msra.mxu0 %v1481
    %1574 = vmatpush.msra.mxu0 %v1477
    %1575 = vmatpush.msra.mxu0 %v1473
    %1576 = vmatmul.f32.gmra.mxu0 0.0
    %v1577 = vpop.f32.mrf.mxu0
    %v1578 = vadd.f32 0.0, %v1577
    %1579 = vdwg.mxu0
    %1580 = vmatpush.msra.mxu0 %v1534
    %1581 = vmatpush.msra.mxu0 %v1530
    %1582 = vmatpush.msra.mxu0 %v1526
    %1583 = vmatpush.msra.mxu0 %v1522
    %1584 = vmatpush.msra.mxu0 %v1518
    %1585 = vmatpush.msra.mxu0 %v1514
    %1586 = vmatpush.msra.mxu0 %v1510
    %1587 = vmatpush.msra.mxu0 %v1506
    %1588 = vmatpush.msra.mxu0 %v1502
    %1589 = vmatpush.msra.mxu0 %v1498
    %1590 = vmatpush.msra.mxu0 %v1494
    %1591 = vmatpush.msra.mxu0 %v1490
    %1592 = vmatpush.msra.mxu0 %v1486
    %1593 = vmatpush.msra.mxu0 %v1482
    %1594 = vmatpush.msra.mxu0 %v1478
    %1595 = vmatpush.msra.mxu0 %v1474
    %1596 = vmatmul.f32.gmra.mxu0 0.0
    %v1597 = vpop.f32.mrf.mxu0
    %v1598 = vadd.f32 0.0, %v1597
    %1599 = vdwg.mxu0
    %1600 = vmatpush.msra.mxu0 %v1535
    %1601 = vmatpush.msra.mxu0 %v1531
    %1602 = vmatpush.msra.mxu0 %v1527
    %1603 = vmatpush.msra.mxu0 %v1523
    %1604 = vmatpush.msra.mxu0 %v1519
    %1605 = vmatpush.msra.mxu0 %v1515
    %1606 = vmatpush.msra.mxu0 %v1511
    %1607 = vmatpush.msra.mxu0 %v1507
    %1608 = vmatpush.msra.mxu0 %v1503
    %1609 = vmatpush.msra.mxu0 %v1499
    %1610 = vmatpush.msra.mxu0 %v1495
    %1611 = vmatpush.msra.mxu0 %v1491
    %1612 = vmatpush.msra.mxu0 %v1487
    %1613 = vmatpush.msra.mxu0 %v1483
    %1614 = vmatpush.msra.mxu0 %v1479
    %1615 = vmatpush.msra.mxu0 %v1475
    %1616 = vmatmul.f32.gmra.mxu0 0.0
    %v1617 = vpop.f32.mrf.mxu0
    %v1618 = vadd.f32 0.0, %v1617
    %1619 = vdwg.mxu0
    %v1620 = vadd.f32 %v1536, %v1558
    %v1621 = vadd.f32 %v1537, %v1578
    %v1622 = vadd.f32 %v1538, %v1598
    %v1623 = vadd.f32 %v1539, %v1618
    %v1624 = vmul.f32 %v1620, 0.5
    %v1625 = vmul.f32 %v1621, 0.5
    %v1626 = vmul.f32 %v1622, 0.5
    %v1627 = vtanh.pop %v1624
    %v1628 = vtanh.pop %v1625
    %v1629 = vtanh.pop %v1626
    %v1630 = vmul.f32 %v1627, 0.5
    %v1631 = vmul.f32 %v1628, 0.5
    %v1632 = vmul.f32 %v1629, 0.5
    %v1633 = vadd.f32 %v1630, 0.5
    %v1634 = vadd.f32 %v1631, 0.5
    %v1635 = vadd.f32 %v1632, 0.5
    %v1636 = vtanh.pop %v1623
    %v1637 = vmul.f32 %v1634, 0.0
    %v1638 = vmul.f32 %v1633, %v1636
    %v1639 = vadd.f32 %v1637, %v1638
    %v1640 = vtanh.pop %v1639
    %v1641 = vmul.f32 %v1635, %v1640
    %1642 = vst [vmem:[#allocation2] sm:$0xff] %v1641
    %v1643 = vld [vmem:[#allocation3 + $0x20] sm:$0xff]
    %v1644 = vld [vmem:[#allocation3 + $0x28] sm:$0xff]
    %v1645 = vld [vmem:[#allocation3 + $0x30] sm:$0xff]
    %v1646 = vld [vmem:[#allocation3 + $0x38] sm:$0xff]
    %1647 = vmatpush.msra.mxu0 %v1532
    %1648 = vmatpush.msra.mxu0 %v1528
    %1649 = vmatpush.msra.mxu0 %v1524
    %1650 = vmatpush.msra.mxu0 %v1520
    %1651 = vmatpush.msra.mxu0 %v1516
    %1652 = vmatpush.msra.mxu0 %v1512
    %1653 = vmatpush.msra.mxu0 %v1508
    %1654 = vmatpush.msra.mxu0 %v1504
    %1655 = vmatpush.msra.mxu0 %v1500
    %1656 = vmatpush.msra.mxu0 %v1496
    %1657 = vmatpush.msra.mxu0 %v1492
    %1658 = vmatpush.msra.mxu0 %v1488
    %1659 = vmatpush.msra.mxu0 %v1484
    %1660 = vmatpush.msra.mxu0 %v1480
    %1661 = vmatpush.msra.mxu0 %v1476
    %1662 = vmatpush.msra.mxu0 %v1472
    %1663 = vmatmul.f32.gmra.mxu0 %v1641
    %v1664 = vpop.f32.mrf.mxu0
    %v1665 = vadd.f32 0.0, %v1664
    %1666 = vdwg.mxu0
    %1667 = vmatpush.msra.mxu0 %v1533
    %1668 = vmatpush.msra.mxu0 %v1529
    %1669 = vmatpush.msra.mxu0 %v1525
    %1670 = vmatpush.msra.mxu0 %v1521
    %1671 = vmatpush.msra.mxu0 %v1517
    %1672 = vmatpush.msra.mxu0 %v1513
    %1673 = vmatpush.msra.mxu0 %v1509
    %1674 = vmatpush.msra.mxu0 %v1505
    %1675 = vmatpush.msra.mxu0 %v1501
    %1676 = vmatpush.msra.mxu0 %v1497
    %1677 = vmatpush.msra.mxu0 %v1493
    %1678 = vmatpush.msra.mxu0 %v1489
    %1679 = vmatpush.msra.mxu0 %v1485
    %1680 = vmatpush.msra.mxu0 %v1481
    %1681 = vmatpush.msra.mxu0 %v1477
    %1682 = vmatpush.msra.mxu0 %v1473
    %1683 = vmatmul.f32.gmra.mxu0 %v1641
    %v1684 = vpop.f32.mrf.mxu0
    %v1685 = vadd.f32 0.0, %v1684
    %1686 = vdwg.mxu0
    %1687 = vmatpush.msra.mxu0 %v1534
    %1688 = vmatpush.msra.mxu0 %v1530
    %1689 = vmatpush.msra.mxu0 %v1526
    %1690 = vmatpush.msra.mxu0 %v1522
    %1691 = vmatpush.msra.mxu0 %v1518
    %1692 = vmatpush.msra.mxu0 %v1514
    %1693 = vmatpush.msra.mxu0 %v1510
    %1694 = vmatpush.msra.mxu0 %v1506
    %1695 = vmatpush.msra.mxu0 %v1502
    %1696 = vmatpush.msra.mxu0 %v1498
    %1697 = vmatpush.msra.mxu0 %v1494
    %1698 = vmatpush.msra.mxu0 %v1490
    %1699 = vmatpush.msra.mxu0 %v1486
    %1700 = vmatpush.msra.mxu0 %v1482
    %1701 = vmatpush.msra.mxu0 %v1478
    %1702 = vmatpush.msra.mxu0 %v1474
    %1703 = vmatmul.f32.gmra.mxu0 %v1641
    %v1704 = vpop.f32.mrf.mxu0
    %v1705 = vadd.f32 0.0, %v1704
    %1706 = vdwg.mxu0
    %1707 = vmatpush.msra.mxu0 %v1535
    %1708 = vmatpush.msra.mxu0 %v1531
    %1709 = vmatpush.msra.mxu0 %v1527
    %1710 = vmatpush.msra.mxu0 %v1523
    %1711 = vmatpush.msra.mxu0 %v1519
    %1712 = vmatpush.msra.mxu0 %v1515
    %1713 = vmatpush.msra.mxu0 %v1511
    %1714 = vmatpush.msra.mxu0 %v1507
    %1715 = vmatpush.msra.mxu0 %v1503
    %1716 = vmatpush.msra.mxu0 %v1499
    %1717 = vmatpush.msra.mxu0 %v1495
    %1718 = vmatpush.msra.mxu0 %v1491
    %1719 = vmatpush.msra.mxu0 %v1487
    %1720 = vmatpush.msra.mxu0 %v1483
    %1721 = vmatpush.msra.mxu0 %v1479
    %1722 = vmatpush.msra.mxu0 %v1475
    %1723 = vmatmul.f32.gmra.mxu0 %v1641
    %v1724 = vpop.f32.mrf.mxu0
    %v1725 = vadd.f32 0.0, %v1724
    %1726 = vdwg.mxu0
    %v1727 = vadd.f32 %v1643, %v1665
    %v1728 = vadd.f32 %v1644, %v1685
    %v1729 = vadd.f32 %v1645, %v1705
    %v1730 = vadd.f32 %v1646, %v1725
    %v1731 = vmul.f32 %v1727, 0.5
    %v1732 = vmul.f32 %v1728, 0.5
    %v1733 = vmul.f32 %v1729, 0.5
    %v1734 = vtanh.pop %v1731
    %v1735 = vtanh.pop %v1732
    %v1736 = vtanh.pop %v1733
    %v1737 = vmul.f32 %v1734, 0.5
    %v1738 = vmul.f32 %v1735, 0.5
    %v1739 = vmul.f32 %v1736, 0.5
    %v1740 = vadd.f32 %v1737, 0.5
    %v1741 = vadd.f32 %v1738, 0.5
    %v1742 = vadd.f32 %v1739, 0.5
    %v1743 = vtanh.pop %v1730
    %v1744 = vmul.f32 %v1741, %v1639
    %v1745 = vmul.f32 %v1740, %v1743
    %v1746 = vadd.f32 %v1744, %v1745
    %v1747 = vtanh.pop %v1746
    %v1748 = vmul.f32 %v1742, %v1747
    %1749 = vst [vmem:[#allocation2 + $0x8] sm:$0xff] %v1748
    %v1750 = vld [vmem:[#allocation3 + $0x40] sm:$0xff]
    %v1751 = vld [vmem:[#allocation3 + $0x48] sm:$0xff]
    %v1752 = vld [vmem:[#allocation3 + $0x50] sm:$0xff]
    %v1753 = vld [vmem:[#allocation3 + $0x58] sm:$0xff]
    %1754 = vmatpush.msra.mxu0 %v1532
    %1755 = vmatpush.msra.mxu0 %v1528
    %1756 = vmatpush.msra.mxu0 %v1524
    %1757 = vmatpush.msra.mxu0 %v1520
    %1758 = vmatpush.msra.mxu0 %v1516
    %1759 = vmatpush.msra.mxu0 %v1512
    %1760 = vmatpush.msra.mxu0 %v1508
    %1761 = vmatpush.msra.mxu0 %v1504
    %1762 = vmatpush.msra.mxu0 %v1500
    %1763 = vmatpush.msra.mxu0 %v1496
    %1764 = vmatpush.msra.mxu0 %v1492
    %1765 = vmatpush.msra.mxu0 %v1488
    %1766 = vmatpush.msra.mxu0 %v1484
    %1767 = vmatpush.msra.mxu0 %v1480
    %1768 = vmatpush.msra.mxu0 %v1476
    %1769 = vmatpush.msra.mxu0 %v1472
    %1770 = vmatmul.f32.gmra.mxu0 %v1748
    %v1771 = vpop.f32.mrf.mxu0
    %v1772 = vadd.f32 0.0, %v1771
    %1773 = vdwg.mxu0
    %1774 = vmatpush.msra.mxu0 %v1533
    %1775 = vmatpush.msra.mxu0 %v1529
    %1776 = vmatpush.msra.mxu0 %v1525
    %1777 = vmatpush.msra.mxu0 %v1521
    %1778 = vmatpush.msra.mxu0 %v1517
    %1779 = vmatpush.msra.mxu0 %v1513
    %1780 = vmatpush.msra.mxu0 %v1509
    %1781 = vmatpush.msra.mxu0 %v1505
    %1782 = vmatpush.msra.mxu0 %v1501
    %1783 = vmatpush.msra.mxu0 %v1497
    %1784 = vmatpush.msra.mxu0 %v1493
    %1785 = vmatpush.msra.mxu0 %v1489
    %1786 = vmatpush.msra.mxu0 %v1485
    %1787 = vmatpush.msra.mxu0 %v1481
    %1788 = vmatpush.msra.mxu0 %v1477
    %1789 = vmatpush.msra.mxu0 %v1473
    %1790 = vmatmul.f32.gmra.mxu0 %v1748
    %v1791 = vpop.f32.mrf.mxu0
    %v1792 = vadd.f32 0.0, %v1791
    %1793 = vdwg.mxu0
    %1794 = vmatpush.msra.mxu0 %v1534
    %1795 = vmatpush.msra.mxu0 %v1530
    %1796 = vmatpush.msra.mxu0 %v1526
    %1797 = vmatpush.msra.mxu0 %v1522
    %1798 = vmatpush.msra.mxu0 %v1518
    %1799 = vmatpush.msra.mxu0 %v1514
    %1800 = vmatpush.msra.mxu0 %v1510
    %1801 = vmatpush.msra.mxu0 %v1506
    %1802 = vmatpush.msra.mxu0 %v1502
    %1803 = vmatpush.msra.mxu0 %v1498
    %1804 = vmatpush.msra.mxu0 %v1494
    %1805 = vmatpush.msra.mxu0 %v1490
    %1806 = vmatpush.msra.mxu0 %v1486
    %1807 = vmatpush.msra.mxu0 %v1482
    %1808 = vmatpush.msra.mxu0 %v1478
    %1809 = vmatpush.msra.mxu0 %v1474
    %1810 = vmatmul.f32.gmra.mxu0 %v1748
    %v1811 = vpop.f32.mrf.mxu0
    %v1812 = vadd.f32 0.0, %v1811
    %1813 = vdwg.mxu0
    %1814 = vmatpush.msra.mxu0 %v1535
    %1815 = vmatpush.msra.mxu0 %v1531
    %1816 = vmatpush.msra.mxu0 %v1527
    %1817 = vmatpush.msra.mxu0 %v1523
    %1818 = vmatpush.msra.mxu0 %v1519
    %1819 = vmatpush.msra.mxu0 %v1515
    %1820 = vmatpush.msra.mxu0 %v1511
    %1821 = vmatpush.msra.mxu0 %v1507
    %1822 = vmatpush.msra.mxu0 %v1503
    %1823 = vmatpush.msra.mxu0 %v1499
    %1824 = vmatpush.msra.mxu0 %v1495
    %1825 = vmatpush.msra.mxu0 %v1491
    %1826 = vmatpush.msra.mxu0 %v1487
    %1827 = vmatpush.msra.mxu0 %v1483
    %1828 = vmatpush.msra.mxu0 %v1479
    %1829 = vmatpush.msra.mxu0 %v1475
    %1830 = vmatmul.f32.gmra.mxu0 %v1748
    %v1831 = vpop.f32.mrf.mxu0
    %v1832 = vadd.f32 0.0, %v1831
    %1833 = vdwg.mxu0
    %v1834 = vadd.f32 %v1750, %v1772
    %v1835 = vadd.f32 %v1751, %v1792
    %v1836 = vadd.f32 %v1752, %v1812
    %v1837 = vadd.f32 %v1753, %v1832
    %v1838 = vmul.f32 %v1834, 0.5
    %v1839 = vmul.f32 %v1835, 0.5
    %v1840 = vmul.f32 %v1836, 0.5
    %v1841 = vtanh.pop %v1838
    %v1842 = vtanh.pop %v1839
    %v1843 = vtanh.pop %v1840
    %v1844 = vmul.f32 %v1841, 0.5
    %v1845 = vmul.f32 %v1842, 0.5
    %v1846 = vmul.f32 %v1843, 0.5
    %v1847 = vadd.f32 %v1844, 0.5
    %v1848 = vadd.f32 %v1845, 0.5
    %v1849 = vadd.f32 %v1846, 0.5
    %v1850 = vtanh.pop %v1837
    %v1851 = vmul.f32 %v1848, %v1746
    %v1852 = vmul.f32 %v1847, %v1850
    %v1853 = vadd.f32 %v1851, %v1852
    %v1854 = vtanh.pop %v1853
    %v1855 = vmul.f32 %v1849, %v1854
    %1856 = vst [vmem:[#allocation2 + $0x10] sm:$0xff] %v1855
    %v1857 = vld [vmem:[#allocation3 + $0x60] sm:$0xff]
    %v1858 = vld [vmem:[#allocation3 + $0x68] sm:$0xff]
    %v1859 = vld [vmem:[#allocation3 + $0x70] sm:$0xff]
    %v1860 = vld [vmem:[#allocation3 + $0x78] sm:$0xff]
    %1861 = vmatpush.msra.mxu0 %v1532
    %1862 = vmatpush.msra.mxu0 %v1528
    %1863 = vmatpush.msra.mxu0 %v1524
    %1864 = vmatpush.msra.mxu0 %v1520
    %1865 = vmatpush.msra.mxu0 %v1516
    %1866 = vmatpush.msra.mxu0 %v1512
    %1867 = vmatpush.msra.mxu0 %v1508
    %1868 = vmatpush.msra.mxu0 %v1504
    %1869 = vmatpush.msra.mxu0 %v1500
    %1870 = vmatpush.msra.mxu0 %v1496
    %1871 = vmatpush.msra.mxu0 %v1492
    %1872 = vmatpush.msra.mxu0 %v1488
    %1873 = vmatpush.msra.mxu0 %v1484
    %1874 = vmatpush.msra.mxu0 %v1480
    %1875 = vmatpush.msra.mxu0 %v1476
    %1876 = vmatpush.msra.mxu0 %v1472
    %1877 = vmatmul.f32.gmra.mxu0 %v1855
    %v1878 = vpop.f32.mrf.mxu0
    %v1879 = vadd.f32 0.0, %v1878
    %1880 = vdwg.mxu0
    %1881 = vmatpush.msra.mxu0 %v1533
    %1882 = vmatpush.msra.mxu0 %v1529
    %1883 = vmatpush.msra.mxu0 %v1525
    %1884 = vmatpush.msra.mxu0 %v1521
    %1885 = vmatpush.msra.mxu0 %v1517
    %1886 = vmatpush.msra.mxu0 %v1513
    %1887 = vmatpush.msra.mxu0 %v1509
    %1888 = vmatpush.msra.mxu0 %v1505
    %1889 = vmatpush.msra.mxu0 %v1501
    %1890 = vmatpush.msra.mxu0 %v1497
    %1891 = vmatpush.msra.mxu0 %v1493
    %1892 = vmatpush.msra.mxu0 %v1489
    %1893 = vmatpush.msra.mxu0 %v1485
    %1894 = vmatpush.msra.mxu0 %v1481
    %1895 = vmatpush.msra.mxu0 %v1477
    %1896 = vmatpush.msra.mxu0 %v1473
    %1897 = vmatmul.f32.gmra.mxu0 %v1855
    %v1898 = vpop.f32.mrf.mxu0
    %v1899 = vadd.f32 0.0, %v1898
    %1900 = vdwg.mxu0
    %1901 = vmatpush.msra.mxu0 %v1534
    %1902 = vmatpush.msra.mxu0 %v1530
    %1903 = vmatpush.msra.mxu0 %v1526
    %1904 = vmatpush.msra.mxu0 %v1522
    %1905 = vmatpush.msra.mxu0 %v1518
    %1906 = vmatpush.msra.mxu0 %v1514
    %1907 = vmatpush.msra.mxu0 %v1510
    %1908 = vmatpush.msra.mxu0 %v1506
    %1909 = vmatpush.msra.mxu0 %v1502
    %1910 = vmatpush.msra.mxu0 %v1498
    %1911 = vmatpush.msra.mxu0 %v1494
    %1912 = vmatpush.msra.mxu0 %v1490
    %1913 = vmatpush.msra.mxu0 %v1486
    %1914 = vmatpush.msra.mxu0 %v1482
    %1915 = vmatpush.msra.mxu0 %v1478
    %1916 = vmatpush.msra.mxu0 %v1474
    %1917 = vmatmul.f32.gmra.mxu0 %v1855
    %v1918 = vpop.f32.mrf.mxu0
    %v1919 = vadd.f32 0.0, %v1918
    %1920 = vdwg.mxu0
    %1921 = vmatpush.msra.mxu0 %v1535
    %1922 = vmatpush.msra.mxu0 %v1531
    %1923 = vmatpush.msra.mxu0 %v1527
    %1924 = vmatpush.msra.mxu0 %v1523
    %1925 = vmatpush.msra.mxu0 %v1519
    %1926 = vmatpush.msra.mxu0 %v1515
    %1927 = vmatpush.msra.mxu0 %v1511
    %1928 = vmatpush.msra.mxu0 %v1507
    %1929 = vmatpush.msra.mxu0 %v1503
    %1930 = vmatpush.msra.mxu0 %v1499
    %1931 = vmatpush.msra.mxu0 %v1495
    %1932 = vmatpush.msra.mxu0 %v1491
    %1933 = vmatpush.msra.mxu0 %v1487
    %1934 = vmatpush.msra.mxu0 %v1483
    %1935 = vmatpush.msra.mxu0 %v1479
    %1936 = vmatpush.msra.mxu0 %v1475
    %1937 = vmatmul.f32.gmra.mxu0 %v1855
    %v1938 = vpop.f32.mrf.mxu0
    %v1939 = vadd.f32 0.0, %v1938
    %1940 = vdwg.mxu0
    %v1941 = vadd.f32 %v1857, %v1879
    %v1942 = vadd.f32 %v1858, %v1899
    %v1943 = vadd.f32 %v1859, %v1919
    %v1944 = vadd.f32 %v1860, %v1939
    %v1945 = vmul.f32 %v1941, 0.5
    %v1946 = vmul.f32 %v1942, 0.5
    %v1947 = vmul.f32 %v1943, 0.5
    %v1948 = vtanh.pop %v1945
    %v1949 = vtanh.pop %v1946
    %v1950 = vtanh.pop %v1947
    %v1951 = vmul.f32 %v1948, 0.5
    %v1952 = vmul.f32 %v1949, 0.5
    %v1953 = vmul.f32 %v1950, 0.5
    %v1954 = vadd.f32 %v1951, 0.5
    %v1955 = vadd.f32 %v1952, 0.5
    %v1956 = vadd.f32 %v1953, 0.5
    %v1957 = vtanh.pop %v1944
    %v1958 = vmul.f32 %v1955, %v1853
    %v1959 = vmul.f32 %v1954, %v1957
    %v1960 = vadd.f32 %v1958, %v1959
    %v1961 = vtanh.pop %v1960
    %v1962 = vmul.f32 %v1956, %v1961
    %1963 = vst [vmem:[#allocation2 + $0x18] sm:$0xff] %v1962
    %v1964 = vld [vmem:[#allocation3 + $0x80] sm:$0xff]
    %v1965 = vld [vmem:[#allocation3 + $0x88] sm:$0xff]
    %v1966 = vld [vmem:[#allocation3 + $0x90] sm:$0xff]
    %v1967 = vld [vmem:[#allocation3 + $0x98] sm:$0xff]
    %1968 = vmatpush.msra.mxu0 %v1532
    %1969 = vmatpush.msra.mxu0 %v1528
    %1970 = vmatpush.msra.mxu0 %v1524
    %1971 = vmatpush.msra.mxu0 %v1520
    %1972 = vmatpush.msra.mxu0 %v1516
    %1973 = vmatpush.msra.mxu0 %v1512
    %1974 = vmatpush.msra.mxu0 %v1508
    %1975 = vmatpush.msra.mxu0 %v1504
    %1976 = vmatpush.msra.mxu0 %v1500
    %1977 = vmatpush.msra.mxu0 %v1496
    %1978 = vmatpush.msra.mxu0 %v1492
    %1979 = vmatpush.msra.mxu0 %v1488
    %1980 = vmatpush.msra.mxu0 %v1484
    %1981 = vmatpush.msra.mxu0 %v1480
    %1982 = vmatpush.msra.mxu0 %v1476
    %1983 = vmatpush.msra.mxu0 %v1472
    %1984 = vmatmul.f32.gmra.mxu0 %v1962
    %v1985 = vpop.f32.mrf.mxu0
    %v1986 = vadd.f32 0.0, %v1985
    %1987 = vdwg.mxu0
    %1988 = vmatpush.msra.mxu0 %v1533
    %1989 = vmatpush.msra.mxu0 %v1529
    %1990 = vmatpush.msra.mxu0 %v1525
    %1991 = vmatpush.msra.mxu0 %v1521
    %1992 = vmatpush.msra.mxu0 %v1517
    %1993 = vmatpush.msra.mxu0 %v1513
    %1994 = vmatpush.msra.mxu0 %v1509
    %1995 = vmatpush.msra.mxu0 %v1505
    %1996 = vmatpush.msra.mxu0 %v1501
    %1997 = vmatpush.msra.mxu0 %v1497
    %1998 = vmatpush.msra.mxu0 %v1493
    %1999 = vmatpush.msra.mxu0 %v1489
    %2000 = vmatpush.msra.mxu0 %v1485
    %2001 = vmatpush.msra.mxu0 %v1481
    %2002 = vmatpush.msra.mxu0 %v1477
    %2003 = vmatpush.msra.mxu0 %v1473
    %2004 = vmatmul.f32.gmra.mxu0 %v1962
    %v2005 = vpop.f32.mrf.mxu0
    %v2006 = vadd.f32 0.0, %v2005
    %2007 = vdwg.mxu0
    %2008 = vmatpush.msra.mxu0 %v1534
    %2009 = vmatpush.msra.mxu0 %v1530
    %2010 = vmatpush.msra.mxu0 %v1526
    %2011 = vmatpush.msra.mxu0 %v1522
    %2012 = vmatpush.msra.mxu0 %v1518
    %2013 = vmatpush.msra.mxu0 %v1514
    %2014 = vmatpush.msra.mxu0 %v1510
    %2015 = vmatpush.msra.mxu0 %v1506
    %2016 = vmatpush.msra.mxu0 %v1502
    %2017 = vmatpush.msra.mxu0 %v1498
    %2018 = vmatpush.msra.mxu0 %v1494
    %2019 = vmatpush.msra.mxu0 %v1490
    %2020 = vmatpush.msra.mxu0 %v1486
    %2021 = vmatpush.msra.mxu0 %v1482
    %2022 = vmatpush.msra.mxu0 %v1478
    %2023 = vmatpush.msra.mxu0 %v1474
    %2024 = vmatmul.f32.gmra.mxu0 %v1962
    %v2025 = vpop.f32.mrf.mxu0
    %v2026 = vadd.f32 0.0, %v2025
    %2027 = vdwg.mxu0
    %2028 = vmatpush.msra.mxu0 %v1535
    %2029 = vmatpush.msra.mxu0 %v1531
    %2030 = vmatpush.msra.mxu0 %v1527
    %2031 = vmatpush.msra.mxu0 %v1523
    %2032 = vmatpush.msra.mxu0 %v1519
    %2033 = vmatpush.msra.mxu0 %v1515
    %2034 = vmatpush.msra.mxu0 %v1511
    %2035 = vmatpush.msra.mxu0 %v1507
    %2036 = vmatpush.msra.mxu0 %v1503
    %2037 = vmatpush.msra.mxu0 %v1499
    %2038 = vmatpush.msra.mxu0 %v1495
    %2039 = vmatpush.msra.mxu0 %v1491
    %2040 = vmatpush.msra.mxu0 %v1487
    %2041 = vmatpush.msra.mxu0 %v1483
    %2042 = vmatpush.msra.mxu0 %v1479
    %2043 = vmatpush.msra.mxu0 %v1475
    %2044 = vmatmul.f32.gmra.mxu0 %v1962
    %v2045 = vpop.f32.mrf.mxu0
    %v2046 = vadd.f32 0.0, %v2045
    %2047 = vdwg.mxu0
    %v2048 = vadd.f32 %v1964, %v1986
    %v2049 = vadd.f32 %v1965, %v2006
    %v2050 = vadd.f32 %v1966, %v2026
    %v2051 = vadd.f32 %v1967, %v2046
    %v2052 = vmul.f32 %v2048, 0.5
    %v2053 = vmul.f32 %v2049, 0.5
    %v2054 = vmul.f32 %v2050, 0.5
    %v2055 = vtanh.pop %v2052
    %v2056 = vtanh.pop %v2053
    %v2057 = vtanh.pop %v2054
    %v2058 = vmul.f32 %v2055, 0.5
    %v2059 = vmul.f32 %v2056, 0.5
    %v2060 = vmul.f32 %v2057, 0.5
    %v2061 = vadd.f32 %v2058, 0.5
    %v2062 = vadd.f32 %v2059, 0.5
    %v2063 = vadd.f32 %v2060, 0.5
    %v2064 = vtanh.pop %v2051
    %v2065 = vmul.f32 %v2062, %v1960
    %v2066 = vmul.f32 %v2061, %v2064
    %v2067 = vadd.f32 %v2065, %v2066
    %v2068 = vtanh.pop %v2067
    %v2069 = vmul.f32 %v2063, %v2068
    %2070 = vst [vmem:[#allocation2 + $0x20] sm:$0xff] %v2069
    %v2071 = vld [vmem:[#allocation3 + $0xa0] sm:$0xff]
    %v2072 = vld [vmem:[#allocation3 + $0xa8] sm:$0xff]
    %v2073 = vld [vmem:[#allocation3 + $0xb0] sm:$0xff]
    %v2074 = vld [vmem:[#allocation3 + $0xb8] sm:$0xff]
    %2075 = vmatpush.msra.mxu0 %v1532
    %2076 = vmatpush.msra.mxu0 %v1528
    %2077 = vmatpush.msra.mxu0 %v1524
    %2078 = vmatpush.msra.mxu0 %v1520
    %2079 = vmatpush.msra.mxu0 %v1516
    %2080 = vmatpush.msra.mxu0 %v1512
    %2081 = vmatpush.msra.mxu0 %v1508
    %2082 = vmatpush.msra.mxu0 %v1504
    %2083 = vmatpush.msra.mxu0 %v1500
    %2084 = vmatpush.msra.mxu0 %v1496
    %2085 = vmatpush.msra.mxu0 %v1492
    %2086 = vmatpush.msra.mxu0 %v1488
    %2087 = vmatpush.msra.mxu0 %v1484
    %2088 = vmatpush.msra.mxu0 %v1480
    %2089 = vmatpush.msra.mxu0 %v1476
    %2090 = vmatpush.msra.mxu0 %v1472
    %2091 = vmatmul.f32.gmra.mxu0 %v2069
    %v2092 = vpop.f32.mrf.mxu0
    %v2093 = vadd.f32 0.0, %v2092
    %2094 = vdwg.mxu0
    %2095 = vmatpush.msra.mxu0 %v1533
    %2096 = vmatpush.msra.mxu0 %v1529
    %2097 = vmatpush.msra.mxu0 %v1525
    %2098 = vmatpush.msra.mxu0 %v1521
    %2099 = vmatpush.msra.mxu0 %v1517
    %2100 = vmatpush.msra.mxu0 %v1513
    %2101 = vmatpush.msra.mxu0 %v1509
    %2102 = vmatpush.msra.mxu0 %v1505
    %2103 = vmatpush.msra.mxu0 %v1501
    %2104 = vmatpush.msra.mxu0 %v1497
    %2105 = vmatpush.msra.mxu0 %v1493
    %2106 = vmatpush.msra.mxu0 %v1489
    %2107 = vmatpush.msra.mxu0 %v1485
    %2108 = vmatpush.msra.mxu0 %v1481
    %2109 = vmatpush.msra.mxu0 %v1477
    %2110 = vmatpush.msra.mxu0 %v1473
    %2111 = vmatmul.f32.gmra.mxu0 %v2069
    %v2112 = vpop.f32.mrf.mxu0
    %v2113 = vadd.f32 0.0, %v2112
    %2114 = vdwg.mxu0
    %2115 = vmatpush.msra.mxu0 %v1534
    %2116 = vmatpush.msra.mxu0 %v1530
    %2117 = vmatpush.msra.mxu0 %v1526
    %2118 = vmatpush.msra.mxu0 %v1522
    %2119 = vmatpush.msra.mxu0 %v1518
    %2120 = vmatpush.msra.mxu0 %v1514
    %2121 = vmatpush.msra.mxu0 %v1510
    %2122 = vmatpush.msra.mxu0 %v1506
    %2123 = vmatpush.msra.mxu0 %v1502
    %2124 = vmatpush.msra.mxu0 %v1498
    %2125 = vmatpush.msra.mxu0 %v1494
    %2126 = vmatpush.msra.mxu0 %v1490
    %2127 = vmatpush.msra.mxu0 %v1486
    %2128 = vmatpush.msra.mxu0 %v1482
    %2129 = vmatpush.msra.mxu0 %v1478
    %2130 = vmatpush.msra.mxu0 %v1474
    %2131 = vmatmul.f32.gmra.mxu0 %v2069
    %v2132 = vpop.f32.mrf.mxu0
    %v2133 = vadd.f32 0.0, %v2132
    %2134 = vdwg.mxu0
    %2135 = vmatpush.msra.mxu0 %v1535
    %2136 = vmatpush.msra.mxu0 %v1531
    %2137 = vmatpush.msra.mxu0 %v1527
    %2138 = vmatpush.msra.mxu0 %v1523
    %2139 = vmatpush.msra.mxu0 %v1519
    %2140 = vmatpush.msra.mxu0 %v1515
    %2141 = vmatpush.msra.mxu0 %v1511
    %2142 = vmatpush.msra.mxu0 %v1507
    %2143 = vmatpush.msra.mxu0 %v1503
    %2144 = vmatpush.msra.mxu0 %v1499
    %2145 = vmatpush.msra.mxu0 %v1495
    %2146 = vmatpush.msra.mxu0 %v1491
    %2147 = vmatpush.msra.mxu0 %v1487
    %2148 = vmatpush.msra.mxu0 %v1483
    %2149 = vmatpush.msra.mxu0 %v1479
    %2150 = vmatpush.msra.mxu0 %v1475
    %2151 = vmatmul.f32.gmra.mxu0 %v2069
    %v2152 = vpop.f32.mrf.mxu0
    %v2153 = vadd.f32 0.0, %v2152
    %2154 = vdwg.mxu0
    %v2155 = vadd.f32 %v2071, %v2093
    %v2156 = vadd.f32 %v2072, %v2113
    %v2157 = vadd.f32 %v2073, %v2133
    %v2158 = vadd.f32 %v2074, %v2153
    %v2159 = vmul.f32 %v2155, 0.5
    %v2160 = vmul.f32 %v2156, 0.5
    %v2161 = vmul.f32 %v2157, 0.5
    %v2162 = vtanh.pop %v2159
    %v2163 = vtanh.pop %v2160
    %v2164 = vtanh.pop %v2161
    %v2165 = vmul.f32 %v2162, 0.5
    %v2166 = vmul.f32 %v2163, 0.5
    %v2167 = vmul.f32 %v2164, 0.5
    %v2168 = vadd.f32 %v2165, 0.5
    %v2169 = vadd.f32 %v2166, 0.5
    %v2170 = vadd.f32 %v2167, 0.5
    %v2171 = vtanh.pop %v2158
    %v2172 = vmul.f32 %v2169, %v2067
    %v2173 = vmul.f32 %v2168, %v2171
    %v2174 = vadd.f32 %v2172, %v2173
    %v2175 = vtanh.pop %v2174
    %v2176 = vmul.f32 %v2170, %v2175
    %2177 = vst [vmem:[#allocation2 + $0x28] sm:$0xff] %v2176
    %v2178 = vld [vmem:[#allocation3 + $0xc0] sm:$0xff]
    %v2179 = vld [vmem:[#allocation3 + $0xc8] sm:$0xff]
    %v2180 = vld [vmem:[#allocation3 + $0xd0] sm:$0xff]
    %v2181 = vld [vmem:[#allocation3 + $0xd8] sm:$0xff]
    %2182 = vmatpush.msra.mxu0 %v1532
    %2183 = vmatpush.msra.mxu0 %v1528
    %2184 = vmatpush.msra.mxu0 %v1524
    %2185 = vmatpush.msra.mxu0 %v1520
    %2186 = vmatpush.msra.mxu0 %v1516
    %2187 = vmatpush.msra.mxu0 %v1512
    %2188 = vmatpush.msra.mxu0 %v1508
    %2189 = vmatpush.msra.mxu0 %v1504
    %2190 = vmatpush.msra.mxu0 %v1500
    %2191 = vmatpush.msra.mxu0 %v1496
    %2192 = vmatpush.msra.mxu0 %v1492
    %2193 = vmatpush.msra.mxu0 %v1488
    %2194 = vmatpush.msra.mxu0 %v1484
    %2195 = vmatpush.msra.mxu0 %v1480
    %2196 = vmatpush.msra.mxu0 %v1476
    %2197 = vmatpush.msra.mxu0 %v1472
    %2198 = vmatmul.f32.gmra.mxu0 %v2176
    %v2199 = vpop.f32.mrf.mxu0
    %v2200 = vadd.f32 0.0, %v2199
    %2201 = vdwg.mxu0
    %2202 = vmatpush.msra.mxu0 %v1533
    %2203 = vmatpush.msra.mxu0 %v1529
    %2204 = vmatpush.msra.mxu0 %v1525
    %2205 = vmatpush.msra.mxu0 %v1521
    %2206 = vmatpush.msra.mxu0 %v1517
    %2207 = vmatpush.msra.mxu0 %v1513
    %2208 = vmatpush.msra.mxu0 %v1509
    %2209 = vmatpush.msra.mxu0 %v1505
    %2210 = vmatpush.msra.mxu0 %v1501
    %2211 = vmatpush.msra.mxu0 %v1497
    %2212 = vmatpush.msra.mxu0 %v1493
    %2213 = vmatpush.msra.mxu0 %v1489
    %2214 = vmatpush.msra.mxu0 %v1485
    %2215 = vmatpush.msra.mxu0 %v1481
    %2216 = vmatpush.msra.mxu0 %v1477
    %2217 = vmatpush.msra.mxu0 %v1473
    %2218 = vmatmul.f32.gmra.mxu0 %v2176
    %v2219 = vpop.f32.mrf.mxu0
    %v2220 = vadd.f32 0.0, %v2219
    %2221 = vdwg.mxu0
    %2222 = vmatpush.msra.mxu0 %v1534
    %2223 = vmatpush.msra.mxu0 %v1530
    %2224 = vmatpush.msra.mxu0 %v1526
    %2225 = vmatpush.msra.mxu0 %v1522
    %2226 = vmatpush.msra.mxu0 %v1518
    %2227 = vmatpush.msra.mxu0 %v1514
    %2228 = vmatpush.msra.mxu0 %v1510
    %2229 = vmatpush.msra.mxu0 %v1506
    %2230 = vmatpush.msra.mxu0 %v1502
    %2231 = vmatpush.msra.mxu0 %v1498
    %2232 = vmatpush.msra.mxu0 %v1494
    %2233 = vmatpush.msra.mxu0 %v1490
    %2234 = vmatpush.msra.mxu0 %v1486
    %2235 = vmatpush.msra.mxu0 %v1482
    %2236 = vmatpush.msra.mxu0 %v1478
    %2237 = vmatpush.msra.mxu0 %v1474
    %2238 = vmatmul.f32.gmra.mxu0 %v2176
    %v2239 = vpop.f32.mrf.mxu0
    %v2240 = vadd.f32 0.0, %v2239
    %2241 = vdwg.mxu0
    %2242 = vmatpush.msra.mxu0 %v1535
    %2243 = vmatpush.msra.mxu0 %v1531
    %2244 = vmatpush.msra.mxu0 %v1527
    %2245 = vmatpush.msra.mxu0 %v1523
    %2246 = vmatpush.msra.mxu0 %v1519
    %2247 = vmatpush.msra.mxu0 %v1515
    %2248 = vmatpush.msra.mxu0 %v1511
    %2249 = vmatpush.msra.mxu0 %v1507
    %2250 = vmatpush.msra.mxu0 %v1503
    %2251 = vmatpush.msra.mxu0 %v1499
    %2252 = vmatpush.msra.mxu0 %v1495
    %2253 = vmatpush.msra.mxu0 %v1491
    %2254 = vmatpush.msra.mxu0 %v1487
    %2255 = vmatpush.msra.mxu0 %v1483
    %2256 = vmatpush.msra.mxu0 %v1479
    %2257 = vmatpush.msra.mxu0 %v1475
    %2258 = vmatmul.f32.gmra.mxu0 %v2176
    %v2259 = vpop.f32.mrf.mxu0
    %v2260 = vadd.f32 0.0, %v2259
    %2261 = vdwg.mxu0
    %v2262 = vadd.f32 %v2178, %v2200
    %v2263 = vadd.f32 %v2179, %v2220
    %v2264 = vadd.f32 %v2180, %v2240
    %v2265 = vadd.f32 %v2181, %v2260
    %v2266 = vmul.f32 %v2262, 0.5
    %v2267 = vmul.f32 %v2263, 0.5
    %v2268 = vmul.f32 %v2264, 0.5
    %v2269 = vtanh.pop %v2266
    %v2270 = vtanh.pop %v2267
    %v2271 = vtanh.pop %v2268
    %v2272 = vmul.f32 %v2269, 0.5
    %v2273 = vmul.f32 %v2270, 0.5
    %v2274 = vmul.f32 %v2271, 0.5
    %v2275 = vadd.f32 %v2272, 0.5
    %v2276 = vadd.f32 %v2273, 0.5
    %v2277 = vadd.f32 %v2274, 0.5
    %v2278 = vtanh.pop %v2265
    %v2279 = vmul.f32 %v2276, %v2174
    %v2280 = vmul.f32 %v2275, %v2278
    %v2281 = vadd.f32 %v2279, %v2280
    %v2282 = vtanh.pop %v2281
    %v2283 = vmul.f32 %v2277, %v2282
    %2284 = vst [vmem:[#allocation2 + $0x30] sm:$0xff] %v2283
    %v2285 = vld [vmem:[#allocation3 + $0xe0] sm:$0xff]
    %v2286 = vld [vmem:[#allocation3 + $0xe8] sm:$0xff]
    %v2287 = vld [vmem:[#allocation3 + $0xf0] sm:$0xff]
    %v2288 = vld [vmem:[#allocation3 + $0xf8] sm:$0xff]
    %2289 = vmatpush.msra.mxu0 %v1532
    %2290 = vmatpush.msra.mxu0 %v1528
    %2291 = vmatpush.msra.mxu0 %v1524
    %2292 = vmatpush.msra.mxu0 %v1520
    %2293 = vmatpush.msra.mxu0 %v1516
    %2294 = vmatpush.msra.mxu0 %v1512
    %2295 = vmatpush.msra.mxu0 %v1508
    %2296 = vmatpush.msra.mxu0 %v1504
    %2297 = vmatpush.msra.mxu0 %v1500
    %2298 = vmatpush.msra.mxu0 %v1496
    %2299 = vmatpush.msra.mxu0 %v1492
    %2300 = vmatpush.msra.mxu0 %v1488
    %2301 = vmatpush.msra.mxu0 %v1484
    %2302 = vmatpush.msra.mxu0 %v1480
    %2303 = vmatpush.msra.mxu0 %v1476
    %2304 = vmatpush.msra.mxu0 %v1472
    %2305 = vmatmul.f32.gmra.mxu0 %v2283
    %v2306 = vpop.f32.mrf.mxu0
    %v2307 = vadd.f32 0.0, %v2306
    %2308 = vdwg.mxu0
    %2309 = vmatpush.msra.mxu0 %v1533
    %2310 = vmatpush.msra.mxu0 %v1529
    %2311 = vmatpush.msra.mxu0 %v1525
    %2312 = vmatpush.msra.mxu0 %v1521
    %2313 = vmatpush.msra.mxu0 %v1517
    %2314 = vmatpush.msra.mxu0 %v1513
    %2315 = vmatpush.msra.mxu0 %v1509
    %2316 = vmatpush.msra.mxu0 %v1505
    %2317 = vmatpush.msra.mxu0 %v1501
    %2318 = vmatpush.msra.mxu0 %v1497
    %2319 = vmatpush.msra.mxu0 %v1493
    %2320 = vmatpush.msra.mxu0 %v1489
    %2321 = vmatpush.msra.mxu0 %v1485
    %2322 = vmatpush.msra.mxu0 %v1481
    %2323 = vmatpush.msra.mxu0 %v1477
    %2324 = vmatpush.msra.mxu0 %v1473
    %2325 = vmatmul.f32.gmra.mxu0 %v2283
    %v2326 = vpop.f32.mrf.mxu0
    %v2327 = vadd.f32 0.0, %v2326
    %2328 = vdwg.mxu0
    %2329 = vmatpush.msra.mxu0 %v1534
    %2330 = vmatpush.msra.mxu0 %v1530
    %2331 = vmatpush.msra.mxu0 %v1526
    %2332 = vmatpush.msra.mxu0 %v1522
    %2333 = vmatpush.msra.mxu0 %v1518
    %2334 = vmatpush.msra.mxu0 %v1514
    %2335 = vmatpush.msra.mxu0 %v1510
    %2336 = vmatpush.msra.mxu0 %v1506
    %2337 = vmatpush.msra.mxu0 %v1502
    %2338 = vmatpush.msra.mxu0 %v1498
    %2339 = vmatpush.msra.mxu0 %v1494
    %2340 = vmatpush.msra.mxu0 %v1490
    %2341 = vmatpush.msra.mxu0 %v1486
    %2342 = vmatpush.msra.mxu0 %v1482
    %2343 = vmatpush.msra.mxu0 %v1478
    %2344 = vmatpush.msra.mxu0 %v1474
    %2345 = vmatmul.f32.gmra.mxu0 %v2283
    %v2346 = vpop.f32.mrf.mxu0
    %v2347 = vadd.f32 0.0, %v2346
    %2348 = vdwg.mxu0
    %2349 = vmatpush.msra.mxu0 %v1535
    %2350 = vmatpush.msra.mxu0 %v1531
    %2351 = vmatpush.msra.mxu0 %v1527
    %2352 = vmatpush.msra.mxu0 %v1523
    %2353 = vmatpush.msra.mxu0 %v1519
    %2354 = vmatpush.msra.mxu0 %v1515
    %2355 = vmatpush.msra.mxu0 %v1511
    %2356 = vmatpush.msra.mxu0 %v1507
    %2357 = vmatpush.msra.mxu0 %v1503
    %2358 = vmatpush.msra.mxu0 %v1499
    %2359 = vmatpush.msra.mxu0 %v1495
    %2360 = vmatpush.msra.mxu0 %v1491
    %2361 = vmatpush.msra.mxu0 %v1487
    %2362 = vmatpush.msra.mxu0 %v1483
    %2363 = vmatpush.msra.mxu0 %v1479
    %2364 = vmatpush.msra.mxu0 %v1475
    %2365 = vmatmul.f32.gmra.mxu0 %v2283
    %v2366 = vpop.f32.mrf.mxu0
    %v2367 = vadd.f32 0.0, %v2366
    %2368 = vdwg.mxu0
    %v2369 = vadd.f32 %v2285, %v2307
    %v2370 = vadd.f32 %v2286, %v2327
    %v2371 = vadd.f32 %v2287, %v2347
    %v2372 = vadd.f32 %v2288, %v2367
    %v2373 = vmul.f32 %v2369, 0.5
    %v2374 = vmul.f32 %v2370, 0.5
    %v2375 = vmul.f32 %v2371, 0.5
    %v2376 = vtanh.pop %v2373
    %v2377 = vtanh.pop %v2374
    %v2378 = vtanh.pop %v2375
    %v2379 = vmul.f32 %v2376, 0.5
    %v2380 = vmul.f32 %v2377, 0.5
    %v2381 = vmul.f32 %v2378, 0.5
    %v2382 = vadd.f32 %v2379, 0.5
    %v2383 = vadd.f32 %v2380, 0.5
    %v2384 = vadd.f32 %v2381, 0.5
    %v2385 = vtanh.pop %v2372
    %v2386 = vmul.f32 %v2383, %v2281
    %v2387 = vmul.f32 %v2382, %v2385
    %v2388 = vadd.f32 %v2386, %v2387
    %v2389 = vtanh.pop %v2388
    %v2390 = vmul.f32 %v2384, %v2389
    %2391 = vst [vmem:[#allocation2 + $0x38] sm:$0xff] %v2390
    %v2392 = vld [vmem:[#allocation2] sm:$0xff]
    %v2393 = vld [vmem:[#allocation2 + $0x8] sm:$0xff]
    %v2394 = vld [vmem:[#allocation2 + $0x10] sm:$0xff]
    %v2395 = vld [vmem:[#allocation2 + $0x18] sm:$0xff]
    %v2396 = vld [vmem:[#allocation2 + $0x20] sm:$0xff]
    %v2397 = vld [vmem:[#allocation2 + $0x28] sm:$0xff]
    %v2398 = vld [vmem:[#allocation2 + $0x30] sm:$0xff]
    %v2399 = vld [vmem:[#allocation2 + $0x38] sm:$0xff]
    %v2400 = vld [vmem:[#allocation12] sm:$0xff]
    %v2401 = vld [vmem:[#allocation12 + $0x8] sm:$0xff]
    %v2402 = vld [vmem:[#allocation12 + $0x10] sm:$0xff]
    %v2403 = vld [vmem:[#allocation12 + $0x18] sm:$0xff]
    %v2404 = vld [vmem:[#allocation12 + $0x20] sm:$0xff]
    %v2405 = vld [vmem:[#allocation12 + $0x28] sm:$0xff]
    %v2406 = vld [vmem:[#allocation12 + $0x30] sm:$0xff]
    %v2407 = vld [vmem:[#allocation12 + $0x38] sm:$0xff]
    %v2408 = vld [vmem:[#allocation12 + $0x40] sm:$0xff]
    %v2409 = vld [vmem:[#allocation12 + $0x48] sm:$0xff]
    %v2410 = vld [vmem:[#allocation12 + $0x50] sm:$0xff]
    %v2411 = vld [vmem:[#allocation12 + $0x58] sm:$0xff]
    %v2412 = vld [vmem:[#allocation12 + $0x60] sm:$0xff]
    %v2413 = vld [vmem:[#allocation12 + $0x68] sm:$0xff]
    %v2414 = vld [vmem:[#allocation12 + $0x70] sm:$0xff]
    %v2415 = vld [vmem:[#allocation12 + $0x78] sm:$0xff]
    %v2416 = vld [vmem:[#allocation12 + $0x80] sm:$0xff]
    %v2417 = vld [vmem:[#allocation12 + $0x88] sm:$0xff]
    %v2418 = vld [vmem:[#allocation12 + $0x90] sm:$0xff]
    %v2419 = vld [vmem:[#allocation12 + $0x98] sm:$0xff]
    %v2420 = vld [vmem:[#allocation12 + $0xa0] sm:$0xff]
    %v2421 = vld [vmem:[#allocation12 + $0xa8] sm:$0xff]
    %v2422 = vld [vmem:[#allocation12 + $0xb0] sm:$0xff]
    %v2423 = vld [vmem:[#allocation12 + $0xb8] sm:$0xff]
    %v2424 = vld [vmem:[#allocation12 + $0xc0] sm:$0xff]
    %v2425 = vld [vmem:[#allocation12 + $0xc8] sm:$0xff]
    %v2426 = vld [vmem:[#allocation12 + $0xd0] sm:$0xff]
    %v2427 = vld [vmem:[#allocation12 + $0xd8] sm:$0xff]
    %v2428 = vld [vmem:[#allocation12 + $0xe0] sm:$0xff]
    %v2429 = vld [vmem:[#allocation12 + $0xe8] sm:$0xff]
    %v2430 = vld [vmem:[#allocation12 + $0xf0] sm:$0xff]
    %v2431 = vld [vmem:[#allocation12 + $0xf8] sm:$0xff]
    %v2432 = vld [vmem:[#allocation12 + $0x100] sm:$0xff]
    %v2433 = vld [vmem:[#allocation12 + $0x108] sm:$0xff]
    %v2434 = vld [vmem:[#allocation12 + $0x110] sm:$0xff]
    %v2435 = vld [vmem:[#allocation12 + $0x118] sm:$0xff]
    %v2436 = vld [vmem:[#allocation12 + $0x120] sm:$0xff]
    %v2437 = vld [vmem:[#allocation12 + $0x128] sm:$0xff]
    %v2438 = vld [vmem:[#allocation12 + $0x130] sm:$0xff]
    %v2439 = vld [vmem:[#allocation12 + $0x138] sm:$0xff]
    %v2440 = vld [vmem:[#allocation12 + $0x140] sm:$0xff]
    %v2441 = vld [vmem:[#allocation12 + $0x148] sm:$0xff]
    %v2442 = vld [vmem:[#allocation12 + $0x150] sm:$0xff]
    %v2443 = vld [vmem:[#allocation12 + $0x158] sm:$0xff]
    %v2444 = vld [vmem:[#allocation12 + $0x160] sm:$0xff]
    %v2445 = vld [vmem:[#allocation12 + $0x168] sm:$0xff]
    %v2446 = vld [vmem:[#allocation12 + $0x170] sm:$0xff]
    %v2447 = vld [vmem:[#allocation12 + $0x178] sm:$0xff]
    %v2448 = vld [vmem:[#allocation12 + $0x180] sm:$0xff]
    %v2449 = vld [vmem:[#allocation12 + $0x188] sm:$0xff]
    %v2450 = vld [vmem:[#allocation12 + $0x190] sm:$0xff]
    %v2451 = vld [vmem:[#allocation12 + $0x198] sm:$0xff]
    %v2452 = vld [vmem:[#allocation12 + $0x1a0] sm:$0xff]
    %v2453 = vld [vmem:[#allocation12 + $0x1a8] sm:$0xff]
    %v2454 = vld [vmem:[#allocation12 + $0x1b0] sm:$0xff]
    %v2455 = vld [vmem:[#allocation12 + $0x1b8] sm:$0xff]
    %v2456 = vld [vmem:[#allocation12 + $0x1c0] sm:$0xff]
    %v2457 = vld [vmem:[#allocation12 + $0x1c8] sm:$0xff]
    %v2458 = vld [vmem:[#allocation12 + $0x1d0] sm:$0xff]
    %v2459 = vld [vmem:[#allocation12 + $0x1d8] sm:$0xff]
    %v2460 = vld [vmem:[#allocation12 + $0x1e0] sm:$0xff]
    %v2461 = vld [vmem:[#allocation12 + $0x1e8] sm:$0xff]
    %v2462 = vld [vmem:[#allocation12 + $0x1f0] sm:$0xff]
    %v2463 = vld [vmem:[#allocation12 + $0x1f8] sm:$0xff]
    %v2464 = vld [vmem:[%s6] sm:$0xf]
    %v2466 = vperm.slane %v2464, 0
    %v2467 = vperm.slane %v2464, 1
    %v2468 = vperm.slane %v2464, 2
    %v2469 = vperm.slane %v2464, 3
    %2474 = vmatpush.msra.mxu0 %v2460
    %2475 = vmatpush.msra.mxu0 %v2456
    %2476 = vmatpush.msra.mxu0 %v2452
    %2477 = vmatpush.msra.mxu0 %v2448
    %2478 = vmatpush.msra.mxu0 %v2444
    %2479 = vmatpush.msra.mxu0 %v2440
    %2480 = vmatpush.msra.mxu0 %v2436
    %2481 = vmatpush.msra.mxu0 %v2432
    %2482 = vmatpush.msra.mxu0 %v2428
    %2483 = vmatpush.msra.mxu0 %v2424
    %2484 = vmatpush.msra.mxu0 %v2420
    %2485 = vmatpush.msra.mxu0 %v2416
    %2486 = vmatpush.msra.mxu0 %v2412
    %2487 = vmatpush.msra.mxu0 %v2408
    %2488 = vmatpush.msra.mxu0 %v2404
    %2489 = vmatpush.msra.mxu0 %v2400
    %2490 = vmatmul.f32.gmra.mxu0 %v2392
    %v2491 = vpop.f32.mrf.mxu0
    %v2492 = vadd.f32 %v2466, %v2491
    %2493 = vmatmul.f32.gmra.mxu0 %v2393
    %v2494 = vpop.f32.mrf.mxu0
    %v2495 = vadd.f32 %v2466, %v2494
    %2496 = vmatmul.f32.gmra.mxu0 %v2394
    %v2497 = vpop.f32.mrf.mxu0
    %v2498 = vadd.f32 %v2466, %v2497
    %2499 = vmatmul.f32.gmra.mxu0 %v2395
    %v2500 = vpop.f32.mrf.mxu0
    %v2501 = vadd.f32 %v2466, %v2500
    %2502 = vmatmul.f32.gmra.mxu0 %v2396
    %v2503 = vpop.f32.mrf.mxu0
    %v2504 = vadd.f32 %v2466, %v2503
    %2505 = vmatmul.f32.gmra.mxu0 %v2397
    %v2506 = vpop.f32.mrf.mxu0
    %v2507 = vadd.f32 %v2466, %v2506
    %2508 = vmatmul.f32.gmra.mxu0 %v2398
    %v2509 = vpop.f32.mrf.mxu0
    %v2510 = vadd.f32 %v2466, %v2509
    %2511 = vmatmul.f32.gmra.mxu0 %v2399
    %v2512 = vpop.f32.mrf.mxu0
    %v2513 = vadd.f32 %v2466, %v2512
    %2514 = vdwg.mxu0
    %2515 = vmatpush.msra.mxu0 %v2461
    %2516 = vmatpush.msra.mxu0 %v2457
    %2517 = vmatpush.msra.mxu0 %v2453
    %2518 = vmatpush.msra.mxu0 %v2449
    %2519 = vmatpush.msra.mxu0 %v2445
    %2520 = vmatpush.msra.mxu0 %v2441
    %2521 = vmatpush.msra.mxu0 %v2437
    %2522 = vmatpush.msra.mxu0 %v2433
    %2523 = vmatpush.msra.mxu0 %v2429
    %2524 = vmatpush.msra.mxu0 %v2425
    %2525 = vmatpush.msra.mxu0 %v2421
    %2526 = vmatpush.msra.mxu0 %v2417
    %2527 = vmatpush.msra.mxu0 %v2413
    %2528 = vmatpush.msra.mxu0 %v2409
    %2529 = vmatpush.msra.mxu0 %v2405
    %2530 = vmatpush.msra.mxu0 %v2401
    %2531 = vmatmul.f32.gmra.mxu0 %v2392
    %v2532 = vpop.f32.mrf.mxu0
    %v2533 = vadd.f32 %v2467, %v2532
    %2534 = vmatmul.f32.gmra.mxu0 %v2393
    %v2535 = vpop.f32.mrf.mxu0
    %v2536 = vadd.f32 %v2467, %v2535
    %2537 = vmatmul.f32.gmra.mxu0 %v2394
    %v2538 = vpop.f32.mrf.mxu0
    %v2539 = vadd.f32 %v2467, %v2538
    %2540 = vmatmul.f32.gmra.mxu0 %v2395
    %v2541 = vpop.f32.mrf.mxu0
    %v2542 = vadd.f32 %v2467, %v2541
    %2543 = vmatmul.f32.gmra.mxu0 %v2396
    %v2544 = vpop.f32.mrf.mxu0
    %v2545 = vadd.f32 %v2467, %v2544
    %2546 = vmatmul.f32.gmra.mxu0 %v2397
    %v2547 = vpop.f32.mrf.mxu0
    %v2548 = vadd.f32 %v2467, %v2547
    %2549 = vmatmul.f32.gmra.mxu0 %v2398
    %v2550 = vpop.f32.mrf.mxu0
    %v2551 = vadd.f32 %v2467, %v2550
    %2552 = vmatmul.f32.gmra.mxu0 %v2399
    %v2553 = vpop.f32.mrf.mxu0
    %v2554 = vadd.f32 %v2467, %v2553
    %2555 = vdwg.mxu0
    %2556 = vmatpush.msra.mxu0 %v2462
    %2557 = vmatpush.msra.mxu0 %v2458
    %2558 = vmatpush.msra.mxu0 %v2454
    %2559 = vmatpush.msra.mxu0 %v2450
    %2560 = vmatpush.msra.mxu0 %v2446
    %2561 = vmatpush.msra.mxu0 %v2442
    %2562 = vmatpush.msra.mxu0 %v2438
    %2563 = vmatpush.msra.mxu0 %v2434
    %2564 = vmatpush.msra.mxu0 %v2430
    %2565 = vmatpush.msra.mxu0 %v2426
    %2566 = vmatpush.msra.mxu0 %v2422
    %2567 = vmatpush.msra.mxu0 %v2418
    %2568 = vmatpush.msra.mxu0 %v2414
    %2569 = vmatpush.msra.mxu0 %v2410
    %2570 = vmatpush.msra.mxu0 %v2406
    %2571 = vmatpush.msra.mxu0 %v2402
    %2572 = vmatmul.f32.gmra.mxu0 %v2392
    %v2573 = vpop.f32.mrf.mxu0
    %v2574 = vadd.f32 %v2468, %v2573
    %2575 = vmatmul.f32.gmra.mxu0 %v2393
    %v2576 = vpop.f32.mrf.mxu0
    %v2577 = vadd.f32 %v2468, %v2576
    %2578 = vmatmul.f32.gmra.mxu0 %v2394
    %v2579 = vpop.f32.mrf.mxu0
    %v2580 = vadd.f32 %v2468, %v2579
    %2581 = vmatmul.f32.gmra.mxu0 %v2395
    %v2582 = vpop.f32.mrf.mxu0
    %v2583 = vadd.f32 %v2468, %v2582
    %2584 = vmatmul.f32.gmra.mxu0 %v2396
    %v2585 = vpop.f32.mrf.mxu0
    %v2586 = vadd.f32 %v2468, %v2585
    %2587 = vmatmul.f32.gmra.mxu0 %v2397
    %v2588 = vpop.f32.mrf.mxu0
    %v2589 = vadd.f32 %v2468, %v2588
    %2590 = vmatmul.f32.gmra.mxu0 %v2398
    %v2591 = vpop.f32.mrf.mxu0
    %v2592 = vadd.f32 %v2468, %v2591
    %2593 = vmatmul.f32.gmra.mxu0 %v2399
    %v2594 = vpop.f32.mrf.mxu0
    %v2595 = vadd.f32 %v2468, %v2594
    %2596 = vdwg.mxu0
    %2597 = vmatpush.msra.mxu0 %v2463
    %2598 = vmatpush.msra.mxu0 %v2459
    %2599 = vmatpush.msra.mxu0 %v2455
    %2600 = vmatpush.msra.mxu0 %v2451
    %2601 = vmatpush.msra.mxu0 %v2447
    %2602 = vmatpush.msra.mxu0 %v2443
    %2603 = vmatpush.msra.mxu0 %v2439
    %2604 = vmatpush.msra.mxu0 %v2435
    %2605 = vmatpush.msra.mxu0 %v2431
    %2606 = vmatpush.msra.mxu0 %v2427
    %2607 = vmatpush.msra.mxu0 %v2423
    %2608 = vmatpush.msra.mxu0 %v2419
    %2609 = vmatpush.msra.mxu0 %v2415
    %2610 = vmatpush.msra.mxu0 %v2411
    %2611 = vmatpush.msra.mxu0 %v2407
    %2612 = vmatpush.msra.mxu0 %v2403
    %2613 = vmatmul.f32.gmra.mxu0 %v2392
    %v2614 = vpop.f32.mrf.mxu0
    %v2615 = vadd.f32 %v2469, %v2614
    %2616 = vmatmul.f32.gmra.mxu0 %v2393
    %v2617 = vpop.f32.mrf.mxu0
    %v2618 = vadd.f32 %v2469, %v2617
    %2619 = vmatmul.f32.gmra.mxu0 %v2394
    %v2620 = vpop.f32.mrf.mxu0
    %v2621 = vadd.f32 %v2469, %v2620
    %2622 = vmatmul.f32.gmra.mxu0 %v2395
    %v2623 = vpop.f32.mrf.mxu0
    %v2624 = vadd.f32 %v2469, %v2623
    %2625 = vmatmul.f32.gmra.mxu0 %v2396
    %v2626 = vpop.f32.mrf.mxu0
    %v2627 = vadd.f32 %v2469, %v2626
    %2628 = vmatmul.f32.gmra.mxu0 %v2397
    %v2629 = vpop.f32.mrf.mxu0
    %v2630 = vadd.f32 %v2469, %v2629
    %2631 = vmatmul.f32.gmra.mxu0 %v2398
    %v2632 = vpop.f32.mrf.mxu0
    %v2633 = vadd.f32 %v2469, %v2632
    %2634 = vmatmul.f32.gmra.mxu0 %v2399
    %v2635 = vpop.f32.mrf.mxu0
    %v2636 = vadd.f32 %v2469, %v2635
    %2637 = vdwg.mxu0
    %2638 = vst [vmem:[#allocation3] sm:$0xff] %v2492
    %2639 = vst [vmem:[#allocation3 + $0x8] sm:$0xff] %v2533
    %2640 = vst [vmem:[#allocation3 + $0x10] sm:$0xff] %v2574
    %2641 = vst [vmem:[#allocation3 + $0x18] sm:$0xff] %v2615
    %2642 = vst [vmem:[#allocation3 + $0x20] sm:$0xff] %v2495
    %2643 = vst [vmem:[#allocation3 + $0x28] sm:$0xff] %v2536
    %2644 = vst [vmem:[#allocation3 + $0x30] sm:$0xff] %v2577
    %2645 = vst [vmem:[#allocation3 + $0x38] sm:$0xff] %v2618
    %2646 = vst [vmem:[#allocation3 + $0x40] sm:$0xff] %v2498
    %2647 = vst [vmem:[#allocation3 + $0x48] sm:$0xff] %v2539
    %2648 = vst [vmem:[#allocation3 + $0x50] sm:$0xff] %v2580
    %2649 = vst [vmem:[#allocation3 + $0x58] sm:$0xff] %v2621
    %2650 = vst [vmem:[#allocation3 + $0x60] sm:$0xff] %v2501
    %2651 = vst [vmem:[#allocation3 + $0x68] sm:$0xff] %v2542
    %2652 = vst [vmem:[#allocation3 + $0x70] sm:$0xff] %v2583
    %2653 = vst [vmem:[#allocation3 + $0x78] sm:$0xff] %v2624
    %2654 = vst [vmem:[#allocation3 + $0x80] sm:$0xff] %v2504
    %2655 = vst [vmem:[#allocation3 + $0x88] sm:$0xff] %v2545
    %2656 = vst [vmem:[#allocation3 + $0x90] sm:$0xff] %v2586
    %2657 = vst [vmem:[#allocation3 + $0x98] sm:$0xff] %v2627
    %2658 = vst [vmem:[#allocation3 + $0xa0] sm:$0xff] %v2507
    %2659 = vst [vmem:[#allocation3 + $0xa8] sm:$0xff] %v2548
    %2660 = vst [vmem:[#allocation3 + $0xb0] sm:$0xff] %v2589
    %2661 = vst [vmem:[#allocation3 + $0xb8] sm:$0xff] %v2630
    %2662 = vst [vmem:[#allocation3 + $0xc0] sm:$0xff] %v2510
    %2663 = vst [vmem:[#allocation3 + $0xc8] sm:$0xff] %v2551
    %2664 = vst [vmem:[#allocation3 + $0xd0] sm:$0xff] %v2592
    %2665 = vst [vmem:[#allocation3 + $0xd8] sm:$0xff] %v2633
    %2666 = vst [vmem:[#allocation3 + $0xe0] sm:$0xff] %v2513
    %2667 = vst [vmem:[#allocation3 + $0xe8] sm:$0xff] %v2554
    %2668 = vst [vmem:[#allocation3 + $0xf0] sm:$0xff] %v2595
    %2669 = vst [vmem:[#allocation3 + $0xf8] sm:$0xff] %v2636
    %v2670 = vld [vmem:[#allocation13] sm:$0xff]
    %v2671 = vld [vmem:[#allocation13 + $0x8] sm:$0xff]
    %v2672 = vld [vmem:[#allocation13 + $0x10] sm:$0xff]
    %v2673 = vld [vmem:[#allocation13 + $0x18] sm:$0xff]
    %v2674 = vld [vmem:[#allocation13 + $0x20] sm:$0xff]
    %v2675 = vld [vmem:[#allocation13 + $0x28] sm:$0xff]
    %v2676 = vld [vmem:[#allocation13 + $0x30] sm:$0xff]
    %v2677 = vld [vmem:[#allocation13 + $0x38] sm:$0xff]
    %v2678 = vld [vmem:[#allocation13 + $0x40] sm:$0xff]
    %v2679 = vld [vmem:[#allocation13 + $0x48] sm:$0xff]
    %v2680 = vld [vmem:[#allocation13 + $0x50] sm:$0xff]
    %v2681 = vld [vmem:[#allocation13 + $0x58] sm:$0xff]
    %v2682 = vld [vmem:[#allocation13 + $0x60] sm:$0xff]
    %v2683 = vld [vmem:[#allocation13 + $0x68] sm:$0xff]
    %v2684 = vld [vmem:[#allocation13 + $0x70] sm:$0xff]
    %v2685 = vld [vmem:[#allocation13 + $0x78] sm:$0xff]
    %v2686 = vld [vmem:[#allocation13 + $0x80] sm:$0xff]
    %v2687 = vld [vmem:[#allocation13 + $0x88] sm:$0xff]
    %v2688 = vld [vmem:[#allocation13 + $0x90] sm:$0xff]
    %v2689 = vld [vmem:[#allocation13 + $0x98] sm:$0xff]
    %v2690 = vld [vmem:[#allocation13 + $0xa0] sm:$0xff]
    %v2691 = vld [vmem:[#allocation13 + $0xa8] sm:$0xff]
    %v2692 = vld [vmem:[#allocation13 + $0xb0] sm:$0xff]
    %v2693 = vld [vmem:[#allocation13 + $0xb8] sm:$0xff]
    %v2694 = vld [vmem:[#allocation13 + $0xc0] sm:$0xff]
    %v2695 = vld [vmem:[#allocation13 + $0xc8] sm:$0xff]
    %v2696 = vld [vmem:[#allocation13 + $0xd0] sm:$0xff]
    %v2697 = vld [vmem:[#allocation13 + $0xd8] sm:$0xff]
    %v2698 = vld [vmem:[#allocation13 + $0xe0] sm:$0xff]
    %v2699 = vld [vmem:[#allocation13 + $0xe8] sm:$0xff]
    %v2700 = vld [vmem:[#allocation13 + $0xf0] sm:$0xff]
    %v2701 = vld [vmem:[#allocation13 + $0xf8] sm:$0xff]
    %v2702 = vld [vmem:[#allocation13 + $0x100] sm:$0xff]
    %v2703 = vld [vmem:[#allocation13 + $0x108] sm:$0xff]
    %v2704 = vld [vmem:[#allocation13 + $0x110] sm:$0xff]
    %v2705 = vld [vmem:[#allocation13 + $0x118] sm:$0xff]
    %v2706 = vld [vmem:[#allocation13 + $0x120] sm:$0xff]
    %v2707 = vld [vmem:[#allocation13 + $0x128] sm:$0xff]
    %v2708 = vld [vmem:[#allocation13 + $0x130] sm:$0xff]
    %v2709 = vld [vmem:[#allocation13 + $0x138] sm:$0xff]
    %v2710 = vld [vmem:[#allocation13 + $0x140] sm:$0xff]
    %v2711 = vld [vmem:[#allocation13 + $0x148] sm:$0xff]
    %v2712 = vld [vmem:[#allocation13 + $0x150] sm:$0xff]
    %v2713 = vld [vmem:[#allocation13 + $0x158] sm:$0xff]
    %v2714 = vld [vmem:[#allocation13 + $0x160] sm:$0xff]
    %v2715 = vld [vmem:[#allocation13 + $0x168] sm:$0xff]
    %v2716 = vld [vmem:[#allocation13 + $0x170] sm:$0xff]
    %v2717 = vld [vmem:[#allocation13 + $0x178] sm:$0xff]
    %v2718 = vld [vmem:[#allocation13 + $0x180] sm:$0xff]
    %v2719 = vld [vmem:[#allocation13 + $0x188] sm:$0xff]
    %v2720 = vld [vmem:[#allocation13 + $0x190] sm:$0xff]
    %v2721 = vld [vmem:[#allocation13 + $0x198] sm:$0xff]
    %v2722 = vld [vmem:[#allocation13 + $0x1a0] sm:$0xff]
    %v2723 = vld [vmem:[#allocation13 + $0x1a8] sm:$0xff]
    %v2724 = vld [vmem:[#allocation13 + $0x1b0] sm:$0xff]
    %v2725 = vld [vmem:[#allocation13 + $0x1b8] sm:$0xff]
    %v2726 = vld [vmem:[#allocation13 + $0x1c0] sm:$0xff]
    %v2727 = vld [vmem:[#allocation13 + $0x1c8] sm:$0xff]
    %v2728 = vld [vmem:[#allocation13 + $0x1d0] sm:$0xff]
    %v2729 = vld [vmem:[#allocation13 + $0x1d8] sm:$0xff]
    %v2730 = vld [vmem:[#allocation13 + $0x1e0] sm:$0xff]
    %v2731 = vld [vmem:[#allocation13 + $0x1e8] sm:$0xff]
    %v2732 = vld [vmem:[#allocation13 + $0x1f0] sm:$0xff]
    %v2733 = vld [vmem:[#allocation13 + $0x1f8] sm:$0xff]
    %v2734 = vld [vmem:[#allocation3] sm:$0xff]
    %v2735 = vld [vmem:[#allocation3 + $0x8] sm:$0xff]
    %v2736 = vld [vmem:[#allocation3 + $0x10] sm:$0xff]
    %v2737 = vld [vmem:[#allocation3 + $0x18] sm:$0xff]
    %2738 = vmatpush.msra.mxu0 %v2730
    %2739 = vmatpush.msra.mxu0 %v2726
    %2740 = vmatpush.msra.mxu0 %v2722
    %2741 = vmatpush.msra.mxu0 %v2718
    %2742 = vmatpush.msra.mxu0 %v2714
    %2743 = vmatpush.msra.mxu0 %v2710
    %2744 = vmatpush.msra.mxu0 %v2706
    %2745 = vmatpush.msra.mxu0 %v2702
    %2746 = vmatpush.msra.mxu0 %v2698
    %2747 = vmatpush.msra.mxu0 %v2694
    %2748 = vmatpush.msra.mxu0 %v2690
    %2749 = vmatpush.msra.mxu0 %v2686
    %2750 = vmatpush.msra.mxu0 %v2682
    %2751 = vmatpush.msra.mxu0 %v2678
    %2752 = vmatpush.msra.mxu0 %v2674
    %2753 = vmatpush.msra.mxu0 %v2670
    %2754 = vmatmul.f32.gmra.mxu0 0.0
    %v2755 = vpop.f32.mrf.mxu0
    %v2756 = vadd.f32 0.0, %v2755
    %2757 = vdwg.mxu0
    %2758 = vmatpush.msra.mxu0 %v2731
    %2759 = vmatpush.msra.mxu0 %v2727
    %2760 = vmatpush.msra.mxu0 %v2723
    %2761 = vmatpush.msra.mxu0 %v2719
    %2762 = vmatpush.msra.mxu0 %v2715
    %2763 = vmatpush.msra.mxu0 %v2711
    %2764 = vmatpush.msra.mxu0 %v2707
    %2765 = vmatpush.msra.mxu0 %v2703
    %2766 = vmatpush.msra.mxu0 %v2699
    %2767 = vmatpush.msra.mxu0 %v2695
    %2768 = vmatpush.msra.mxu0 %v2691
    %2769 = vmatpush.msra.mxu0 %v2687
    %2770 = vmatpush.msra.mxu0 %v2683
    %2771 = vmatpush.msra.mxu0 %v2679
    %2772 = vmatpush.msra.mxu0 %v2675
    %2773 = vmatpush.msra.mxu0 %v2671
    %2774 = vmatmul.f32.gmra.mxu0 0.0
    %v2775 = vpop.f32.mrf.mxu0
    %v2776 = vadd.f32 0.0, %v2775
    %2777 = vdwg.mxu0
    %2778 = vmatpush.msra.mxu0 %v2732
    %2779 = vmatpush.msra.mxu0 %v2728
    %2780 = vmatpush.msra.mxu0 %v2724
    %2781 = vmatpush.msra.mxu0 %v2720
    %2782 = vmatpush.msra.mxu0 %v2716
    %2783 = vmatpush.msra.mxu0 %v2712
    %2784 = vmatpush.msra.mxu0 %v2708
    %2785 = vmatpush.msra.mxu0 %v2704
    %2786 = vmatpush.msra.mxu0 %v2700
    %2787 = vmatpush.msra.mxu0 %v2696
    %2788 = vmatpush.msra.mxu0 %v2692
    %2789 = vmatpush.msra.mxu0 %v2688
    %2790 = vmatpush.msra.mxu0 %v2684
    %2791 = vmatpush.msra.mxu0 %v2680
    %2792 = vmatpush.msra.mxu0 %v2676
    %2793 = vmatpush.msra.mxu0 %v2672
    %2794 = vmatmul.f32.gmra.mxu0 0.0
    %v2795 = vpop.f32.mrf.mxu0
    %v2796 = vadd.f32 0.0, %v2795
    %2797 = vdwg.mxu0
    %2798 = vmatpush.msra.mxu0 %v2733
    %2799 = vmatpush.msra.mxu0 %v2729
    %2800 = vmatpush.msra.mxu0 %v2725
    %2801 = vmatpush.msra.mxu0 %v2721
    %2802 = vmatpush.msra.mxu0 %v2717
    %2803 = vmatpush.msra.mxu0 %v2713
    %2804 = vmatpush.msra.mxu0 %v2709
    %2805 = vmatpush.msra.mxu0 %v2705
    %2806 = vmatpush.msra.mxu0 %v2701
    %2807 = vmatpush.msra.mxu0 %v2697
    %2808 = vmatpush.msra.mxu0 %v2693
    %2809 = vmatpush.msra.mxu0 %v2689
    %2810 = vmatpush.msra.mxu0 %v2685
    %2811 = vmatpush.msra.mxu0 %v2681
    %2812 = vmatpush.msra.mxu0 %v2677
    %2813 = vmatpush.msra.mxu0 %v2673
    %2814 = vmatmul.f32.gmra.mxu0 0.0
    %v2815 = vpop.f32.mrf.mxu0
    %v2816 = vadd.f32 0.0, %v2815
    %2817 = vdwg.mxu0
    %v2818 = vadd.f32 %v2734, %v2756
    %v2819 = vadd.f32 %v2735, %v2776
    %v2820 = vadd.f32 %v2736, %v2796
    %v2821 = vadd.f32 %v2737, %v2816
    %v2822 = vmul.f32 %v2818, 0.5
    %v2823 = vmul.f32 %v2819, 0.5
    %v2824 = vmul.f32 %v2820, 0.5
    %v2825 = vtanh.pop %v2822
    %v2826 = vtanh.pop %v2823
    %v2827 = vtanh.pop %v2824
    %v2828 = vmul.f32 %v2825, 0.5
    %v2829 = vmul.f32 %v2826, 0.5
    %v2830 = vmul.f32 %v2827, 0.5
    %v2831 = vadd.f32 %v2828, 0.5
    %v2832 = vadd.f32 %v2829, 0.5
    %v2833 = vadd.f32 %v2830, 0.5
    %v2834 = vtanh.pop %v2821
    %v2835 = vmul.f32 %v2832, 0.0
    %v2836 = vmul.f32 %v2831, %v2834
    %v2837 = vadd.f32 %v2835, %v2836
    %v2838 = vtanh.pop %v2837
    %v2839 = vmul.f32 %v2833, %v2838
    %2840 = vst [vmem:[#allocation2] sm:$0xff] %v2839
    %v2841 = vld [vmem:[#allocation3 + $0x20] sm:$0xff]
    %v2842 = vld [vmem:[#allocation3 + $0x28] sm:$0xff]
    %v2843 = vld [vmem:[#allocation3 + $0x30] sm:$0xff]
    %v2844 = vld [vmem:[#allocation3 + $0x38] sm:$0xff]
    %2845 = vmatpush.msra.mxu0 %v2730
    %2846 = vmatpush.msra.mxu0 %v2726
    %2847 = vmatpush.msra.mxu0 %v2722
    %2848 = vmatpush.msra.mxu0 %v2718
    %2849 = vmatpush.msra.mxu0 %v2714
    %2850 = vmatpush.msra.mxu0 %v2710
    %2851 = vmatpush.msra.mxu0 %v2706
    %2852 = vmatpush.msra.mxu0 %v2702
    %2853 = vmatpush.msra.mxu0 %v2698
    %2854 = vmatpush.msra.mxu0 %v2694
    %2855 = vmatpush.msra.mxu0 %v2690
    %2856 = vmatpush.msra.mxu0 %v2686
    %2857 = vmatpush.msra.mxu0 %v2682
    %2858 = vmatpush.msra.mxu0 %v2678
    %2859 = vmatpush.msra.mxu0 %v2674
    %2860 = vmatpush.msra.mxu0 %v2670
    %2861 = vmatmul.f32.gmra.mxu0 %v2839
    %v2862 = vpop.f32.mrf.mxu0
    %v2863 = vadd.f32 0.0, %v2862
    %2864 = vdwg.mxu0
    %2865 = vmatpush.msra.mxu0 %v2731
    %2866 = vmatpush.msra.mxu0 %v2727
    %2867 = vmatpush.msra.mxu0 %v2723
    %2868 = vmatpush.msra.mxu0 %v2719
    %2869 = vmatpush.msra.mxu0 %v2715
    %2870 = vmatpush.msra.mxu0 %v2711
    %2871 = vmatpush.msra.mxu0 %v2707
    %2872 = vmatpush.msra.mxu0 %v2703
    %2873 = vmatpush.msra.mxu0 %v2699
    %2874 = vmatpush.msra.mxu0 %v2695
    %2875 = vmatpush.msra.mxu0 %v2691
    %2876 = vmatpush.msra.mxu0 %v2687
    %2877 = vmatpush.msra.mxu0 %v2683
    %2878 = vmatpush.msra.mxu0 %v2679
    %2879 = vmatpush.msra.mxu0 %v2675
    %2880 = vmatpush.msra.mxu0 %v2671
    %2881 = vmatmul.f32.gmra.mxu0 %v2839
    %v2882 = vpop.f32.mrf.mxu0
    %v2883 = vadd.f32 0.0, %v2882
    %2884 = vdwg.mxu0
    %2885 = vmatpush.msra.mxu0 %v2732
    %2886 = vmatpush.msra.mxu0 %v2728
    %2887 = vmatpush.msra.mxu0 %v2724
    %2888 = vmatpush.msra.mxu0 %v2720
    %2889 = vmatpush.msra.mxu0 %v2716
    %2890 = vmatpush.msra.mxu0 %v2712
    %2891 = vmatpush.msra.mxu0 %v2708
    %2892 = vmatpush.msra.mxu0 %v2704
    %2893 = vmatpush.msra.mxu0 %v2700
    %2894 = vmatpush.msra.mxu0 %v2696
    %2895 = vmatpush.msra.mxu0 %v2692
    %2896 = vmatpush.msra.mxu0 %v2688
    %2897 = vmatpush.msra.mxu0 %v2684
    %2898 = vmatpush.msra.mxu0 %v2680
    %2899 = vmatpush.msra.mxu0 %v2676
    %2900 = vmatpush.msra.mxu0 %v2672
    %2901 = vmatmul.f32.gmra.mxu0 %v2839
    %v2902 = vpop.f32.mrf.mxu0
    %v2903 = vadd.f32 0.0, %v2902
    %2904 = vdwg.mxu0
    %2905 = vmatpush.msra.mxu0 %v2733
    %2906 = vmatpush.msra.mxu0 %v2729
    %2907 = vmatpush.msra.mxu0 %v2725
    %2908 = vmatpush.msra.mxu0 %v2721
    %2909 = vmatpush.msra.mxu0 %v2717
    %2910 = vmatpush.msra.mxu0 %v2713
    %2911 = vmatpush.msra.mxu0 %v2709
    %2912 = vmatpush.msra.mxu0 %v2705
    %2913 = vmatpush.msra.mxu0 %v2701
    %2914 = vmatpush.msra.mxu0 %v2697
    %2915 = vmatpush.msra.mxu0 %v2693
    %2916 = vmatpush.msra.mxu0 %v2689
    %2917 = vmatpush.msra.mxu0 %v2685
    %2918 = vmatpush.msra.mxu0 %v2681
    %2919 = vmatpush.msra.mxu0 %v2677
    %2920 = vmatpush.msra.mxu0 %v2673
    %2921 = vmatmul.f32.gmra.mxu0 %v2839
    %v2922 = vpop.f32.mrf.mxu0
    %v2923 = vadd.f32 0.0, %v2922
    %2924 = vdwg.mxu0
    %v2925 = vadd.f32 %v2841, %v2863
    %v2926 = vadd.f32 %v2842, %v2883
    %v2927 = vadd.f32 %v2843, %v2903
    %v2928 = vadd.f32 %v2844, %v2923
    %v2929 = vmul.f32 %v2925, 0.5
    %v2930 = vmul.f32 %v2926, 0.5
    %v2931 = vmul.f32 %v2927, 0.5
    %v2932 = vtanh.pop %v2929
    %v2933 = vtanh.pop %v2930
    %v2934 = vtanh.pop %v2931
    %v2935 = vmul.f32 %v2932, 0.5
    %v2936 = vmul.f32 %v2933, 0.5
    %v2937 = vmul.f32 %v2934, 0.5
    %v2938 = vadd.f32 %v2935, 0.5
    %v2939 = vadd.f32 %v2936, 0.5
    %v2940 = vadd.f32 %v2937, 0.5
    %v2941 = vtanh.pop %v2928
    %v2942 = vmul.f32 %v2939, %v2837
    %v2943 = vmul.f32 %v2938, %v2941
    %v2944 = vadd.f32 %v2942, %v2943
    %v2945 = vtanh.pop %v2944
    %v2946 = vmul.f32 %v2940, %v2945
    %2947 = vst [vmem:[#allocation2 + $0x8] sm:$0xff] %v2946
    %v2948 = vld [vmem:[#allocation3 + $0x40] sm:$0xff]
    %v2949 = vld [vmem:[#allocation3 + $0x48] sm:$0xff]
    %v2950 = vld [vmem:[#allocation3 + $0x50] sm:$0xff]
    %v2951 = vld [vmem:[#allocation3 + $0x58] sm:$0xff]
    %2952 = vmatpush.msra.mxu0 %v2730
    %2953 = vmatpush.msra.mxu0 %v2726
    %2954 = vmatpush.msra.mxu0 %v2722
    %2955 = vmatpush.msra.mxu0 %v2718
    %2956 = vmatpush.msra.mxu0 %v2714
    %2957 = vmatpush.msra.mxu0 %v2710
    %2958 = vmatpush.msra.mxu0 %v2706
    %2959 = vmatpush.msra.mxu0 %v2702
    %2960 = vmatpush.msra.mxu0 %v2698
    %2961 = vmatpush.msra.mxu0 %v2694
    %2962 = vmatpush.msra.mxu0 %v2690
    %2963 = vmatpush.msra.mxu0 %v2686
    %2964 = vmatpush.msra.mxu0 %v2682
    %2965 = vmatpush.msra.mxu0 %v2678
    %2966 = vmatpush.msra.mxu0 %v2674
    %2967 = vmatpush.msra.mxu0 %v2670
    %2968 = vmatmul.f32.gmra.mxu0 %v2946
    %v2969 = vpop.f32.mrf.mxu0
    %v2970 = vadd.f32 0.0, %v2969
    %2971 = vdwg.mxu0
    %2972 = vmatpush.msra.mxu0 %v2731
    %2973 = vmatpush.msra.mxu0 %v2727
    %2974 = vmatpush.msra.mxu0 %v2723
    %2975 = vmatpush.msra.mxu0 %v2719
    %2976 = vmatpush.msra.mxu0 %v2715
    %2977 = vmatpush.msra.mxu0 %v2711
    %2978 = vmatpush.msra.mxu0 %v2707
    %2979 = vmatpush.msra.mxu0 %v2703
    %2980 = vmatpush.msra.mxu0 %v2699
    %2981 = vmatpush.msra.mxu0 %v2695
    %2982 = vmatpush.msra.mxu0 %v2691
    %2983 = vmatpush.msra.mxu0 %v2687
    %2984 = vmatpush.msra.mxu0 %v2683
    %2985 = vmatpush.msra.mxu0 %v2679
    %2986 = vmatpush.msra.mxu0 %v2675
    %2987 = vmatpush.msra.mxu0 %v2671
    %2988 = vmatmul.f32.gmra.mxu0 %v2946
    %v2989 = vpop.f32.mrf.mxu0
    %v2990 = vadd.f32 0.0, %v2989
    %2991 = vdwg.mxu0
    %2992 = vmatpush.msra.mxu0 %v2732
    %2993 = vmatpush.msra.mxu0 %v2728
    %2994 = vmatpush.msra.mxu0 %v2724
    %2995 = vmatpush.msra.mxu0 %v2720
    %2996 = vmatpush.msra.mxu0 %v2716
    %2997 = vmatpush.msra.mxu0 %v2712
    %2998 = vmatpush.msra.mxu0 %v2708
    %2999 = vmatpush.msra.mxu0 %v2704
    %3000 = vmatpush.msra.mxu0 %v2700
    %3001 = vmatpush.msra.mxu0 %v2696
    %3002 = vmatpush.msra.mxu0 %v2692
    %3003 = vmatpush.msra.mxu0 %v2688
    %3004 = vmatpush.msra.mxu0 %v2684
    %3005 = vmatpush.msra.mxu0 %v2680
    %3006 = vmatpush.msra.mxu0 %v2676
    %3007 = vmatpush.msra.mxu0 %v2672
    %3008 = vmatmul.f32.gmra.mxu0 %v2946
    %v3009 = vpop.f32.mrf.mxu0
    %v3010 = vadd.f32 0.0, %v3009
    %3011 = vdwg.mxu0
    %3012 = vmatpush.msra.mxu0 %v2733
    %3013 = vmatpush.msra.mxu0 %v2729
    %3014 = vmatpush.msra.mxu0 %v2725
    %3015 = vmatpush.msra.mxu0 %v2721
    %3016 = vmatpush.msra.mxu0 %v2717
    %3017 = vmatpush.msra.mxu0 %v2713
    %3018 = vmatpush.msra.mxu0 %v2709
    %3019 = vmatpush.msra.mxu0 %v2705
    %3020 = vmatpush.msra.mxu0 %v2701
    %3021 = vmatpush.msra.mxu0 %v2697
    %3022 = vmatpush.msra.mxu0 %v2693
    %3023 = vmatpush.msra.mxu0 %v2689
    %3024 = vmatpush.msra.mxu0 %v2685
    %3025 = vmatpush.msra.mxu0 %v2681
    %3026 = vmatpush.msra.mxu0 %v2677
    %3027 = vmatpush.msra.mxu0 %v2673
    %3028 = vmatmul.f32.gmra.mxu0 %v2946
    %v3029 = vpop.f32.mrf.mxu0
    %v3030 = vadd.f32 0.0, %v3029
    %3031 = vdwg.mxu0
    %v3032 = vadd.f32 %v2948, %v2970
    %v3033 = vadd.f32 %v2949, %v2990
    %v3034 = vadd.f32 %v2950, %v3010
    %v3035 = vadd.f32 %v2951, %v3030
    %v3036 = vmul.f32 %v3032, 0.5
    %v3037 = vmul.f32 %v3033, 0.5
    %v3038 = vmul.f32 %v3034, 0.5
    %v3039 = vtanh.pop %v3036
    %v3040 = vtanh.pop %v3037
    %v3041 = vtanh.pop %v3038
    %v3042 = vmul.f32 %v3039, 0.5
    %v3043 = vmul.f32 %v3040, 0.5
    %v3044 = vmul.f32 %v3041, 0.5
    %v3045 = vadd.f32 %v3042, 0.5
    %v3046 = vadd.f32 %v3043, 0.5
    %v3047 = vadd.f32 %v3044, 0.5
    %v3048 = vtanh.pop %v3035
    %v3049 = vmul.f32 %v3046, %v2944
    %v3050 = vmul.f32 %v3045, %v3048
    %v3051 = vadd.f32 %v3049, %v3050
    %v3052 = vtanh.pop %v3051
    %v3053 = vmul.f32 %v3047, %v3052
    %3054 = vst [vmem:[#allocation2 + $0x10] sm:$0xff] %v3053
    %v3055 = vld [vmem:[#allocation3 + $0x60] sm:$0xff]
    %v3056 = vld [vmem:[#allocation3 + $0x68] sm:$0xff]
    %v3057 = vld [vmem:[#allocation3 + $0x70] sm:$0xff]
    %v3058 = vld [vmem:[#allocation3 + $0x78] sm:$0xff]
    %3059 = vmatpush.msra.mxu0 %v2730
    %3060 = vmatpush.msra.mxu0 %v2726
    %3061 = vmatpush.msra.mxu0 %v2722
    %3062 = vmatpush.msra.mxu0 %v2718
    %3063 = vmatpush.msra.mxu0 %v2714
    %3064 = vmatpush.msra.mxu0 %v2710
    %3065 = vmatpush.msra.mxu0 %v2706
    %3066 = vmatpush.msra.mxu0 %v2702
    %3067 = vmatpush.msra.mxu0 %v2698
    %3068 = vmatpush.msra.mxu0 %v2694
    %3069 = vmatpush.msra.mxu0 %v2690
    %3070 = vmatpush.msra.mxu0 %v2686
    %3071 = vmatpush.msra.mxu0 %v2682
    %3072 = vmatpush.msra.mxu0 %v2678
    %3073 = vmatpush.msra.mxu0 %v2674
    %3074 = vmatpush.msra.mxu0 %v2670
    %3075 = vmatmul.f32.gmra.mxu0 %v3053
    %v3076 = vpop.f32.mrf.mxu0
    %v3077 = vadd.f32 0.0, %v3076
    %3078 = vdwg.mxu0
    %3079 = vmatpush.msra.mxu0 %v2731
    %3080 = vmatpush.msra.mxu0 %v2727
    %3081 = vmatpush.msra.mxu0 %v2723
    %3082 = vmatpush.msra.mxu0 %v2719
    %3083 = vmatpush.msra.mxu0 %v2715
    %3084 = vmatpush.msra.mxu0 %v2711
    %3085 = vmatpush.msra.mxu0 %v2707
    %3086 = vmatpush.msra.mxu0 %v2703
    %3087 = vmatpush.msra.mxu0 %v2699
    %3088 = vmatpush.msra.mxu0 %v2695
    %3089 = vmatpush.msra.mxu0 %v2691
    %3090 = vmatpush.msra.mxu0 %v2687
    %3091 = vmatpush.msra.mxu0 %v2683
    %3092 = vmatpush.msra.mxu0 %v2679
    %3093 = vmatpush.msra.mxu0 %v2675
    %3094 = vmatpush.msra.mxu0 %v2671
    %3095 = vmatmul.f32.gmra.mxu0 %v3053
    %v3096 = vpop.f32.mrf.mxu0
    %v3097 = vadd.f32 0.0, %v3096
    %3098 = vdwg.mxu0
    %3099 = vmatpush.msra.mxu0 %v2732
    %3100 = vmatpush.msra.mxu0 %v2728
    %3101 = vmatpush.msra.mxu0 %v2724
    %3102 = vmatpush.msra.mxu0 %v2720
    %3103 = vmatpush.msra.mxu0 %v2716
    %3104 = vmatpush.msra.mxu0 %v2712
    %3105 = vmatpush.msra.mxu0 %v2708
    %3106 = vmatpush.msra.mxu0 %v2704
    %3107 = vmatpush.msra.mxu0 %v2700
    %3108 = vmatpush.msra.mxu0 %v2696
    %3109 = vmatpush.msra.mxu0 %v2692
    %3110 = vmatpush.msra.mxu0 %v2688
    %3111 = vmatpush.msra.mxu0 %v2684
    %3112 = vmatpush.msra.mxu0 %v2680
    %3113 = vmatpush.msra.mxu0 %v2676
    %3114 = vmatpush.msra.mxu0 %v2672
    %3115 = vmatmul.f32.gmra.mxu0 %v3053
    %v3116 = vpop.f32.mrf.mxu0
    %v3117 = vadd.f32 0.0, %v3116
    %3118 = vdwg.mxu0
    %3119 = vmatpush.msra.mxu0 %v2733
    %3120 = vmatpush.msra.mxu0 %v2729
    %3121 = vmatpush.msra.mxu0 %v2725
    %3122 = vmatpush.msra.mxu0 %v2721
    %3123 = vmatpush.msra.mxu0 %v2717
    %3124 = vmatpush.msra.mxu0 %v2713
    %3125 = vmatpush.msra.mxu0 %v2709
    %3126 = vmatpush.msra.mxu0 %v2705
    %3127 = vmatpush.msra.mxu0 %v2701
    %3128 = vmatpush.msra.mxu0 %v2697
    %3129 = vmatpush.msra.mxu0 %v2693
    %3130 = vmatpush.msra.mxu0 %v2689
    %3131 = vmatpush.msra.mxu0 %v2685
    %3132 = vmatpush.msra.mxu0 %v2681
    %3133 = vmatpush.msra.mxu0 %v2677
    %3134 = vmatpush.msra.mxu0 %v2673
    %3135 = vmatmul.f32.gmra.mxu0 %v3053
    %v3136 = vpop.f32.mrf.mxu0
    %v3137 = vadd.f32 0.0, %v3136
    %3138 = vdwg.mxu0
    %v3139 = vadd.f32 %v3055, %v3077
    %v3140 = vadd.f32 %v3056, %v3097
    %v3141 = vadd.f32 %v3057, %v3117
    %v3142 = vadd.f32 %v3058, %v3137
    %v3143 = vmul.f32 %v3139, 0.5
    %v3144 = vmul.f32 %v3140, 0.5
    %v3145 = vmul.f32 %v3141, 0.5
    %v3146 = vtanh.pop %v3143
    %v3147 = vtanh.pop %v3144
    %v3148 = vtanh.pop %v3145
    %v3149 = vmul.f32 %v3146, 0.5
    %v3150 = vmul.f32 %v3147, 0.5
    %v3151 = vmul.f32 %v3148, 0.5
    %v3152 = vadd.f32 %v3149, 0.5
    %v3153 = vadd.f32 %v3150, 0.5
    %v3154 = vadd.f32 %v3151, 0.5
    %v3155 = vtanh.pop %v3142
    %v3156 = vmul.f32 %v3153, %v3051
    %v3157 = vmul.f32 %v3152, %v3155
    %v3158 = vadd.f32 %v3156, %v3157
    %v3159 = vtanh.pop %v3158
    %v3160 = vmul.f32 %v3154, %v3159
    %3161 = vst [vmem:[#allocation2 + $0x18] sm:$0xff] %v3160
    %v3162 = vld [vmem:[#allocation3 + $0x80] sm:$0xff]
    %v3163 = vld [vmem:[#allocation3 + $0x88] sm:$0xff]
    %v3164 = vld [vmem:[#allocation3 + $0x90] sm:$0xff]
    %v3165 = vld [vmem:[#allocation3 + $0x98] sm:$0xff]
    %3166 = vmatpush.msra.mxu0 %v2730
    %3167 = vmatpush.msra.mxu0 %v2726
    %3168 = vmatpush.msra.mxu0 %v2722
    %3169 = vmatpush.msra.mxu0 %v2718
    %3170 = vmatpush.msra.mxu0 %v2714
    %3171 = vmatpush.msra.mxu0 %v2710
    %3172 = vmatpush.msra.mxu0 %v2706
    %3173 = vmatpush.msra.mxu0 %v2702
    %3174 = vmatpush.msra.mxu0 %v2698
    %3175 = vmatpush.msra.mxu0 %v2694
    %3176 = vmatpush.msra.mxu0 %v2690
    %3177 = vmatpush.msra.mxu0 %v2686
    %3178 = vmatpush.msra.mxu0 %v2682
    %3179 = vmatpush.msra.mxu0 %v2678
    %3180 = vmatpush.msra.mxu0 %v2674
    %3181 = vmatpush.msra.mxu0 %v2670
    %3182 = vmatmul.f32.gmra.mxu0 %v3160
    %v3183 = vpop.f32.mrf.mxu0
    %v3184 = vadd.f32 0.0, %v3183
    %3185 = vdwg.mxu0
    %3186 = vmatpush.msra.mxu0 %v2731
    %3187 = vmatpush.msra.mxu0 %v2727
    %3188 = vmatpush.msra.mxu0 %v2723
    %3189 = vmatpush.msra.mxu0 %v2719
    %3190 = vmatpush.msra.mxu0 %v2715
    %3191 = vmatpush.msra.mxu0 %v2711
    %3192 = vmatpush.msra.mxu0 %v2707
    %3193 = vmatpush.msra.mxu0 %v2703
    %3194 = vmatpush.msra.mxu0 %v2699
    %3195 = vmatpush.msra.mxu0 %v2695
    %3196 = vmatpush.msra.mxu0 %v2691
    %3197 = vmatpush.msra.mxu0 %v2687
    %3198 = vmatpush.msra.mxu0 %v2683
    %3199 = vmatpush.msra.mxu0 %v2679
    %3200 = vmatpush.msra.mxu0 %v2675
    %3201 = vmatpush.msra.mxu0 %v2671
    %3202 = vmatmul.f32.gmra.mxu0 %v3160
    %v3203 = vpop.f32.mrf.mxu0
    %v3204 = vadd.f32 0.0, %v3203
    %3205 = vdwg.mxu0
    %3206 = vmatpush.msra.mxu0 %v2732
    %3207 = vmatpush.msra.mxu0 %v2728
    %3208 = vmatpush.msra.mxu0 %v2724
    %3209 = vmatpush.msra.mxu0 %v2720
    %3210 = vmatpush.msra.mxu0 %v2716
    %3211 = vmatpush.msra.mxu0 %v2712
    %3212 = vmatpush.msra.mxu0 %v2708
    %3213 = vmatpush.msra.mxu0 %v2704
    %3214 = vmatpush.msra.mxu0 %v2700
    %3215 = vmatpush.msra.mxu0 %v2696
    %3216 = vmatpush.msra.mxu0 %v2692
    %3217 = vmatpush.msra.mxu0 %v2688
    %3218 = vmatpush.msra.mxu0 %v2684
    %3219 = vmatpush.msra.mxu0 %v2680
    %3220 = vmatpush.msra.mxu0 %v2676
    %3221 = vmatpush.msra.mxu0 %v2672
    %3222 = vmatmul.f32.gmra.mxu0 %v3160
    %v3223 = vpop.f32.mrf.mxu0
    %v3224 = vadd.f32 0.0, %v3223
    %3225 = vdwg.mxu0
    %3226 = vmatpush.msra.mxu0 %v2733
    %3227 = vmatpush.msra.mxu0 %v2729
    %3228 = vmatpush.msra.mxu0 %v2725
    %3229 = vmatpush.msra.mxu0 %v2721
    %3230 = vmatpush.msra.mxu0 %v2717
    %3231 = vmatpush.msra.mxu0 %v2713
    %3232 = vmatpush.msra.mxu0 %v2709
    %3233 = vmatpush.msra.mxu0 %v2705
    %3234 = vmatpush.msra.mxu0 %v2701
    %3235 = vmatpush.msra.mxu0 %v2697
    %3236 = vmatpush.msra.mxu0 %v2693
    %3237 = vmatpush.msra.mxu0 %v2689
    %3238 = vmatpush.msra.mxu0 %v2685
    %3239 = vmatpush.msra.mxu0 %v2681
    %3240 = vmatpush.msra.mxu0 %v2677
    %3241 = vmatpush.msra.mxu0 %v2673
    %3242 = vmatmul.f32.gmra.mxu0 %v3160
    %v3243 = vpop.f32.mrf.mxu0
    %v3244 = vadd.f32 0.0, %v3243
    %3245 = vdwg.mxu0
    %v3246 = vadd.f32 %v3162, %v3184
    %v3247 = vadd.f32 %v3163, %v3204
    %v3248 = vadd.f32 %v3164, %v3224
    %v3249 = vadd.f32 %v3165, %v3244
    %v3250 = vmul.f32 %v3246, 0.5
    %v3251 = vmul.f32 %v3247, 0.5
    %v3252 = vmul.f32 %v3248, 0.5
    %v3253 = vtanh.pop %v3250
    %v3254 = vtanh.pop %v3251
    %v3255 = vtanh.pop %v3252
    %v3256 = vmul.f32 %v3253, 0.5
    %v3257 = vmul.f32 %v3254, 0.5
    %v3258 = vmul.f32 %v3255, 0.5
    %v3259 = vadd.f32 %v3256, 0.5
    %v3260 = vadd.f32 %v3257, 0.5
    %v3261 = vadd.f32 %v3258, 0.5
    %v3262 = vtanh.pop %v3249
    %v3263 = vmul.f32 %v3260, %v3158
    %v3264 = vmul.f32 %v3259, %v3262
    %v3265 = vadd.f32 %v3263, %v3264
    %v3266 = vtanh.pop %v3265
    %v3267 = vmul.f32 %v3261, %v3266
    %3268 = vst [vmem:[#allocation2 + $0x20] sm:$0xff] %v3267
    %v3269 = vld [vmem:[#allocation3 + $0xa0] sm:$0xff]
    %v3270 = vld [vmem:[#allocation3 + $0xa8] sm:$0xff]
    %v3271 = vld [vmem:[#allocation3 + $0xb0] sm:$0xff]
    %v3272 = vld [vmem:[#allocation3 + $0xb8] sm:$0xff]
    %3273 = vmatpush.msra.mxu0 %v2730
    %3274 = vmatpush.msra.mxu0 %v2726
    %3275 = vmatpush.msra.mxu0 %v2722
    %3276 = vmatpush.msra.mxu0 %v2718
    %3277 = vmatpush.msra.mxu0 %v2714
    %3278 = vmatpush.msra.mxu0 %v2710
    %3279 = vmatpush.msra.mxu0 %v2706
    %3280 = vmatpush.msra.mxu0 %v2702
    %3281 = vmatpush.msra.mxu0 %v2698
    %3282 = vmatpush.msra.mxu0 %v2694
    %3283 = vmatpush.msra.mxu0 %v2690
    %3284 = vmatpush.msra.mxu0 %v2686
    %3285 = vmatpush.msra.mxu0 %v2682
    %3286 = vmatpush.msra.mxu0 %v2678
    %3287 = vmatpush.msra.mxu0 %v2674
    %3288 = vmatpush.msra.mxu0 %v2670
    %3289 = vmatmul.f32.gmra.mxu0 %v3267
    %v3290 = vpop.f32.mrf.mxu0
    %v3291 = vadd.f32 0.0, %v3290
    %3292 = vdwg.mxu0
    %3293 = vmatpush.msra.mxu0 %v2731
    %3294 = vmatpush.msra.mxu0 %v2727
    %3295 = vmatpush.msra.mxu0 %v2723
    %3296 = vmatpush.msra.mxu0 %v2719
    %3297 = vmatpush.msra.mxu0 %v2715
    %3298 = vmatpush.msra.mxu0 %v2711
    %3299 = vmatpush.msra.mxu0 %v2707
    %3300 = vmatpush.msra.mxu0 %v2703
    %3301 = vmatpush.msra.mxu0 %v2699
    %3302 = vmatpush.msra.mxu0 %v2695
    %3303 = vmatpush.msra.mxu0 %v2691
    %3304 = vmatpush.msra.mxu0 %v2687
    %3305 = vmatpush.msra.mxu0 %v2683
    %3306 = vmatpush.msra.mxu0 %v2679
    %3307 = vmatpush.msra.mxu0 %v2675
    %3308 = vmatpush.msra.mxu0 %v2671
    %3309 = vmatmul.f32.gmra.mxu0 %v3267
    %v3310 = vpop.f32.mrf.mxu0
    %v3311 = vadd.f32 0.0, %v3310
    %3312 = vdwg.mxu0
    %3313 = vmatpush.msra.mxu0 %v2732
    %3314 = vmatpush.msra.mxu0 %v2728
    %3315 = vmatpush.msra.mxu0 %v2724
    %3316 = vmatpush.msra.mxu0 %v2720
    %3317 = vmatpush.msra.mxu0 %v2716
    %3318 = vmatpush.msra.mxu0 %v2712
    %3319 = vmatpush.msra.mxu0 %v2708
    %3320 = vmatpush.msra.mxu0 %v2704
    %3321 = vmatpush.msra.mxu0 %v2700
    %3322 = vmatpush.msra.mxu0 %v2696
    %3323 = vmatpush.msra.mxu0 %v2692
    %3324 = vmatpush.msra.mxu0 %v2688
    %3325 = vmatpush.msra.mxu0 %v2684
    %3326 = vmatpush.msra.mxu0 %v2680
    %3327 = vmatpush.msra.mxu0 %v2676
    %3328 = vmatpush.msra.mxu0 %v2672
    %3329 = vmatmul.f32.gmra.mxu0 %v3267
    %v3330 = vpop.f32.mrf.mxu0
    %v3331 = vadd.f32 0.0, %v3330
    %3332 = vdwg.mxu0
    %3333 = vmatpush.msra.mxu0 %v2733
    %3334 = vmatpush.msra.mxu0 %v2729
    %3335 = vmatpush.msra.mxu0 %v2725
    %3336 = vmatpush.msra.mxu0 %v2721
    %3337 = vmatpush.msra.mxu0 %v2717
    %3338 = vmatpush.msra.mxu0 %v2713
    %3339 = vmatpush.msra.mxu0 %v2709
    %3340 = vmatpush.msra.mxu0 %v2705
    %3341 = vmatpush.msra.mxu0 %v2701
    %3342 = vmatpush.msra.mxu0 %v2697
    %3343 = vmatpush.msra.mxu0 %v2693
    %3344 = vmatpush.msra.mxu0 %v2689
    %3345 = vmatpush.msra.mxu0 %v2685
    %3346 = vmatpush.msra.mxu0 %v2681
    %3347 = vmatpush.msra.mxu0 %v2677
    %3348 = vmatpush.msra.mxu0 %v2673
    %3349 = vmatmul.f32.gmra.mxu0 %v3267
    %v3350 = vpop.f32.mrf.mxu0
    %v3351 = vadd.f32 0.0, %v3350
    %3352 = vdwg.mxu0
    %v3353 = vadd.f32 %v3269, %v3291
    %v3354 = vadd.f32 %v3270, %v3311
    %v3355 = vadd.f32 %v3271, %v3331
    %v3356 = vadd.f32 %v3272, %v3351
    %v3357 = vmul.f32 %v3353, 0.5
    %v3358 = vmul.f32 %v3354, 0.5
    %v3359 = vmul.f32 %v3355, 0.5
    %v3360 = vtanh.pop %v3357
    %v3361 = vtanh.pop %v3358
    %v3362 = vtanh.pop %v3359
    %v3363 = vmul.f32 %v3360, 0.5
    %v3364 = vmul.f32 %v3361, 0.5
    %v3365 = vmul.f32 %v3362, 0.5
    %v3366 = vadd.f32 %v3363, 0.5
    %v3367 = vadd.f32 %v3364, 0.5
    %v3368 = vadd.f32 %v3365, 0.5
    %v3369 = vtanh.pop %v3356
    %v3370 = vmul.f32 %v3367, %v3265
    %v3371 = vmul.f32 %v3366, %v3369
    %v3372 = vadd.f32 %v3370, %v3371
    %v3373 = vtanh.pop %v3372
    %v3374 = vmul.f32 %v3368, %v3373
    %3375 = vst [vmem:[#allocation2 + $0x28] sm:$0xff] %v3374
    %v3376 = vld [vmem:[#allocation3 + $0xc0] sm:$0xff]
    %v3377 = vld [vmem:[#allocation3 + $0xc8] sm:$0xff]
    %v3378 = vld [vmem:[#allocation3 + $0xd0] sm:$0xff]
    %v3379 = vld [vmem:[#allocation3 + $0xd8] sm:$0xff]
    %3380 = vmatpush.msra.mxu0 %v2730
    %3381 = vmatpush.msra.mxu0 %v2726
    %3382 = vmatpush.msra.mxu0 %v2722
    %3383 = vmatpush.msra.mxu0 %v2718
    %3384 = vmatpush.msra.mxu0 %v2714
    %3385 = vmatpush.msra.mxu0 %v2710
    %3386 = vmatpush.msra.mxu0 %v2706
    %3387 = vmatpush.msra.mxu0 %v2702
    %3388 = vmatpush.msra.mxu0 %v2698
    %3389 = vmatpush.msra.mxu0 %v2694
    %3390 = vmatpush.msra.mxu0 %v2690
    %3391 = vmatpush.msra.mxu0 %v2686
    %3392 = vmatpush.msra.mxu0 %v2682
    %3393 = vmatpush.msra.mxu0 %v2678
    %3394 = vmatpush.msra.mxu0 %v2674
    %3395 = vmatpush.msra.mxu0 %v2670
    %3396 = vmatmul.f32.gmra.mxu0 %v3374
    %v3397 = vpop.f32.mrf.mxu0
    %v3398 = vadd.f32 0.0, %v3397
    %3399 = vdwg.mxu0
    %3400 = vmatpush.msra.mxu0 %v2731
    %3401 = vmatpush.msra.mxu0 %v2727
    %3402 = vmatpush.msra.mxu0 %v2723
    %3403 = vmatpush.msra.mxu0 %v2719
    %3404 = vmatpush.msra.mxu0 %v2715
    %3405 = vmatpush.msra.mxu0 %v2711
    %3406 = vmatpush.msra.mxu0 %v2707
    %3407 = vmatpush.msra.mxu0 %v2703
    %3408 = vmatpush.msra.mxu0 %v2699
    %3409 = vmatpush.msra.mxu0 %v2695
    %3410 = vmatpush.msra.mxu0 %v2691
    %3411 = vmatpush.msra.mxu0 %v2687
    %3412 = vmatpush.msra.mxu0 %v2683
    %3413 = vmatpush.msra.mxu0 %v2679
    %3414 = vmatpush.msra.mxu0 %v2675
    %3415 = vmatpush.msra.mxu0 %v2671
    %3416 = vmatmul.f32.gmra.mxu0 %v3374
    %v3417 = vpop.f32.mrf.mxu0
    %v3418 = vadd.f32 0.0, %v3417
    %3419 = vdwg.mxu0
    %3420 = vmatpush.msra.mxu0 %v2732
    %3421 = vmatpush.msra.mxu0 %v2728
    %3422 = vmatpush.msra.mxu0 %v2724
    %3423 = vmatpush.msra.mxu0 %v2720
    %3424 = vmatpush.msra.mxu0 %v2716
    %3425 = vmatpush.msra.mxu0 %v2712
    %3426 = vmatpush.msra.mxu0 %v2708
    %3427 = vmatpush.msra.mxu0 %v2704
    %3428 = vmatpush.msra.mxu0 %v2700
    %3429 = vmatpush.msra.mxu0 %v2696
    %3430 = vmatpush.msra.mxu0 %v2692
    %3431 = vmatpush.msra.mxu0 %v2688
    %3432 = vmatpush.msra.mxu0 %v2684
    %3433 = vmatpush.msra.mxu0 %v2680
    %3434 = vmatpush.msra.mxu0 %v2676
    %3435 = vmatpush.msra.mxu0 %v2672
    %3436 = vmatmul.f32.gmra.mxu0 %v3374
    %v3437 = vpop.f32.mrf.mxu0
    %v3438 = vadd.f32 0.0, %v3437
    %3439 = vdwg.mxu0
    %3440 = vmatpush.msra.mxu0 %v2733
    %3441 = vmatpush.msra.mxu0 %v2729
    %3442 = vmatpush.msra.mxu0 %v2725
    %3443 = vmatpush.msra.mxu0 %v2721
    %3444 = vmatpush.msra.mxu0 %v2717
    %3445 = vmatpush.msra.mxu0 %v2713
    %3446 = vmatpush.msra.mxu0 %v2709
    %3447 = vmatpush.msra.mxu0 %v2705
    %3448 = vmatpush.msra.mxu0 %v2701
    %3449 = vmatpush.msra.mxu0 %v2697
    %3450 = vmatpush.msra.mxu0 %v2693
    %3451 = vmatpush.msra.mxu0 %v2689
    %3452 = vmatpush.msra.mxu0 %v2685
    %3453 = vmatpush.msra.mxu0 %v2681
    %3454 = vmatpush.msra.mxu0 %v2677
    %3455 = vmatpush.msra.mxu0 %v2673
    %3456 = vmatmul.f32.gmra.mxu0 %v3374
    %v3457 = vpop.f32.mrf.mxu0
    %v3458 = vadd.f32 0.0, %v3457
    %3459 = vdwg.mxu0
    %v3460 = vadd.f32 %v3376, %v3398
    %v3461 = vadd.f32 %v3377, %v3418
    %v3462 = vadd.f32 %v3378, %v3438
    %v3463 = vadd.f32 %v3379, %v3458
    %v3464 = vmul.f32 %v3460, 0.5
    %v3465 = vmul.f32 %v3461, 0.5
    %v3466 = vmul.f32 %v3462, 0.5
    %v3467 = vtanh.pop %v3464
    %v3468 = vtanh.pop %v3465
    %v3469 = vtanh.pop %v3466
    %v3470 = vmul.f32 %v3467, 0.5
    %v3471 = vmul.f32 %v3468, 0.5
    %v3472 = vmul.f32 %v3469, 0.5
    %v3473 = vadd.f32 %v3470, 0.5
    %v3474 = vadd.f32 %v3471, 0.5
    %v3475 = vadd.f32 %v3472, 0.5
    %v3476 = vtanh.pop %v3463
    %v3477 = vmul.f32 %v3474, %v3372
    %v3478 = vmul.f32 %v3473, %v3476
    %v3479 = vadd.f32 %v3477, %v3478
    %v3480 = vtanh.pop %v3479
    %v3481 = vmul.f32 %v3475, %v3480
    %3482 = vst [vmem:[#allocation2 + $0x30] sm:$0xff] %v3481
    %v3483 = vld [vmem:[#allocation3 + $0xe0] sm:$0xff]
    %v3484 = vld [vmem:[#allocation3 + $0xe8] sm:$0xff]
    %v3485 = vld [vmem:[#allocation3 + $0xf0] sm:$0xff]
    %v3486 = vld [vmem:[#allocation3 + $0xf8] sm:$0xff]
    %3487 = vmatpush.msra.mxu0 %v2730
    %3488 = vmatpush.msra.mxu0 %v2726
    %3489 = vmatpush.msra.mxu0 %v2722
    %3490 = vmatpush.msra.mxu0 %v2718
    %3491 = vmatpush.msra.mxu0 %v2714
    %3492 = vmatpush.msra.mxu0 %v2710
    %3493 = vmatpush.msra.mxu0 %v2706
    %3494 = vmatpush.msra.mxu0 %v2702
    %3495 = vmatpush.msra.mxu0 %v2698
    %3496 = vmatpush.msra.mxu0 %v2694
    %3497 = vmatpush.msra.mxu0 %v2690
    %3498 = vmatpush.msra.mxu0 %v2686
    %3499 = vmatpush.msra.mxu0 %v2682
    %3500 = vmatpush.msra.mxu0 %v2678
    %3501 = vmatpush.msra.mxu0 %v2674
    %3502 = vmatpush.msra.mxu0 %v2670
    %3503 = vmatmul.f32.gmra.mxu0 %v3481
    %v3504 = vpop.f32.mrf.mxu0
    %v3505 = vadd.f32 0.0, %v3504
    %3506 = vdwg.mxu0
    %3507 = vmatpush.msra.mxu0 %v2731
    %3508 = vmatpush.msra.mxu0 %v2727
    %3509 = vmatpush.msra.mxu0 %v2723
    %3510 = vmatpush.msra.mxu0 %v2719
    %3511 = vmatpush.msra.mxu0 %v2715
    %3512 = vmatpush.msra.mxu0 %v2711
    %3513 = vmatpush.msra.mxu0 %v2707
    %3514 = vmatpush.msra.mxu0 %v2703
    %3515 = vmatpush.msra.mxu0 %v2699
    %3516 = vmatpush.msra.mxu0 %v2695
    %3517 = vmatpush.msra.mxu0 %v2691
    %3518 = vmatpush.msra.mxu0 %v2687
    %3519 = vmatpush.msra.mxu0 %v2683
    %3520 = vmatpush.msra.mxu0 %v2679
    %3521 = vmatpush.msra.mxu0 %v2675
    %3522 = vmatpush.msra.mxu0 %v2671
    %3523 = vmatmul.f32.gmra.mxu0 %v3481
    %v3524 = vpop.f32.mrf.mxu0
    %v3525 = vadd.f32 0.0, %v3524
    %3526 = vdwg.mxu0
    %3527 = vmatpush.msra.mxu0 %v2732
    %3528 = vmatpush.msra.mxu0 %v2728
    %3529 = vmatpush.msra.mxu0 %v2724
    %3530 = vmatpush.msra.mxu0 %v2720
    %3531 = vmatpush.msra.mxu0 %v2716
    %3532 = vmatpush.msra.mxu0 %v2712
    %3533 = vmatpush.msra.mxu0 %v2708
    %3534 = vmatpush.msra.mxu0 %v2704
    %3535 = vmatpush.msra.mxu0 %v2700
    %3536 = vmatpush.msra.mxu0 %v2696
    %3537 = vmatpush.msra.mxu0 %v2692
    %3538 = vmatpush.msra.mxu0 %v2688
    %3539 = vmatpush.msra.mxu0 %v2684
    %3540 = vmatpush.msra.mxu0 %v2680
    %3541 = vmatpush.msra.mxu0 %v2676
    %3542 = vmatpush.msra.mxu0 %v2672
    %3543 = vmatmul.f32.gmra.mxu0 %v3481
    %v3544 = vpop.f32.mrf.mxu0
    %v3545 = vadd.f32 0.0, %v3544
    %3546 = vdwg.mxu0
    %3547 = vmatpush.msra.mxu0 %v2733
    %3548 = vmatpush.msra.mxu0 %v2729
    %3549 = vmatpush.msra.mxu0 %v2725
    %3550 = vmatpush.msra.mxu0 %v2721
    %3551 = vmatpush.msra.mxu0 %v2717
    %3552 = vmatpush.msra.mxu0 %v2713
    %3553 = vmatpush.msra.mxu0 %v2709
    %3554 = vmatpush.msra.mxu0 %v2705
    %3555 = vmatpush.msra.mxu0 %v2701
    %3556 = vmatpush.msra.mxu0 %v2697
    %3557 = vmatpush.msra.mxu0 %v2693
    %3558 = vmatpush.msra.mxu0 %v2689
    %3559 = vmatpush.msra.mxu0 %v2685
    %3560 = vmatpush.msra.mxu0 %v2681
    %3561 = vmatpush.msra.mxu0 %v2677
    %3562 = vmatpush.msra.mxu0 %v2673
    %3563 = vmatmul.f32.gmra.mxu0 %v3481
    %v3564 = vpop.f32.mrf.mxu0
    %v3565 = vadd.f32 0.0, %v3564
    %3566 = vdwg.mxu0
    %v3567 = vadd.f32 %v3483, %v3505
    %v3568 = vadd.f32 %v3484, %v3525
    %v3569 = vadd.f32 %v3485, %v3545
    %v3570 = vadd.f32 %v3486, %v3565
    %v3571 = vmul.f32 %v3567, 0.5
    %v3572 = vmul.f32 %v3568, 0.5
    %v3573 = vmul.f32 %v3569, 0.5
    %v3574 = vtanh.pop %v3571
    %v3575 = vtanh.pop %v3572
    %v3576 = vtanh.pop %v3573
    %v3577 = vmul.f32 %v3574, 0.5
    %v3578 = vmul.f32 %v3575, 0.5
    %v3579 = vmul.f32 %v3576, 0.5
    %v3580 = vadd.f32 %v3577, 0.5
    %v3581 = vadd.f32 %v3578, 0.5
    %v3582 = vadd.f32 %v3579, 0.5
    %v3583 = vtanh.pop %v3570
    %v3584 = vmul.f32 %v3581, %v3479
    %v3585 = vmul.f32 %v3580, %v3583
    %v3586 = vadd.f32 %v3584, %v3585
    %v3587 = vtanh.pop %v3586
    %v3588 = vmul.f32 %v3582, %v3587
    %3589 = vst [vmem:[#allocation2 + $0x38] sm:$0xff] %v3588
    %v3590 = vld [vmem:[#allocation2] sm:$0xff]
    %v3591 = vld [vmem:[#allocation2 + $0x8] sm:$0xff]
    %v3592 = vld [vmem:[#allocation2 + $0x10] sm:$0xff]
    %v3593 = vld [vmem:[#allocation2 + $0x18] sm:$0xff]
    %v3594 = vld [vmem:[#allocation2 + $0x20] sm:$0xff]
    %v3595 = vld [vmem:[#allocation2 + $0x28] sm:$0xff]
    %v3596 = vld [vmem:[#allocation2 + $0x30] sm:$0xff]
    %v3597 = vld [vmem:[#allocation2 + $0x38] sm:$0xff]
    %v3598 = vld [vmem:[#allocation15] sm:$0xff]
    %v3599 = vld [vmem:[#allocation15 + $0x8] sm:$0xff]
    %v3600 = vld [vmem:[#allocation15 + $0x10] sm:$0xff]
    %v3601 = vld [vmem:[#allocation15 + $0x18] sm:$0xff]
    %v3602 = vld [vmem:[#allocation15 + $0x20] sm:$0xff]
    %v3603 = vld [vmem:[#allocation15 + $0x28] sm:$0xff]
    %v3604 = vld [vmem:[#allocation15 + $0x30] sm:$0xff]
    %v3605 = vld [vmem:[#allocation15 + $0x38] sm:$0xff]
    %v3606 = vld [vmem:[#allocation15 + $0x40] sm:$0xff]
    %v3607 = vld [vmem:[#allocation15 + $0x48] sm:$0xff]
    %v3608 = vld [vmem:[#allocation15 + $0x50] sm:$0xff]
    %v3609 = vld [vmem:[#allocation15 + $0x58] sm:$0xff]
    %v3610 = vld [vmem:[#allocation15 + $0x60] sm:$0xff]
    %v3611 = vld [vmem:[#allocation15 + $0x68] sm:$0xff]
    %v3612 = vld [vmem:[#allocation15 + $0x70] sm:$0xff]
    %v3613 = vld [vmem:[#allocation15 + $0x78] sm:$0xff]
    %v3614 = vld [vmem:[%s8] sm:$0x1]
    %v3616 = vperm.slane %v3614, 0
    %3618 = vmatpush.msra.mxu0 %v3613
    %3619 = vmatpush.msra.mxu0 %v3612
    %3620 = vmatpush.msra.mxu0 %v3611
    %3621 = vmatpush.msra.mxu0 %v3610
    %3622 = vmatpush.msra.mxu0 %v3609
    %3623 = vmatpush.msra.mxu0 %v3608
    %3624 = vmatpush.msra.mxu0 %v3607
    %3625 = vmatpush.msra.mxu0 %v3606
    %3626 = vmatpush.msra.mxu0 %v3605
    %3627 = vmatpush.msra.mxu0 %v3604
    %3628 = vmatpush.msra.mxu0 %v3603
    %3629 = vmatpush.msra.mxu0 %v3602
    %3630 = vmatpush.msra.mxu0 %v3601
    %3631 = vmatpush.msra.mxu0 %v3600
    %3632 = vmatpush.msra.mxu0 %v3599
    %3633 = vmatpush.msra.mxu0 %v3598
    %3634 = vmatmul.f32.gmra.mxu0 %v3590
    %v3635 = vpop.f32.mrf.mxu0
    %v3636 = vadd.f32 %v3616, %v3635
    %3637 = vmatmul.f32.gmra.mxu0 %v3591
    %v3638 = vpop.f32.mrf.mxu0
    %v3639 = vadd.f32 %v3616, %v3638
    %3640 = vmatmul.f32.gmra.mxu0 %v3592
    %v3641 = vpop.f32.mrf.mxu0
    %v3642 = vadd.f32 %v3616, %v3641
    %3643 = vmatmul.f32.gmra.mxu0 %v3593
    %v3644 = vpop.f32.mrf.mxu0
    %v3645 = vadd.f32 %v3616, %v3644
    %3646 = vmatmul.f32.gmra.mxu0 %v3594
    %v3647 = vpop.f32.mrf.mxu0
    %v3648 = vadd.f32 %v3616, %v3647
    %3649 = vmatmul.f32.gmra.mxu0 %v3595
    %v3650 = vpop.f32.mrf.mxu0
    %v3651 = vadd.f32 %v3616, %v3650
    %3652 = vmatmul.f32.gmra.mxu0 %v3596
    %v3653 = vpop.f32.mrf.mxu0
    %v3654 = vadd.f32 %v3616, %v3653
    %3655 = vmatmul.f32.gmra.mxu0 %v3597
    %v3656 = vpop.f32.mrf.mxu0
    %v3657 = vadd.f32 %v3616, %v3656
    %3658 = vdwg.mxu0
    %v3659 = vxor.u32 %v3636, 2147483648
    %v3660 = vxor.u32 %v3639, 2147483648
    %v3661 = vxor.u32 %v3642, 2147483648
    %v3662 = vxor.u32 %v3645, 2147483648
    %v3663 = vxor.u32 %v3648, 2147483648
    %v3664 = vxor.u32 %v3651, 2147483648
    %v3665 = vxor.u32 %v3654, 2147483648
    %v3666 = vxor.u32 %v3657, 2147483648
    %v3667 = vmul.f32 %v3659, 1.442695
    %v3668 = vpow.pop %v3667
    %v3669 = vmul.f32 %v3660, 1.442695
    %v3670 = vpow.pop %v3669
    %v3671 = vmul.f32 %v3661, 1.442695
    %v3672 = vpow.pop %v3671
    %v3673 = vmul.f32 %v3662, 1.442695
    %v3674 = vpow.pop %v3673
    %v3675 = vmul.f32 %v3663, 1.442695
    %v3676 = vpow.pop %v3675
    %v3677 = vmul.f32 %v3664, 1.442695
    %v3678 = vpow.pop %v3677
    %v3679 = vmul.f32 %v3665, 1.442695
    %v3680 = vpow.pop %v3679
    %v3681 = vmul.f32 %v3666, 1.442695
    %v3682 = vpow.pop %v3681
    %v3683 = vadd.f32 %v3668, 1.0
    %v3684 = vadd.f32 %v3670, 1.0
    %v3685 = vadd.f32 %v3672, 1.0
    %v3686 = vadd.f32 %v3674, 1.0
    %v3687 = vadd.f32 %v3676, 1.0
    %v3688 = vadd.f32 %v3678, 1.0
    %v3689 = vadd.f32 %v3680, 1.0
    %v3690 = vadd.f32 %v3682, 1.0
    %v3691 = vrcp.pop %v3683
    %v3692 = vmul.f32 %v3683, %v3691
    %v3693 = vsub.f32 1.0, %v3692
    %v3694 = vmul.f32 %v3691, %v3693
    %v3695 = vadd.f32 %v3691, %v3694
    %vm3696 = vweird.f32 %v3683
    %vm3697 = vweird.f32 %v3691
    %vm3698 = vmor %vm3696, %vm3697
    %v3699 = vsel %vm3698, %v3691, %v3695
    %v3700 = vand.u32 2147483647, %v3683
    %vm3701 = vcmp.eq.f32.partialorder %v3700, 8.507059e+37
    %v3702 = vand.u32 %v3683, 2147483648
    %v3703 = vor.u32 1.1754944e-38, %v3702
    %v3704 = vsel %vm3701, %v3703, %v3699
    %v3705 = vmul.f32 1.0, %v3704
    %v3706 = vrcp.pop %v3684
    %v3707 = vmul.f32 %v3684, %v3706
    %v3708 = vsub.f32 1.0, %v3707
    %v3709 = vmul.f32 %v3706, %v3708
    %v3710 = vadd.f32 %v3706, %v3709
    %vm3711 = vweird.f32 %v3684
    %vm3712 = vweird.f32 %v3706
    %vm3713 = vmor %vm3711, %vm3712
    %v3714 = vsel %vm3713, %v3706, %v3710
    %v3715 = vand.u32 2147483647, %v3684
    %vm3716 = vcmp.eq.f32.partialorder %v3715, 8.507059e+37
    %v3717 = vand.u32 %v3684, 2147483648
    %v3718 = vor.u32 1.1754944e-38, %v3717
    %v3719 = vsel %vm3716, %v3718, %v3714
    %v3720 = vmul.f32 1.0, %v3719
    %v3721 = vrcp.pop %v3685
    %v3722 = vmul.f32 %v3685, %v3721
    %v3723 = vsub.f32 1.0, %v3722
    %v3724 = vmul.f32 %v3721, %v3723
    %v3725 = vadd.f32 %v3721, %v3724
    %vm3726 = vweird.f32 %v3685
    %vm3727 = vweird.f32 %v3721
    %vm3728 = vmor %vm3726, %vm3727
    %v3729 = vsel %vm3728, %v3721, %v3725
    %v3730 = vand.u32 2147483647, %v3685
    %vm3731 = vcmp.eq.f32.partialorder %v3730, 8.507059e+37
    %v3732 = vand.u32 %v3685, 2147483648
    %v3733 = vor.u32 1.1754944e-38, %v3732
    %v3734 = vsel %vm3731, %v3733, %v3729
    %v3735 = vmul.f32 1.0, %v3734
    %v3736 = vrcp.pop %v3686
    %v3737 = vmul.f32 %v3686, %v3736
    %v3738 = vsub.f32 1.0, %v3737
    %v3739 = vmul.f32 %v3736, %v3738
    %v3740 = vadd.f32 %v3736, %v3739
    %vm3741 = vweird.f32 %v3686
    %vm3742 = vweird.f32 %v3736
    %vm3743 = vmor %vm3741, %vm3742
    %v3744 = vsel %vm3743, %v3736, %v3740
    %v3745 = vand.u32 2147483647, %v3686
    %vm3746 = vcmp.eq.f32.partialorder %v3745, 8.507059e+37
    %v3747 = vand.u32 %v3686, 2147483648
    %v3748 = vor.u32 1.1754944e-38, %v3747
    %v3749 = vsel %vm3746, %v3748, %v3744
    %v3750 = vmul.f32 1.0, %v3749
    %v3751 = vrcp.pop %v3687
    %v3752 = vmul.f32 %v3687, %v3751
    %v3753 = vsub.f32 1.0, %v3752
    %v3754 = vmul.f32 %v3751, %v3753
    %v3755 = vadd.f32 %v3751, %v3754
    %vm3756 = vweird.f32 %v3687
    %vm3757 = vweird.f32 %v3751
    %vm3758 = vmor %vm3756, %vm3757
    %v3759 = vsel %vm3758, %v3751, %v3755
    %v3760 = vand.u32 2147483647, %v3687
    %vm3761 = vcmp.eq.f32.partialorder %v3760, 8.507059e+37
    %v3762 = vand.u32 %v3687, 2147483648
    %v3763 = vor.u32 1.1754944e-38, %v3762
    %v3764 = vsel %vm3761, %v3763, %v3759
    %v3765 = vmul.f32 1.0, %v3764
    %v3766 = vrcp.pop %v3688
    %v3767 = vmul.f32 %v3688, %v3766
    %v3768 = vsub.f32 1.0, %v3767
    %v3769 = vmul.f32 %v3766, %v3768
    %v3770 = vadd.f32 %v3766, %v3769
    %vm3771 = vweird.f32 %v3688
    %vm3772 = vweird.f32 %v3766
    %vm3773 = vmor %vm3771, %vm3772
    %v3774 = vsel %vm3773, %v3766, %v3770
    %v3775 = vand.u32 2147483647, %v3688
    %vm3776 = vcmp.eq.f32.partialorder %v3775, 8.507059e+37
    %v3777 = vand.u32 %v3688, 2147483648
    %v3778 = vor.u32 1.1754944e-38, %v3777
    %v3779 = vsel %vm3776, %v3778, %v3774
    %v3780 = vmul.f32 1.0, %v3779
    %v3781 = vrcp.pop %v3689
    %v3782 = vmul.f32 %v3689, %v3781
    %v3783 = vsub.f32 1.0, %v3782
    %v3784 = vmul.f32 %v3781, %v3783
    %v3785 = vadd.f32 %v3781, %v3784
    %vm3786 = vweird.f32 %v3689
    %vm3787 = vweird.f32 %v3781
    %vm3788 = vmor %vm3786, %vm3787
    %v3789 = vsel %vm3788, %v3781, %v3785
    %v3790 = vand.u32 2147483647, %v3689
    %vm3791 = vcmp.eq.f32.partialorder %v3790, 8.507059e+37
    %v3792 = vand.u32 %v3689, 2147483648
    %v3793 = vor.u32 1.1754944e-38, %v3792
    %v3794 = vsel %vm3791, %v3793, %v3789
    %v3795 = vmul.f32 1.0, %v3794
    %v3796 = vrcp.pop %v3690
    %v3797 = vmul.f32 %v3690, %v3796
    %v3798 = vsub.f32 1.0, %v3797
    %v3799 = vmul.f32 %v3796, %v3798
    %v3800 = vadd.f32 %v3796, %v3799
    %vm3801 = vweird.f32 %v3690
    %vm3802 = vweird.f32 %v3796
    %vm3803 = vmor %vm3801, %vm3802
    %v3804 = vsel %vm3803, %v3796, %v3800
    %v3805 = vand.u32 2147483647, %v3690
    %vm3806 = vcmp.eq.f32.partialorder %v3805, 8.507059e+37
    %v3807 = vand.u32 %v3690, 2147483648
    %v3808 = vor.u32 1.1754944e-38, %v3807
    %v3809 = vsel %vm3806, %v3808, %v3804
    %v3810 = vmul.f32 1.0, %v3809
    %3811 = vst [vmem:[#allocation16] sm:$0xff] %v3705
    %3812 = vst [vmem:[#allocation16 + $0x8] sm:$0xff] %v3720
    %3813 = vst [vmem:[#allocation16 + $0x10] sm:$0xff] %v3735
    %3814 = vst [vmem:[#allocation16 + $0x18] sm:$0xff] %v3750
    %3815 = vst [vmem:[#allocation16 + $0x20] sm:$0xff] %v3765
    %3816 = vst [vmem:[#allocation16 + $0x28] sm:$0xff] %v3780
    %3817 = vst [vmem:[#allocation16 + $0x30] sm:$0xff] %v3795
    %3818 = vst [vmem:[#allocation16 + $0x38] sm:$0xff] %v3810
    // Predicated region
    $region66: #{tpu_custom_call.1} parent=1 // pred_check
      _
    $region67: #{tpu_custom_call.1} parent=1 // pred_check_branch
      %3820 = sbr.rel (0) target = $region69
    $region68: #{tpu_custom_call.1} parent=1 // pred_region
      %3822 = vsyncadd [#allocation6], 0
      %s3823 = sshll.u32 [#allocation16], 4
      %s3824 = int_to_ptr.vmem [resolvable:$true] %s3823
      %s3825 = sshll.u32 %s9, 4
      %s3826 = int_to_ptr.hbm [resolvable:$true] %s3825
      %3831 = dma.vmem_to_hbm [thread:$0]  %s3824, 1024, %s3826, [#allocation6], 128, 128, 8
    $region69: #{tpu_custom_call.1} parent=1 // pred_fallthru
      _
    // Predicated region
    $region70: #{tpu_custom_call.1} parent=1 // pred_check
      _
    $region71: #{tpu_custom_call.1} parent=1 // pred_check_branch
      %3833 = sbr.rel (0) target = $region73
    $region72: #{tpu_custom_call.1} parent=1 // pred_region
      %3835 = dma.done [#allocation6], 1024
    $region73: #{tpu_custom_call.1} parent=1 // pred_fallthru
      _
    %3836 = vsyncpa [#allocation5], 1
    %3837 = vsyncpa [#allocation8], 1
    %3838 = vsyncpa [#allocation11], 1
    %3839 = vsyncpa [#allocation14], 1
    %3840 = vsyncpa [#allocation6], 1

</llo_original>
